<compile_context>
chip_gen: v6e
topology: v6e:2x2x1
jax: 0.10.0
libtpu: 0.0.40
codegen_flags: <defaults>
</compile_context>

<pallas_src>
import functools

import jax
import jax.numpy as jnp
from jax.experimental import pallas as pl
from jax.experimental.pallas import tpu as pltpu


# ----------------------------------------------------------------------------
# Fused Pallas kernel
# ----------------------------------------------------------------------------
def _cond_gen_kernel(*refs, L, T, S, B, H):
    """Fused forward: encoder LSTM (L layers) -> conditional generator LSTM
    (L layers, seeded with the encoder's final states) -> linear head.

    Ref layout (positional):
      x2d (T*B, D), z2d (S*B, Z),
      L x (enc W_ih (Din,4H), enc W_hh (H,4H), enc b (1,4H)),
      L x (gen W_ih (Din,4H), gen W_hh (H,4H), gen b (1,4H)),
      W_out (H,O), b_out (1,O),
      y_out (S*B, O),
      seq_scr (max(T,S)*B, H), proj_scr (max(T,S)*B, 4H)
    Gate order matches PyTorch: i, f, g, o.
    """
    x_ref, z_ref = refs[0], refs[1]
    pos = 2
    enc_params = [(refs[pos + 3 * l], refs[pos + 3 * l + 1], refs[pos + 3 * l + 2])
                  for l in range(L)]
    pos += 3 * L
    gen_params = [(refs[pos + 3 * l], refs[pos + 3 * l + 1], refs[pos + 3 * l + 2])
                  for l in range(L)]
    pos += 3 * L
    w_out_ref, b_out_ref = refs[pos], refs[pos + 1]
    y_ref = refs[pos + 2]
    seq_scr = refs[pos + 3]       # (max(T,S)*B, H)   hidden-sequence staging
    proj_scr = refs[pos + 4]      # (max(T,S)*B, 4H)  hoisted gate projections

    def lstm_stack(inp2d, nsteps, params, h0s, c0s, store_last_seq):
        """Run an L-layer LSTM stack over a time-major-flattened input value.

        inp2d: (nsteps*B, Din).  Returns ([h_last] * L, [c_last] * L).
        Hidden sequences that have a consumer are staged in seq_scr[0:nsteps*B].
        """
        h_lasts, c_lasts = [], []
        cur = inp2d
        for l, (w_ih_ref, w_hh_ref, b_ref) in enumerate(params):
            w_hh = w_hh_ref[...]
            # Hoisted input projection + bias for the whole sequence:
            # one matmul, done once, off the serial critical path.
            proj = (jnp.dot(cur, w_ih_ref[...],
                            preferred_element_type=jnp.float32)
                    + b_ref[...])                       # (nsteps*B, 4H)
            proj_scr[0:nsteps * B, :] = proj

            h = h0s[l]
            c = c0s[l]
            is_last = (l == L - 1)
            write_seq = (not is_last) or store_last_seq

            for t in range(nsteps):                     # unrolled serial recurrence
                g = (proj_scr[t * B:(t + 1) * B, :]
                     + jnp.dot(h, w_hh, preferred_element_type=jnp.float32))
                i_g = jax.nn.sigmoid(g[:, 0 * H:1 * H])
                f_g = jax.nn.sigmoid(g[:, 1 * H:2 * H])
                g_g = jnp.tanh(g[:, 2 * H:3 * H])
                o_g = jax.nn.sigmoid(g[:, 3 * H:4 * H])
                c = f_g * c + i_g * g_g
                h = o_g * jnp.tanh(c)
                if write_seq:
                    seq_scr[t * B:(t + 1) * B, :] = h

            h_lasts.append(h)
            c_lasts.append(c)
            if not is_last:
                cur = seq_scr[0:nsteps * B, :]          # next layer's input
        return h_lasts, c_lasts

    # ---- Encoder: zero initial state; only its final (h, c) per layer is used.
    zeros = [jnp.zeros((B, H), jnp.float32) for _ in range(L)]
    enc_h, enc_c = lstm_stack(x_ref[...], T, enc_params, zeros, zeros,
                              store_last_seq=False)

    # ---- Conditional generator LSTM driven by noise, seeded with encoder state.
    lstm_stack(z_ref[...], S, gen_params, enc_h, enc_c, store_last_seq=True)

    # ---- Linear head on the full generated sequence: one matmul, one bulk store.
    gseq = seq_scr[0:S * B, :]                          # (S*B, H)
    y_ref[...] = (jnp.dot(gseq, w_out_ref[...],
                          preferred_element_type=jnp.float32)
                  + b_out_ref[...])


def _full_block_spec(arr):
    nd = arr.ndim
    return pl.BlockSpec(tuple(arr.shape), lambda: (0,) * nd)


def _fused_forward(x2d, z2d, enc_params, gen_params, w_out, b_out,
                   *, T, S, B, H, L, O):
    inputs = [x2d, z2d]
    for p in enc_params:
        inputs.extend(p)
    for p in gen_params:
        inputs.extend(p)
    inputs.extend([w_out, b_out])

    seq_rows = max(T, S) * B
    kern = functools.partial(_cond_gen_kernel, L=L, T=T, S=S, B=B, H=H)

    return pl.pallas_call(
        kern,
        out_shape=jax.ShapeDtypeStruct((S * B, O), jnp.float32),
        in_specs=[_full_block_spec(a) for a in inputs],
        out_specs=pl.BlockSpec((S * B, O), lambda: (0, 0)),
        scratch_shapes=[
            pltpu.VMEM((seq_rows, H), jnp.float32),      # hidden-seq staging
            pltpu.VMEM((seq_rows, 4 * H), jnp.float32),  # hoisted projections
        ],
    )(*inputs)


# ----------------------------------------------------------------------------
# Module wrapper (plain-JAX glue, deterministic parameter init)
# ----------------------------------------------------------------------------
def _init_lstm_params(key, num_layers, input_size, hidden_size):
    """PyTorch-style uniform(-1/sqrt(H), 1/sqrt(H)) init, stored transposed so
    the kernel does x @ W_ih, h @ W_hh.  Gate order i, f, g, o.  The two
    biases are fused into a single (1, 4H) row (b_ih + b_hh)."""
    bound = 1.0 / jnp.sqrt(hidden_size)
    params = []
    for l in range(num_layers):
        d_in = input_size if l == 0 else hidden_size
        key, k1, k2, k3, k4 = jax.random.split(key, 5)
        w_ih = jax.random.uniform(k1, (d_in, 4 * hidden_size),
                                  minval=-bound, maxval=bound, dtype=jnp.float32)
        w_hh = jax.random.uniform(k2, (hidden_size, 4 * hidden_size),
                                  minval=-bound, maxval=bound, dtype=jnp.float32)
        b_ih = jax.random.uniform(k3, (1, 4 * hidden_size),
                                  minval=-bound, maxval=bound, dtype=jnp.float32)
        b_hh = jax.random.uniform(k4, (1, 4 * hidden_size),
                                  minval=-bound, maxval=bound, dtype=jnp.float32)
        params.append((w_ih, w_hh, b_ih + b_hh))
    return params, key


class ConditionalGenerator:
    def __init__(self, input_size, output_size, hidden_size, num_layers,
                 noise_size, translation=False, key=None):
        if key is None:
            key = jax.random.PRNGKey(42)
        self.noise_size = noise_size
        self.hidden_size = hidden_size
        self.output_size = output_size
        self.num_layers = num_layers
        self._translation = translation

        self.enc_params, key = _init_lstm_params(
            key, num_layers, input_size, hidden_size)
        self.gen_params, key = _init_lstm_params(
            key, num_layers, noise_size, hidden_size)

        bound = 1.0 / jnp.sqrt(hidden_size)
        key, k1, k2 = jax.random.split(key, 3)
        self.w_out = jax.random.uniform(
            k1, (hidden_size, output_size), minval=-bound, maxval=bound,
            dtype=jnp.float32)
        self.b_out = jax.random.uniform(
            k2, (1, output_size), minval=-bound, maxval=bound,
            dtype=jnp.float32)

    def __call__(self, x, steps, noise_key):
        B, T, D = x.shape
        H = self.hidden_size
        L = self.num_layers
        O = self.output_size

        y0 = x[:, -1:, :]                                    # (B, 1, D)
        n_steps = steps + 1 if self._translation else steps

        # Noise (matches torch.randn distributionally).
        z = jax.random.normal(noise_key, (B, n_steps, self.noise_size),
                              dtype=jnp.float32)

        # Time-major flatten for the kernel: (n, B, F) -> (n*B, F).
        x2d = jnp.transpose(x, (1, 0, 2)).reshape(T * B, D)
        z2d = jnp.transpose(z, (1, 0, 2)).reshape(n_steps * B, self.noise_size)

        y_flat = _fused_forward(x2d, z2d, self.enc_params, self.gen_params,
                                self.w_out, self.b_out,
                                T=T, S=n_steps, B=B, H=H, L=L, O=O)
        y_pre = jnp.transpose(y_flat.reshape(n_steps, B, O), (1, 0, 2))

        if self._translation:
            return y_pre - y_pre[:, :1, :] + y0
        return jnp.concatenate([y0, y_pre], axis=1)


# ----------------------------------------------------------------------------
if __name__ == "__main__":
    # Small shapes: batch=2, seq=8, input=output=8, hidden=32, noise=8, layers=2.
    B, T, INPUT, OUTPUT, HIDDEN, NOISE, LAYERS = 2, 8, 8, 8, 32, 8, 2
    STEPS = 5

    key = jax.random.PRNGKey(0)
    kx, kz, kp = jax.random.split(key, 3)

    x = jax.random.normal(kx, (B, T, INPUT), dtype=jnp.float32)

    model = ConditionalGenerator(INPUT, OUTPUT, HIDDEN, LAYERS, NOISE,
                                 translation=False, key=kp)
    y = model(x, STEPS, kz)
    y = jax.block_until_ready(y)

    assert y.shape == (B, STEPS + 1, OUTPUT), y.shape
    assert bool(jnp.all(jnp.isfinite(y)))
    print("KERNEL_OK")
</pallas_src>

<mosaic_0001>
module attributes {stable_mosaic.version = 11 : i64} {
  func.func @_cond_gen_kernel(%arg0: memref<16x8xf32, #tpu.memory_space<vmem>>, %arg1: memref<10x8xf32, #tpu.memory_space<vmem>>, %arg2: memref<8x128xf32, #tpu.memory_space<vmem>>, %arg3: memref<32x128xf32, #tpu.memory_space<vmem>>, %arg4: memref<1x128xf32, #tpu.memory_space<vmem>>, %arg5: memref<32x128xf32, #tpu.memory_space<vmem>>, %arg6: memref<32x128xf32, #tpu.memory_space<vmem>>, %arg7: memref<1x128xf32, #tpu.memory_space<vmem>>, %arg8: memref<8x128xf32, #tpu.memory_space<vmem>>, %arg9: memref<32x128xf32, #tpu.memory_space<vmem>>, %arg10: memref<1x128xf32, #tpu.memory_space<vmem>>, %arg11: memref<32x128xf32, #tpu.memory_space<vmem>>, %arg12: memref<32x128xf32, #tpu.memory_space<vmem>>, %arg13: memref<1x128xf32, #tpu.memory_space<vmem>>, %arg14: memref<32x8xf32, #tpu.memory_space<vmem>>, %arg15: memref<1x8xf32, #tpu.memory_space<vmem>>, %arg16: memref<10x8xf32, #tpu.memory_space<vmem>>, %arg17: memref<16x32xf32, #tpu.memory_space<vmem>>, %arg18: memref<16x128xf32, #tpu.memory_space<vmem>>) attributes {dimension_semantics = [], scalar_prefetch = 0 : i64, scratch_operands = 2 : i64, tpu.core_type = #tpu.core_type<tc>} {
    %cst = arith.constant 0.000000e+00 : f32
    %0 = vector.broadcast %cst : f32 to vector<2x32xf32>
    %cst_0 = arith.constant 0.000000e+00 : f32
    %1 = vector.broadcast %cst_0 : f32 to vector<2x32xf32>
    %c0 = arith.constant 0 : index
    %c0_1 = arith.constant 0 : index
    %2 = vector.load %arg0[%c0, %c0_1] : memref<16x8xf32, #tpu.memory_space<vmem>>, vector<16x8xf32>
    %c0_2 = arith.constant 0 : index
    %c0_3 = arith.constant 0 : index
    %3 = vector.load %arg3[%c0_2, %c0_3] : memref<32x128xf32, #tpu.memory_space<vmem>>, vector<32x128xf32>
    %c0_4 = arith.constant 0 : index
    %c0_5 = arith.constant 0 : index
    %4 = vector.load %arg2[%c0_4, %c0_5] : memref<8x128xf32, #tpu.memory_space<vmem>>, vector<8x128xf32>
    %cst_6 = arith.constant dense<0.000000e+00> : vector<16x128xf32>
    %5 = tpu.matmul %2, %4, %cst_6 {dimension_numbers = #tpu.dot_dimension_numbers<[1], [0], [0], [1], [0, 0, 1, 1], [], []>} : vector<16x8xf32>, vector<8x128xf32>, vector<16x128xf32> -> vector<16x128xf32>
    %c0_7 = arith.constant 0 : index
    %c0_8 = arith.constant 0 : index
    %6 = vector.load %arg4[%c0_7, %c0_8] : memref<1x128xf32, #tpu.memory_space<vmem>>, vector<1x128xf32>
    %7 = vector.broadcast %6 : vector<1x128xf32> to vector<16x128xf32>
    %8 = arith.addf %5, %7 : vector<16x128xf32>
    %c0_9 = arith.constant 0 : index
    %c0_10 = arith.constant 0 : index
    %9 = vector.load %arg18[%c0_9, %c0_10] : memref<16x128xf32, #tpu.memory_space<vmem>>, vector<16x128xf32>
    tpu.vector_store %arg18[%c0_9, %c0_10], %8 {strides = array<i32>} : memref<16x128xf32, #tpu.memory_space<vmem>>, vector<16x128xf32>,
    %c0_11 = arith.constant 0 : index
    %c0_12 = arith.constant 0 : index
    %10 = vector.load %arg18[%c0_11, %c0_12] : memref<16x128xf32, #tpu.memory_space<vmem>>, vector<2x128xf32>
    %cst_13 = arith.constant dense<0.000000e+00> : vector<2x128xf32>
    %11 = tpu.matmul %0, %3, %cst_13 {dimension_numbers = #tpu.dot_dimension_numbers<[1], [0], [0], [1], [0, 0, 1, 1], [], []>} : vector<2x32xf32>, vector<32x128xf32>, vector<2x128xf32> -> vector<2x128xf32>
    %12 = arith.addf %10, %11 : vector<2x128xf32>
    %13 = vector.extract_strided_slice %12 {offsets = [0, 0], sizes = [2, 32], strides = [1, 1]} : vector<2x128xf32> to vector<2x32xf32>
    %14 = arith.negf %13 : vector<2x32xf32>
    %15 = math.exp %14 : vector<2x32xf32>
    %cst_14 = arith.constant 1.000000e+00 : f32
    %16 = vector.broadcast %cst_14 : f32 to vector<2x32xf32>
    %17 = arith.addf %16, %15 : vector<2x32xf32>
    %18 = arith.divf %16, %17 : vector<2x32xf32>
    %19 = vector.extract_strided_slice %12 {offsets = [0, 32], sizes = [2, 32], strides = [1, 1]} : vector<2x128xf32> to vector<2x32xf32>
    %20 = arith.negf %19 : vector<2x32xf32>
    %21 = math.exp %20 : vector<2x32xf32>
    %cst_15 = arith.constant 1.000000e+00 : f32
    %22 = vector.broadcast %cst_15 : f32 to vector<2x32xf32>
    %23 = arith.addf %22, %21 : vector<2x32xf32>
    %24 = arith.divf %22, %23 : vector<2x32xf32>
    %25 = vector.extract_strided_slice %12 {offsets = [0, 64], sizes = [2, 32], strides = [1, 1]} : vector<2x128xf32> to vector<2x32xf32>
    %26 = math.tanh %25 : vector<2x32xf32>
    %27 = vector.extract_strided_slice %12 {offsets = [0, 96], sizes = [2, 32], strides = [1, 1]} : vector<2x128xf32> to vector<2x32xf32>
    %28 = arith.negf %27 : vector<2x32xf32>
    %29 = math.exp %28 : vector<2x32xf32>
    %cst_16 = arith.constant 1.000000e+00 : f32
    %30 = vector.broadcast %cst_16 : f32 to vector<2x32xf32>
    %31 = arith.addf %30, %29 : vector<2x32xf32>
    %32 = arith.divf %30, %31 : vector<2x32xf32>
    %33 = arith.mulf %24, %0 : vector<2x32xf32>
    %34 = arith.mulf %18, %26 : vector<2x32xf32>
    %35 = arith.addf %33, %34 : vector<2x32xf32>
    %36 = math.tanh %35 : vector<2x32xf32>
    %37 = arith.mulf %32, %36 : vector<2x32xf32>
    %c0_17 = arith.constant 0 : index
    %c0_18 = arith.constant 0 : index
    %38 = vector.load %arg17[%c0_17, %c0_18] : memref<16x32xf32, #tpu.memory_space<vmem>>, vector<2x32xf32>
    tpu.vector_store %arg17[%c0_17, %c0_18], %37 {strides = array<i32>} : memref<16x32xf32, #tpu.memory_space<vmem>>, vector<2x32xf32>,
    %c2 = arith.constant 2 : index
    %c0_19 = arith.constant 0 : index
    %39 = vector.load %arg18[%c2, %c0_19] : memref<16x128xf32, #tpu.memory_space<vmem>>, vector<2x128xf32>
    %cst_20 = arith.constant dense<0.000000e+00> : vector<2x128xf32>
    %40 = tpu.matmul %37, %3, %cst_20 {dimension_numbers = #tpu.dot_dimension_numbers<[1], [0], [0], [1], [0, 0, 1, 1], [], []>} : vector<2x32xf32>, vector<32x128xf32>, vector<2x128xf32> -> vector<2x128xf32>
    %41 = arith.addf %39, %40 : vector<2x128xf32>
    %42 = vector.extract_strided_slice %41 {offsets = [0, 0], sizes = [2, 32], strides = [1, 1]} : vector<2x128xf32> to vector<2x32xf32>
    %43 = arith.negf %42 : vector<2x32xf32>
    %44 = math.exp %43 : vector<2x32xf32>
    %cst_21 = arith.constant 1.000000e+00 : f32
    %45 = vector.broadcast %cst_21 : f32 to vector<2x32xf32>
    %46 = arith.addf %45, %44 : vector<2x32xf32>
    %47 = arith.divf %45, %46 : vector<2x32xf32>
    %48 = vector.extract_strided_slice %41 {offsets = [0, 32], sizes = [2, 32], strides = [1, 1]} : vector<2x128xf32> to vector<2x32xf32>
    %49 = arith.negf %48 : vector<2x32xf32>
    %50 = math.exp %49 : vector<2x32xf32>
    %cst_22 = arith.constant 1.000000e+00 : f32
    %51 = vector.broadcast %cst_22 : f32 to vector<2x32xf32>
    %52 = arith.addf %51, %50 : vector<2x32xf32>
    %53 = arith.divf %51, %52 : vector<2x32xf32>
    %54 = vector.extract_strided_slice %41 {offsets = [0, 64], sizes = [2, 32], strides = [1, 1]} : vector<2x128xf32> to vector<2x32xf32>
    %55 = math.tanh %54 : vector<2x32xf32>
    %56 = vector.extract_strided_slice %41 {offsets = [0, 96], sizes = [2, 32], strides = [1, 1]} : vector<2x128xf32> to vector<2x32xf32>
    %57 = arith.negf %56 : vector<2x32xf32>
    %58 = math.exp %57 : vector<2x32xf32>
    %cst_23 = arith.constant 1.000000e+00 : f32
    %59 = vector.broadcast %cst_23 : f32 to vector<2x32xf32>
    %60 = arith.addf %59, %58 : vector<2x32xf32>
    %61 = arith.divf %59, %60 : vector<2x32xf32>
    %62 = arith.mulf %53, %35 : vector<2x32xf32>
    %63 = arith.mulf %47, %55 : vector<2x32xf32>
    %64 = arith.addf %62, %63 : vector<2x32xf32>
    %65 = math.tanh %64 : vector<2x32xf32>
    %66 = arith.mulf %61, %65 : vector<2x32xf32>
    %c2_24 = arith.constant 2 : index
    %c0_25 = arith.constant 0 : index
    %67 = vector.load %arg17[%c2_24, %c0_25] : memref<16x32xf32, #tpu.memory_space<vmem>>, vector<2x32xf32>
    tpu.vector_store %arg17[%c2_24, %c0_25], %66 {strides = array<i32>} : memref<16x32xf32, #tpu.memory_space<vmem>>, vector<2x32xf32>,
    %c4 = arith.constant 4 : index
    %c0_26 = arith.constant 0 : index
    %68 = vector.load %arg18[%c4, %c0_26] : memref<16x128xf32, #tpu.memory_space<vmem>>, vector<2x128xf32>
    %cst_27 = arith.constant dense<0.000000e+00> : vector<2x128xf32>
    %69 = tpu.matmul %66, %3, %cst_27 {dimension_numbers = #tpu.dot_dimension_numbers<[1], [0], [0], [1], [0, 0, 1, 1], [], []>} : vector<2x32xf32>, vector<32x128xf32>, vector<2x128xf32> -> vector<2x128xf32>
    %70 = arith.addf %68, %69 : vector<2x128xf32>
    %71 = vector.extract_strided_slice %70 {offsets = [0, 0], sizes = [2, 32], strides = [1, 1]} : vector<2x128xf32> to vector<2x32xf32>
    %72 = arith.negf %71 : vector<2x32xf32>
    %73 = math.exp %72 : vector<2x32xf32>
    %cst_28 = arith.constant 1.000000e+00 : f32
    %74 = vector.broadcast %cst_28 : f32 to vector<2x32xf32>
    %75 = arith.addf %74, %73 : vector<2x32xf32>
    %76 = arith.divf %74, %75 : vector<2x32xf32>
    %77 = vector.extract_strided_slice %70 {offsets = [0, 32], sizes = [2, 32], strides = [1, 1]} : vector<2x128xf32> to vector<2x32xf32>
    %78 = arith.negf %77 : vector<2x32xf32>
    %79 = math.exp %78 : vector<2x32xf32>
    %cst_29 = arith.constant 1.000000e+00 : f32
    %80 = vector.broadcast %cst_29 : f32 to vector<2x32xf32>
    %81 = arith.addf %80, %79 : vector<2x32xf32>
    %82 = arith.divf %80, %81 : vector<2x32xf32>
    %83 = vector.extract_strided_slice %70 {offsets = [0, 64], sizes = [2, 32], strides = [1, 1]} : vector<2x128xf32> to vector<2x32xf32>
    %84 = math.tanh %83 : vector<2x32xf32>
    %85 = vector.extract_strided_slice %70 {offsets = [0, 96], sizes = [2, 32], strides = [1, 1]} : vector<2x128xf32> to vector<2x32xf32>
    %86 = arith.negf %85 : vector<2x32xf32>
    %87 = math.exp %86 : vector<2x32xf32>
    %cst_30 = arith.constant 1.000000e+00 : f32
    %88 = vector.broadcast %cst_30 : f32 to vector<2x32xf32>
    %89 = arith.addf %88, %87 : vector<2x32xf32>
    %90 = arith.divf %88, %89 : vector<2x32xf32>
    %91 = arith.mulf %82, %64 : vector<2x32xf32>
    %92 = arith.mulf %76, %84 : vector<2x32xf32>
    %93 = arith.addf %91, %92 : vector<2x32xf32>
    %94 = math.tanh %93 : vector<2x32xf32>
    %95 = arith.mulf %90, %94 : vector<2x32xf32>
    %c4_31 = arith.constant 4 : index
    %c0_32 = arith.constant 0 : index
    %96 = vector.load %arg17[%c4_31, %c0_32] : memref<16x32xf32, #tpu.memory_space<vmem>>, vector<2x32xf32>
    tpu.vector_store %arg17[%c4_31, %c0_32], %95 {strides = array<i32>} : memref<16x32xf32, #tpu.memory_space<vmem>>, vector<2x32xf32>,
    %c6 = arith.constant 6 : index
    %c0_33 = arith.constant 0 : index
    %97 = vector.load %arg18[%c6, %c0_33] : memref<16x128xf32, #tpu.memory_space<vmem>>, vector<2x128xf32>
    %cst_34 = arith.constant dense<0.000000e+00> : vector<2x128xf32>
    %98 = tpu.matmul %95, %3, %cst_34 {dimension_numbers = #tpu.dot_dimension_numbers<[1], [0], [0], [1], [0, 0, 1, 1], [], []>} : vector<2x32xf32>, vector<32x128xf32>, vector<2x128xf32> -> vector<2x128xf32>
    %99 = arith.addf %97, %98 : vector<2x128xf32>
    %100 = vector.extract_strided_slice %99 {offsets = [0, 0], sizes = [2, 32], strides = [1, 1]} : vector<2x128xf32> to vector<2x32xf32>
    %101 = arith.negf %100 : vector<2x32xf32>
    %102 = math.exp %101 : vector<2x32xf32>
    %cst_35 = arith.constant 1.000000e+00 : f32
    %103 = vector.broadcast %cst_35 : f32 to vector<2x32xf32>
    %104 = arith.addf %103, %102 : vector<2x32xf32>
    %105 = arith.divf %103, %104 : vector<2x32xf32>
    %106 = vector.extract_strided_slice %99 {offsets = [0, 32], sizes = [2, 32], strides = [1, 1]} : vector<2x128xf32> to vector<2x32xf32>
    %107 = arith.negf %106 : vector<2x32xf32>
    %108 = math.exp %107 : vector<2x32xf32>
    %cst_36 = arith.constant 1.000000e+00 : f32
    %109 = vector.broadcast %cst_36 : f32 to vector<2x32xf32>
    %110 = arith.addf %109, %108 : vector<2x32xf32>
    %111 = arith.divf %109, %110 : vector<2x32xf32>
    %112 = vector.extract_strided_slice %99 {offsets = [0, 64], sizes = [2, 32], strides = [1, 1]} : vector<2x128xf32> to vector<2x32xf32>
    %113 = math.tanh %112 : vector<2x32xf32>
    %114 = vector.extract_strided_slice %99 {offsets = [0, 96], sizes = [2, 32], strides = [1, 1]} : vector<2x128xf32> to vector<2x32xf32>
    %115 = arith.negf %114 : vector<2x32xf32>
    %116 = math.exp %115 : vector<2x32xf32>
    %cst_37 = arith.constant 1.000000e+00 : f32
    %117 = vector.broadcast %cst_37 : f32 to vector<2x32xf32>
    %118 = arith.addf %117, %116 : vector<2x32xf32>
    %119 = arith.divf %117, %118 : vector<2x32xf32>
    %120 = arith.mulf %111, %93 : vector<2x32xf32>
    %121 = arith.mulf %105, %113 : vector<2x32xf32>
    %122 = arith.addf %120, %121 : vector<2x32xf32>
    %123 = math.tanh %122 : vector<2x32xf32>
    %124 = arith.mulf %119, %123 : vector<2x32xf32>
    %c6_38 = arith.constant 6 : index
    %c0_39 = arith.constant 0 : index
    %125 = vector.load %arg17[%c6_38, %c0_39] : memref<16x32xf32, #tpu.memory_space<vmem>>, vector<2x32xf32>
    tpu.vector_store %arg17[%c6_38, %c0_39], %124 {strides = array<i32>} : memref<16x32xf32, #tpu.memory_space<vmem>>, vector<2x32xf32>,
    %c8 = arith.constant 8 : index
    %c0_40 = arith.constant 0 : index
    %126 = vector.load %arg18[%c8, %c0_40] : memref<16x128xf32, #tpu.memory_space<vmem>>, vector<2x128xf32>
    %cst_41 = arith.constant dense<0.000000e+00> : vector<2x128xf32>
    %127 = tpu.matmul %124, %3, %cst_41 {dimension_numbers = #tpu.dot_dimension_numbers<[1], [0], [0], [1], [0, 0, 1, 1], [], []>} : vector<2x32xf32>, vector<32x128xf32>, vector<2x128xf32> -> vector<2x128xf32>
    %128 = arith.addf %126, %127 : vector<2x128xf32>
    %129 = vector.extract_strided_slice %128 {offsets = [0, 0], sizes = [2, 32], strides = [1, 1]} : vector<2x128xf32> to vector<2x32xf32>
    %130 = arith.negf %129 : vector<2x32xf32>
    %131 = math.exp %130 : vector<2x32xf32>
    %cst_42 = arith.constant 1.000000e+00 : f32
    %132 = vector.broadcast %cst_42 : f32 to vector<2x32xf32>
    %133 = arith.addf %132, %131 : vector<2x32xf32>
    %134 = arith.divf %132, %133 : vector<2x32xf32>
    %135 = vector.extract_strided_slice %128 {offsets = [0, 32], sizes = [2, 32], strides = [1, 1]} : vector<2x128xf32> to vector<2x32xf32>
    %136 = arith.negf %135 : vector<2x32xf32>
    %137 = math.exp %136 : vector<2x32xf32>
    %cst_43 = arith.constant 1.000000e+00 : f32
    %138 = vector.broadcast %cst_43 : f32 to vector<2x32xf32>
    %139 = arith.addf %138, %137 : vector<2x32xf32>
    %140 = arith.divf %138, %139 : vector<2x32xf32>
    %141 = vector.extract_strided_slice %128 {offsets = [0, 64], sizes = [2, 32], strides = [1, 1]} : vector<2x128xf32> to vector<2x32xf32>
    %142 = math.tanh %141 : vector<2x32xf32>
    %143 = vector.extract_strided_slice %128 {offsets = [0, 96], sizes = [2, 32], strides = [1, 1]} : vector<2x128xf32> to vector<2x32xf32>
    %144 = arith.negf %143 : vector<2x32xf32>
    %145 = math.exp %144 : vector<2x32xf32>
    %cst_44 = arith.constant 1.000000e+00 : f32
    %146 = vector.broadcast %cst_44 : f32 to vector<2x32xf32>
    %147 = arith.addf %146, %145 : vector<2x32xf32>
    %148 = arith.divf %146, %147 : vector<2x32xf32>
    %149 = arith.mulf %140, %122 : vector<2x32xf32>
    %150 = arith.mulf %134, %142 : vector<2x32xf32>
    %151 = arith.addf %149, %150 : vector<2x32xf32>
    %152 = math.tanh %151 : vector<2x32xf32>
    %153 = arith.mulf %148, %152 : vector<2x32xf32>
    %c8_45 = arith.constant 8 : index
    %c0_46 = arith.constant 0 : index
    %154 = vector.load %arg17[%c8_45, %c0_46] : memref<16x32xf32, #tpu.memory_space<vmem>>, vector<2x32xf32>
    tpu.vector_store %arg17[%c8_45, %c0_46], %153 {strides = array<i32>} : memref<16x32xf32, #tpu.memory_space<vmem>>, vector<2x32xf32>,
    %c10 = arith.constant 10 : index
    %c0_47 = arith.constant 0 : index
    %155 = vector.load %arg18[%c10, %c0_47] : memref<16x128xf32, #tpu.memory_space<vmem>>, vector<2x128xf32>
    %cst_48 = arith.constant dense<0.000000e+00> : vector<2x128xf32>
    %156 = tpu.matmul %153, %3, %cst_48 {dimension_numbers = #tpu.dot_dimension_numbers<[1], [0], [0], [1], [0, 0, 1, 1], [], []>} : vector<2x32xf32>, vector<32x128xf32>, vector<2x128xf32> -> vector<2x128xf32>
    %157 = arith.addf %155, %156 : vector<2x128xf32>
    %158 = vector.extract_strided_slice %157 {offsets = [0, 0], sizes = [2, 32], strides = [1, 1]} : vector<2x128xf32> to vector<2x32xf32>
    %159 = arith.negf %158 : vector<2x32xf32>
    %160 = math.exp %159 : vector<2x32xf32>
    %cst_49 = arith.constant 1.000000e+00 : f32
    %161 = vector.broadcast %cst_49 : f32 to vector<2x32xf32>
    %162 = arith.addf %161, %160 : vector<2x32xf32>
    %163 = arith.divf %161, %162 : vector<2x32xf32>
    %164 = vector.extract_strided_slice %157 {offsets = [0, 32], sizes = [2, 32], strides = [1, 1]} : vector<2x128xf32> to vector<2x32xf32>
    %165 = arith.negf %164 : vector<2x32xf32>
    %166 = math.exp %165 : vector<2x32xf32>
    %cst_50 = arith.constant 1.000000e+00 : f32
    %167 = vector.broadcast %cst_50 : f32 to vector<2x32xf32>
    %168 = arith.addf %167, %166 : vector<2x32xf32>
    %169 = arith.divf %167, %168 : vector<2x32xf32>
    %170 = vector.extract_strided_slice %157 {offsets = [0, 64], sizes = [2, 32], strides = [1, 1]} : vector<2x128xf32> to vector<2x32xf32>
    %171 = math.tanh %170 : vector<2x32xf32>
    %172 = vector.extract_strided_slice %157 {offsets = [0, 96], sizes = [2, 32], strides = [1, 1]} : vector<2x128xf32> to vector<2x32xf32>
    %173 = arith.negf %172 : vector<2x32xf32>
    %174 = math.exp %173 : vector<2x32xf32>
    %cst_51 = arith.constant 1.000000e+00 : f32
    %175 = vector.broadcast %cst_51 : f32 to vector<2x32xf32>
    %176 = arith.addf %175, %174 : vector<2x32xf32>
    %177 = arith.divf %175, %176 : vector<2x32xf32>
    %178 = arith.mulf %169, %151 : vector<2x32xf32>
    %179 = arith.mulf %163, %171 : vector<2x32xf32>
    %180 = arith.addf %178, %179 : vector<2x32xf32>
    %181 = math.tanh %180 : vector<2x32xf32>
    %182 = arith.mulf %177, %181 : vector<2x32xf32>
    %c10_52 = arith.constant 10 : index
    %c0_53 = arith.constant 0 : index
    %183 = vector.load %arg17[%c10_52, %c0_53] : memref<16x32xf32, #tpu.memory_space<vmem>>, vector<2x32xf32>
    tpu.vector_store %arg17[%c10_52, %c0_53], %182 {strides = array<i32>} : memref<16x32xf32, #tpu.memory_space<vmem>>, vector<2x32xf32>,
    %c12 = arith.constant 12 : index
    %c0_54 = arith.constant 0 : index
    %184 = vector.load %arg18[%c12, %c0_54] : memref<16x128xf32, #tpu.memory_space<vmem>>, vector<2x128xf32>
    %cst_55 = arith.constant dense<0.000000e+00> : vector<2x128xf32>
    %185 = tpu.matmul %182, %3, %cst_55 {dimension_numbers = #tpu.dot_dimension_numbers<[1], [0], [0], [1], [0, 0, 1, 1], [], []>} : vector<2x32xf32>, vector<32x128xf32>, vector<2x128xf32> -> vector<2x128xf32>
    %186 = arith.addf %184, %185 : vector<2x128xf32>
    %187 = vector.extract_strided_slice %186 {offsets = [0, 0], sizes = [2, 32], strides = [1, 1]} : vector<2x128xf32> to vector<2x32xf32>
    %188 = arith.negf %187 : vector<2x32xf32>
    %189 = math.exp %188 : vector<2x32xf32>
    %cst_56 = arith.constant 1.000000e+00 : f32
    %190 = vector.broadcast %cst_56 : f32 to vector<2x32xf32>
    %191 = arith.addf %190, %189 : vector<2x32xf32>
    %192 = arith.divf %190, %191 : vector<2x32xf32>
    %193 = vector.extract_strided_slice %186 {offsets = [0, 32], sizes = [2, 32], strides = [1, 1]} : vector<2x128xf32> to vector<2x32xf32>
    %194 = arith.negf %193 : vector<2x32xf32>
    %195 = math.exp %194 : vector<2x32xf32>
    %cst_57 = arith.constant 1.000000e+00 : f32
    %196 = vector.broadcast %cst_57 : f32 to vector<2x32xf32>
    %197 = arith.addf %196, %195 : vector<2x32xf32>
    %198 = arith.divf %196, %197 : vector<2x32xf32>
    %199 = vector.extract_strided_slice %186 {offsets = [0, 64], sizes = [2, 32], strides = [1, 1]} : vector<2x128xf32> to vector<2x32xf32>
    %200 = math.tanh %199 : vector<2x32xf32>
    %201 = vector.extract_strided_slice %186 {offsets = [0, 96], sizes = [2, 32], strides = [1, 1]} : vector<2x128xf32> to vector<2x32xf32>
    %202 = arith.negf %201 : vector<2x32xf32>
    %203 = math.exp %202 : vector<2x32xf32>
    %cst_58 = arith.constant 1.000000e+00 : f32
    %204 = vector.broadcast %cst_58 : f32 to vector<2x32xf32>
    %205 = arith.addf %204, %203 : vector<2x32xf32>
    %206 = arith.divf %204, %205 : vector<2x32xf32>
    %207 = arith.mulf %198, %180 : vector<2x32xf32>
    %208 = arith.mulf %192, %200 : vector<2x32xf32>
    %209 = arith.addf %207, %208 : vector<2x32xf32>
    %210 = math.tanh %209 : vector<2x32xf32>
    %211 = arith.mulf %206, %210 : vector<2x32xf32>
    %c12_59 = arith.constant 12 : index
    %c0_60 = arith.constant 0 : index
    %212 = vector.load %arg17[%c12_59, %c0_60] : memref<16x32xf32, #tpu.memory_space<vmem>>, vector<2x32xf32>
    tpu.vector_store %arg17[%c12_59, %c0_60], %211 {strides = array<i32>} : memref<16x32xf32, #tpu.memory_space<vmem>>, vector<2x32xf32>,
    %c14 = arith.constant 14 : index
    %c0_61 = arith.constant 0 : index
    %213 = vector.load %arg18[%c14, %c0_61] : memref<16x128xf32, #tpu.memory_space<vmem>>, vector<2x128xf32>
    %cst_62 = arith.constant dense<0.000000e+00> : vector<2x128xf32>
    %214 = tpu.matmul %211, %3, %cst_62 {dimension_numbers = #tpu.dot_dimension_numbers<[1], [0], [0], [1], [0, 0, 1, 1], [], []>} : vector<2x32xf32>, vector<32x128xf32>, vector<2x128xf32> -> vector<2x128xf32>
    %215 = arith.addf %213, %214 : vector<2x128xf32>
    %216 = vector.extract_strided_slice %215 {offsets = [0, 0], sizes = [2, 32], strides = [1, 1]} : vector<2x128xf32> to vector<2x32xf32>
    %217 = arith.negf %216 : vector<2x32xf32>
    %218 = math.exp %217 : vector<2x32xf32>
    %cst_63 = arith.constant 1.000000e+00 : f32
    %219 = vector.broadcast %cst_63 : f32 to vector<2x32xf32>
    %220 = arith.addf %219, %218 : vector<2x32xf32>
    %221 = arith.divf %219, %220 : vector<2x32xf32>
    %222 = vector.extract_strided_slice %215 {offsets = [0, 32], sizes = [2, 32], strides = [1, 1]} : vector<2x128xf32> to vector<2x32xf32>
    %223 = arith.negf %222 : vector<2x32xf32>
    %224 = math.exp %223 : vector<2x32xf32>
    %cst_64 = arith.constant 1.000000e+00 : f32
    %225 = vector.broadcast %cst_64 : f32 to vector<2x32xf32>
    %226 = arith.addf %225, %224 : vector<2x32xf32>
    %227 = arith.divf %225, %226 : vector<2x32xf32>
    %228 = vector.extract_strided_slice %215 {offsets = [0, 64], sizes = [2, 32], strides = [1, 1]} : vector<2x128xf32> to vector<2x32xf32>
    %229 = math.tanh %228 : vector<2x32xf32>
    %230 = vector.extract_strided_slice %215 {offsets = [0, 96], sizes = [2, 32], strides = [1, 1]} : vector<2x128xf32> to vector<2x32xf32>
    %231 = arith.negf %230 : vector<2x32xf32>
    %232 = math.exp %231 : vector<2x32xf32>
    %cst_65 = arith.constant 1.000000e+00 : f32
    %233 = vector.broadcast %cst_65 : f32 to vector<2x32xf32>
    %234 = arith.addf %233, %232 : vector<2x32xf32>
    %235 = arith.divf %233, %234 : vector<2x32xf32>
    %236 = arith.mulf %227, %209 : vector<2x32xf32>
    %237 = arith.mulf %221, %229 : vector<2x32xf32>
    %238 = arith.addf %236, %237 : vector<2x32xf32>
    %239 = math.tanh %238 : vector<2x32xf32>
    %240 = arith.mulf %235, %239 : vector<2x32xf32>
    %c14_66 = arith.constant 14 : index
    %c0_67 = arith.constant 0 : index
    %241 = vector.load %arg17[%c14_66, %c0_67] : memref<16x32xf32, #tpu.memory_space<vmem>>, vector<2x32xf32>
    tpu.vector_store %arg17[%c14_66, %c0_67], %240 {strides = array<i32>} : memref<16x32xf32, #tpu.memory_space<vmem>>, vector<2x32xf32>,
    %c0_68 = arith.constant 0 : index
    %c0_69 = arith.constant 0 : index
    %242 = vector.load %arg17[%c0_68, %c0_69] : memref<16x32xf32, #tpu.memory_space<vmem>>, vector<16x32xf32>
    %c0_70 = arith.constant 0 : index
    %c0_71 = arith.constant 0 : index
    %243 = vector.load %arg6[%c0_70, %c0_71] : memref<32x128xf32, #tpu.memory_space<vmem>>, vector<32x128xf32>
    %c0_72 = arith.constant 0 : index
    %c0_73 = arith.constant 0 : index
    %244 = vector.load %arg5[%c0_72, %c0_73] : memref<32x128xf32, #tpu.memory_space<vmem>>, vector<32x128xf32>
    %cst_74 = arith.constant dense<0.000000e+00> : vector<16x128xf32>
    %245 = tpu.matmul %242, %244, %cst_74 {dimension_numbers = #tpu.dot_dimension_numbers<[1], [0], [0], [1], [0, 0, 1, 1], [], []>} : vector<16x32xf32>, vector<32x128xf32>, vector<16x128xf32> -> vector<16x128xf32>
    %c0_75 = arith.constant 0 : index
    %c0_76 = arith.constant 0 : index
    %246 = vector.load %arg7[%c0_75, %c0_76] : memref<1x128xf32, #tpu.memory_space<vmem>>, vector<1x128xf32>
    %247 = vector.broadcast %246 : vector<1x128xf32> to vector<16x128xf32>
    %248 = arith.addf %245, %247 : vector<16x128xf32>
    %c0_77 = arith.constant 0 : index
    %c0_78 = arith.constant 0 : index
    %249 = vector.load %arg18[%c0_77, %c0_78] : memref<16x128xf32, #tpu.memory_space<vmem>>, vector<16x128xf32>
    tpu.vector_store %arg18[%c0_77, %c0_78], %248 {strides = array<i32>} : memref<16x128xf32, #tpu.memory_space<vmem>>, vector<16x128xf32>,
    %c0_79 = arith.constant 0 : index
    %c0_80 = arith.constant 0 : index
    %250 = vector.load %arg18[%c0_79, %c0_80] : memref<16x128xf32, #tpu.memory_space<vmem>>, vector<2x128xf32>
    %cst_81 = arith.constant dense<0.000000e+00> : vector<2x128xf32>
    %251 = tpu.matmul %1, %243, %cst_81 {dimension_numbers = #tpu.dot_dimension_numbers<[1], [0], [0], [1], [0, 0, 1, 1], [], []>} : vector<2x32xf32>, vector<32x128xf32>, vector<2x128xf32> -> vector<2x128xf32>
    %252 = arith.addf %250, %251 : vector<2x128xf32>
    %253 = vector.extract_strided_slice %252 {offsets = [0, 0], sizes = [2, 32], strides = [1, 1]} : vector<2x128xf32> to vector<2x32xf32>
    %254 = arith.negf %253 : vector<2x32xf32>
    %255 = math.exp %254 : vector<2x32xf32>
    %cst_82 = arith.constant 1.000000e+00 : f32
    %256 = vector.broadcast %cst_82 : f32 to vector<2x32xf32>
    %257 = arith.addf %256, %255 : vector<2x32xf32>
    %258 = arith.divf %256, %257 : vector<2x32xf32>
    %259 = vector.extract_strided_slice %252 {offsets = [0, 32], sizes = [2, 32], strides = [1, 1]} : vector<2x128xf32> to vector<2x32xf32>
    %260 = arith.negf %259 : vector<2x32xf32>
    %261 = math.exp %260 : vector<2x32xf32>
    %cst_83 = arith.constant 1.000000e+00 : f32
    %262 = vector.broadcast %cst_83 : f32 to vector<2x32xf32>
    %263 = arith.addf %262, %261 : vector<2x32xf32>
    %264 = arith.divf %262, %263 : vector<2x32xf32>
    %265 = vector.extract_strided_slice %252 {offsets = [0, 64], sizes = [2, 32], strides = [1, 1]} : vector<2x128xf32> to vector<2x32xf32>
    %266 = math.tanh %265 : vector<2x32xf32>
    %267 = vector.extract_strided_slice %252 {offsets = [0, 96], sizes = [2, 32], strides = [1, 1]} : vector<2x128xf32> to vector<2x32xf32>
    %268 = arith.negf %267 : vector<2x32xf32>
    %269 = math.exp %268 : vector<2x32xf32>
    %cst_84 = arith.constant 1.000000e+00 : f32
    %270 = vector.broadcast %cst_84 : f32 to vector<2x32xf32>
    %271 = arith.addf %270, %269 : vector<2x32xf32>
    %272 = arith.divf %270, %271 : vector<2x32xf32>
    %273 = arith.mulf %264, %1 : vector<2x32xf32>
    %274 = arith.mulf %258, %266 : vector<2x32xf32>
    %275 = arith.addf %273, %274 : vector<2x32xf32>
    %276 = math.tanh %275 : vector<2x32xf32>
    %277 = arith.mulf %272, %276 : vector<2x32xf32>
    %c2_85 = arith.constant 2 : index
    %c0_86 = arith.constant 0 : index
    %278 = vector.load %arg18[%c2_85, %c0_86] : memref<16x128xf32, #tpu.memory_space<vmem>>, vector<2x128xf32>
    %cst_87 = arith.constant dense<0.000000e+00> : vector<2x128xf32>
    %279 = tpu.matmul %277, %243, %cst_87 {dimension_numbers = #tpu.dot_dimension_numbers<[1], [0], [0], [1], [0, 0, 1, 1], [], []>} : vector<2x32xf32>, vector<32x128xf32>, vector<2x128xf32> -> vector<2x128xf32>
    %280 = arith.addf %278, %279 : vector<2x128xf32>
    %281 = vector.extract_strided_slice %280 {offsets = [0, 0], sizes = [2, 32], strides = [1, 1]} : vector<2x128xf32> to vector<2x32xf32>
    %282 = arith.negf %281 : vector<2x32xf32>
    %283 = math.exp %282 : vector<2x32xf32>
    %cst_88 = arith.constant 1.000000e+00 : f32
    %284 = vector.broadcast %cst_88 : f32 to vector<2x32xf32>
    %285 = arith.addf %284, %283 : vector<2x32xf32>
    %286 = arith.divf %284, %285 : vector<2x32xf32>
    %287 = vector.extract_strided_slice %280 {offsets = [0, 32], sizes = [2, 32], strides = [1, 1]} : vector<2x128xf32> to vector<2x32xf32>
    %288 = arith.negf %287 : vector<2x32xf32>
    %289 = math.exp %288 : vector<2x32xf32>
    %cst_89 = arith.constant 1.000000e+00 : f32
    %290 = vector.broadcast %cst_89 : f32 to vector<2x32xf32>
    %291 = arith.addf %290, %289 : vector<2x32xf32>
    %292 = arith.divf %290, %291 : vector<2x32xf32>
    %293 = vector.extract_strided_slice %280 {offsets = [0, 64], sizes = [2, 32], strides = [1, 1]} : vector<2x128xf32> to vector<2x32xf32>
    %294 = math.tanh %293 : vector<2x32xf32>
    %295 = vector.extract_strided_slice %280 {offsets = [0, 96], sizes = [2, 32], strides = [1, 1]} : vector<2x128xf32> to vector<2x32xf32>
    %296 = arith.negf %295 : vector<2x32xf32>
    %297 = math.exp %296 : vector<2x32xf32>
    %cst_90 = arith.constant 1.000000e+00 : f32
    %298 = vector.broadcast %cst_90 : f32 to vector<2x32xf32>
    %299 = arith.addf %298, %297 : vector<2x32xf32>
    %300 = arith.divf %298, %299 : vector<2x32xf32>
    %301 = arith.mulf %292, %275 : vector<2x32xf32>
    %302 = arith.mulf %286, %294 : vector<2x32xf32>
    %303 = arith.addf %301, %302 : vector<2x32xf32>
    %304 = math.tanh %303 : vector<2x32xf32>
    %305 = arith.mulf %300, %304 : vector<2x32xf32>
    %c4_91 = arith.constant 4 : index
    %c0_92 = arith.constant 0 : index
    %306 = vector.load %arg18[%c4_91, %c0_92] : memref<16x128xf32, #tpu.memory_space<vmem>>, vector<2x128xf32>
    %cst_93 = arith.constant dense<0.000000e+00> : vector<2x128xf32>
    %307 = tpu.matmul %305, %243, %cst_93 {dimension_numbers = #tpu.dot_dimension_numbers<[1], [0], [0], [1], [0, 0, 1, 1], [], []>} : vector<2x32xf32>, vector<32x128xf32>, vector<2x128xf32> -> vector<2x128xf32>
    %308 = arith.addf %306, %307 : vector<2x128xf32>
    %309 = vector.extract_strided_slice %308 {offsets = [0, 0], sizes = [2, 32], strides = [1, 1]} : vector<2x128xf32> to vector<2x32xf32>
    %310 = arith.negf %309 : vector<2x32xf32>
    %311 = math.exp %310 : vector<2x32xf32>
    %cst_94 = arith.constant 1.000000e+00 : f32
    %312 = vector.broadcast %cst_94 : f32 to vector<2x32xf32>
    %313 = arith.addf %312, %311 : vector<2x32xf32>
    %314 = arith.divf %312, %313 : vector<2x32xf32>
    %315 = vector.extract_strided_slice %308 {offsets = [0, 32], sizes = [2, 32], strides = [1, 1]} : vector<2x128xf32> to vector<2x32xf32>
    %316 = arith.negf %315 : vector<2x32xf32>
    %317 = math.exp %316 : vector<2x32xf32>
    %cst_95 = arith.constant 1.000000e+00 : f32
    %318 = vector.broadcast %cst_95 : f32 to vector<2x32xf32>
    %319 = arith.addf %318, %317 : vector<2x32xf32>
    %320 = arith.divf %318, %319 : vector<2x32xf32>
    %321 = vector.extract_strided_slice %308 {offsets = [0, 64], sizes = [2, 32], strides = [1, 1]} : vector<2x128xf32> to vector<2x32xf32>
    %322 = math.tanh %321 : vector<2x32xf32>
    %323 = vector.extract_strided_slice %308 {offsets = [0, 96], sizes = [2, 32], strides = [1, 1]} : vector<2x128xf32> to vector<2x32xf32>
    %324 = arith.negf %323 : vector<2x32xf32>
    %325 = math.exp %324 : vector<2x32xf32>
    %cst_96 = arith.constant 1.000000e+00 : f32
    %326 = vector.broadcast %cst_96 : f32 to vector<2x32xf32>
    %327 = arith.addf %326, %325 : vector<2x32xf32>
    %328 = arith.divf %326, %327 : vector<2x32xf32>
    %329 = arith.mulf %320, %303 : vector<2x32xf32>
    %330 = arith.mulf %314, %322 : vector<2x32xf32>
    %331 = arith.addf %329, %330 : vector<2x32xf32>
    %332 = math.tanh %331 : vector<2x32xf32>
    %333 = arith.mulf %328, %332 : vector<2x32xf32>
    %c6_97 = arith.constant 6 : index
    %c0_98 = arith.constant 0 : index
    %334 = vector.load %arg18[%c6_97, %c0_98] : memref<16x128xf32, #tpu.memory_space<vmem>>, vector<2x128xf32>
    %cst_99 = arith.constant dense<0.000000e+00> : vector<2x128xf32>
    %335 = tpu.matmul %333, %243, %cst_99 {dimension_numbers = #tpu.dot_dimension_numbers<[1], [0], [0], [1], [0, 0, 1, 1], [], []>} : vector<2x32xf32>, vector<32x128xf32>, vector<2x128xf32> -> vector<2x128xf32>
    %336 = arith.addf %334, %335 : vector<2x128xf32>
    %337 = vector.extract_strided_slice %336 {offsets = [0, 0], sizes = [2, 32], strides = [1, 1]} : vector<2x128xf32> to vector<2x32xf32>
    %338 = arith.negf %337 : vector<2x32xf32>
    %339 = math.exp %338 : vector<2x32xf32>
    %cst_100 = arith.constant 1.000000e+00 : f32
    %340 = vector.broadcast %cst_100 : f32 to vector<2x32xf32>
    %341 = arith.addf %340, %339 : vector<2x32xf32>
    %342 = arith.divf %340, %341 : vector<2x32xf32>
    %343 = vector.extract_strided_slice %336 {offsets = [0, 32], sizes = [2, 32], strides = [1, 1]} : vector<2x128xf32> to vector<2x32xf32>
    %344 = arith.negf %343 : vector<2x32xf32>
    %345 = math.exp %344 : vector<2x32xf32>
    %cst_101 = arith.constant 1.000000e+00 : f32
    %346 = vector.broadcast %cst_101 : f32 to vector<2x32xf32>
    %347 = arith.addf %346, %345 : vector<2x32xf32>
    %348 = arith.divf %346, %347 : vector<2x32xf32>
    %349 = vector.extract_strided_slice %336 {offsets = [0, 64], sizes = [2, 32], strides = [1, 1]} : vector<2x128xf32> to vector<2x32xf32>
    %350 = math.tanh %349 : vector<2x32xf32>
    %351 = vector.extract_strided_slice %336 {offsets = [0, 96], sizes = [2, 32], strides = [1, 1]} : vector<2x128xf32> to vector<2x32xf32>
    %352 = arith.negf %351 : vector<2x32xf32>
    %353 = math.exp %352 : vector<2x32xf32>
    %cst_102 = arith.constant 1.000000e+00 : f32
    %354 = vector.broadcast %cst_102 : f32 to vector<2x32xf32>
    %355 = arith.addf %354, %353 : vector<2x32xf32>
    %356 = arith.divf %354, %355 : vector<2x32xf32>
    %357 = arith.mulf %348, %331 : vector<2x32xf32>
    %358 = arith.mulf %342, %350 : vector<2x32xf32>
    %359 = arith.addf %357, %358 : vector<2x32xf32>
    %360 = math.tanh %359 : vector<2x32xf32>
    %361 = arith.mulf %356, %360 : vector<2x32xf32>
    %c8_103 = arith.constant 8 : index
    %c0_104 = arith.constant 0 : index
    %362 = vector.load %arg18[%c8_103, %c0_104] : memref<16x128xf32, #tpu.memory_space<vmem>>, vector<2x128xf32>
    %cst_105 = arith.constant dense<0.000000e+00> : vector<2x128xf32>
    %363 = tpu.matmul %361, %243, %cst_105 {dimension_numbers = #tpu.dot_dimension_numbers<[1], [0], [0], [1], [0, 0, 1, 1], [], []>} : vector<2x32xf32>, vector<32x128xf32>, vector<2x128xf32> -> vector<2x128xf32>
    %364 = arith.addf %362, %363 : vector<2x128xf32>
    %365 = vector.extract_strided_slice %364 {offsets = [0, 0], sizes = [2, 32], strides = [1, 1]} : vector<2x128xf32> to vector<2x32xf32>
    %366 = arith.negf %365 : vector<2x32xf32>
    %367 = math.exp %366 : vector<2x32xf32>
    %cst_106 = arith.constant 1.000000e+00 : f32
    %368 = vector.broadcast %cst_106 : f32 to vector<2x32xf32>
    %369 = arith.addf %368, %367 : vector<2x32xf32>
    %370 = arith.divf %368, %369 : vector<2x32xf32>
    %371 = vector.extract_strided_slice %364 {offsets = [0, 32], sizes = [2, 32], strides = [1, 1]} : vector<2x128xf32> to vector<2x32xf32>
    %372 = arith.negf %371 : vector<2x32xf32>
    %373 = math.exp %372 : vector<2x32xf32>
    %cst_107 = arith.constant 1.000000e+00 : f32
    %374 = vector.broadcast %cst_107 : f32 to vector<2x32xf32>
    %375 = arith.addf %374, %373 : vector<2x32xf32>
    %376 = arith.divf %374, %375 : vector<2x32xf32>
    %377 = vector.extract_strided_slice %364 {offsets = [0, 64], sizes = [2, 32], strides = [1, 1]} : vector<2x128xf32> to vector<2x32xf32>
    %378 = math.tanh %377 : vector<2x32xf32>
    %379 = vector.extract_strided_slice %364 {offsets = [0, 96], sizes = [2, 32], strides = [1, 1]} : vector<2x128xf32> to vector<2x32xf32>
    %380 = arith.negf %379 : vector<2x32xf32>
    %381 = math.exp %380 : vector<2x32xf32>
    %cst_108 = arith.constant 1.000000e+00 : f32
    %382 = vector.broadcast %cst_108 : f32 to vector<2x32xf32>
    %383 = arith.addf %382, %381 : vector<2x32xf32>
    %384 = arith.divf %382, %383 : vector<2x32xf32>
    %385 = arith.mulf %376, %359 : vector<2x32xf32>
    %386 = arith.mulf %370, %378 : vector<2x32xf32>
    %387 = arith.addf %385, %386 : vector<2x32xf32>
    %388 = math.tanh %387 : vector<2x32xf32>
    %389 = arith.mulf %384, %388 : vector<2x32xf32>
    %c10_109 = arith.constant 10 : index
    %c0_110 = arith.constant 0 : index
    %390 = vector.load %arg18[%c10_109, %c0_110] : memref<16x128xf32, #tpu.memory_space<vmem>>, vector<2x128xf32>
    %cst_111 = arith.constant dense<0.000000e+00> : vector<2x128xf32>
    %391 = tpu.matmul %389, %243, %cst_111 {dimension_numbers = #tpu.dot_dimension_numbers<[1], [0], [0], [1], [0, 0, 1, 1], [], []>} : vector<2x32xf32>, vector<32x128xf32>, vector<2x128xf32> -> vector<2x128xf32>
    %392 = arith.addf %390, %391 : vector<2x128xf32>
    %393 = vector.extract_strided_slice %392 {offsets = [0, 0], sizes = [2, 32], strides = [1, 1]} : vector<2x128xf32> to vector<2x32xf32>
    %394 = arith.negf %393 : vector<2x32xf32>
    %395 = math.exp %394 : vector<2x32xf32>
    %cst_112 = arith.constant 1.000000e+00 : f32
    %396 = vector.broadcast %cst_112 : f32 to vector<2x32xf32>
    %397 = arith.addf %396, %395 : vector<2x32xf32>
    %398 = arith.divf %396, %397 : vector<2x32xf32>
    %399 = vector.extract_strided_slice %392 {offsets = [0, 32], sizes = [2, 32], strides = [1, 1]} : vector<2x128xf32> to vector<2x32xf32>
    %400 = arith.negf %399 : vector<2x32xf32>
    %401 = math.exp %400 : vector<2x32xf32>
    %cst_113 = arith.constant 1.000000e+00 : f32
    %402 = vector.broadcast %cst_113 : f32 to vector<2x32xf32>
    %403 = arith.addf %402, %401 : vector<2x32xf32>
    %404 = arith.divf %402, %403 : vector<2x32xf32>
    %405 = vector.extract_strided_slice %392 {offsets = [0, 64], sizes = [2, 32], strides = [1, 1]} : vector<2x128xf32> to vector<2x32xf32>
    %406 = math.tanh %405 : vector<2x32xf32>
    %407 = vector.extract_strided_slice %392 {offsets = [0, 96], sizes = [2, 32], strides = [1, 1]} : vector<2x128xf32> to vector<2x32xf32>
    %408 = arith.negf %407 : vector<2x32xf32>
    %409 = math.exp %408 : vector<2x32xf32>
    %cst_114 = arith.constant 1.000000e+00 : f32
    %410 = vector.broadcast %cst_114 : f32 to vector<2x32xf32>
    %411 = arith.addf %410, %409 : vector<2x32xf32>
    %412 = arith.divf %410, %411 : vector<2x32xf32>
    %413 = arith.mulf %404, %387 : vector<2x32xf32>
    %414 = arith.mulf %398, %406 : vector<2x32xf32>
    %415 = arith.addf %413, %414 : vector<2x32xf32>
    %416 = math.tanh %415 : vector<2x32xf32>
    %417 = arith.mulf %412, %416 : vector<2x32xf32>
    %c12_115 = arith.constant 12 : index
    %c0_116 = arith.constant 0 : index
    %418 = vector.load %arg18[%c12_115, %c0_116] : memref<16x128xf32, #tpu.memory_space<vmem>>, vector<2x128xf32>
    %cst_117 = arith.constant dense<0.000000e+00> : vector<2x128xf32>
    %419 = tpu.matmul %417, %243, %cst_117 {dimension_numbers = #tpu.dot_dimension_numbers<[1], [0], [0], [1], [0, 0, 1, 1], [], []>} : vector<2x32xf32>, vector<32x128xf32>, vector<2x128xf32> -> vector<2x128xf32>
    %420 = arith.addf %418, %419 : vector<2x128xf32>
    %421 = vector.extract_strided_slice %420 {offsets = [0, 0], sizes = [2, 32], strides = [1, 1]} : vector<2x128xf32> to vector<2x32xf32>
    %422 = arith.negf %421 : vector<2x32xf32>
    %423 = math.exp %422 : vector<2x32xf32>
    %cst_118 = arith.constant 1.000000e+00 : f32
    %424 = vector.broadcast %cst_118 : f32 to vector<2x32xf32>
    %425 = arith.addf %424, %423 : vector<2x32xf32>
    %426 = arith.divf %424, %425 : vector<2x32xf32>
    %427 = vector.extract_strided_slice %420 {offsets = [0, 32], sizes = [2, 32], strides = [1, 1]} : vector<2x128xf32> to vector<2x32xf32>
    %428 = arith.negf %427 : vector<2x32xf32>
    %429 = math.exp %428 : vector<2x32xf32>
    %cst_119 = arith.constant 1.000000e+00 : f32
    %430 = vector.broadcast %cst_119 : f32 to vector<2x32xf32>
    %431 = arith.addf %430, %429 : vector<2x32xf32>
    %432 = arith.divf %430, %431 : vector<2x32xf32>
    %433 = vector.extract_strided_slice %420 {offsets = [0, 64], sizes = [2, 32], strides = [1, 1]} : vector<2x128xf32> to vector<2x32xf32>
    %434 = math.tanh %433 : vector<2x32xf32>
    %435 = vector.extract_strided_slice %420 {offsets = [0, 96], sizes = [2, 32], strides = [1, 1]} : vector<2x128xf32> to vector<2x32xf32>
    %436 = arith.negf %435 : vector<2x32xf32>
    %437 = math.exp %436 : vector<2x32xf32>
    %cst_120 = arith.constant 1.000000e+00 : f32
    %438 = vector.broadcast %cst_120 : f32 to vector<2x32xf32>
    %439 = arith.addf %438, %437 : vector<2x32xf32>
    %440 = arith.divf %438, %439 : vector<2x32xf32>
    %441 = arith.mulf %432, %415 : vector<2x32xf32>
    %442 = arith.mulf %426, %434 : vector<2x32xf32>
    %443 = arith.addf %441, %442 : vector<2x32xf32>
    %444 = math.tanh %443 : vector<2x32xf32>
    %445 = arith.mulf %440, %444 : vector<2x32xf32>
    %c14_121 = arith.constant 14 : index
    %c0_122 = arith.constant 0 : index
    %446 = vector.load %arg18[%c14_121, %c0_122] : memref<16x128xf32, #tpu.memory_space<vmem>>, vector<2x128xf32>
    %cst_123 = arith.constant dense<0.000000e+00> : vector<2x128xf32>
    %447 = tpu.matmul %445, %243, %cst_123 {dimension_numbers = #tpu.dot_dimension_numbers<[1], [0], [0], [1], [0, 0, 1, 1], [], []>} : vector<2x32xf32>, vector<32x128xf32>, vector<2x128xf32> -> vector<2x128xf32>
    %448 = arith.addf %446, %447 : vector<2x128xf32>
    %449 = vector.extract_strided_slice %448 {offsets = [0, 0], sizes = [2, 32], strides = [1, 1]} : vector<2x128xf32> to vector<2x32xf32>
    %450 = arith.negf %449 : vector<2x32xf32>
    %451 = math.exp %450 : vector<2x32xf32>
    %cst_124 = arith.constant 1.000000e+00 : f32
    %452 = vector.broadcast %cst_124 : f32 to vector<2x32xf32>
    %453 = arith.addf %452, %451 : vector<2x32xf32>
    %454 = arith.divf %452, %453 : vector<2x32xf32>
    %455 = vector.extract_strided_slice %448 {offsets = [0, 32], sizes = [2, 32], strides = [1, 1]} : vector<2x128xf32> to vector<2x32xf32>
    %456 = arith.negf %455 : vector<2x32xf32>
    %457 = math.exp %456 : vector<2x32xf32>
    %cst_125 = arith.constant 1.000000e+00 : f32
    %458 = vector.broadcast %cst_125 : f32 to vector<2x32xf32>
    %459 = arith.addf %458, %457 : vector<2x32xf32>
    %460 = arith.divf %458, %459 : vector<2x32xf32>
    %461 = vector.extract_strided_slice %448 {offsets = [0, 64], sizes = [2, 32], strides = [1, 1]} : vector<2x128xf32> to vector<2x32xf32>
    %462 = math.tanh %461 : vector<2x32xf32>
    %463 = vector.extract_strided_slice %448 {offsets = [0, 96], sizes = [2, 32], strides = [1, 1]} : vector<2x128xf32> to vector<2x32xf32>
    %464 = arith.negf %463 : vector<2x32xf32>
    %465 = math.exp %464 : vector<2x32xf32>
    %cst_126 = arith.constant 1.000000e+00 : f32
    %466 = vector.broadcast %cst_126 : f32 to vector<2x32xf32>
    %467 = arith.addf %466, %465 : vector<2x32xf32>
    %468 = arith.divf %466, %467 : vector<2x32xf32>
    %469 = arith.mulf %460, %443 : vector<2x32xf32>
    %470 = arith.mulf %454, %462 : vector<2x32xf32>
    %471 = arith.addf %469, %470 : vector<2x32xf32>
    %472 = math.tanh %471 : vector<2x32xf32>
    %473 = arith.mulf %468, %472 : vector<2x32xf32>
    %c0_127 = arith.constant 0 : index
    %c0_128 = arith.constant 0 : index
    %474 = vector.load %arg1[%c0_127, %c0_128] : memref<10x8xf32, #tpu.memory_space<vmem>>, vector<10x8xf32>
    %c0_129 = arith.constant 0 : index
    %c0_130 = arith.constant 0 : index
    %475 = vector.load %arg9[%c0_129, %c0_130] : memref<32x128xf32, #tpu.memory_space<vmem>>, vector<32x128xf32>
    %c0_131 = arith.constant 0 : index
    %c0_132 = arith.constant 0 : index
    %476 = vector.load %arg8[%c0_131, %c0_132] : memref<8x128xf32, #tpu.memory_space<vmem>>, vector<8x128xf32>
    %cst_133 = arith.constant dense<0.000000e+00> : vector<10x128xf32>
    %477 = tpu.matmul %474, %476, %cst_133 {dimension_numbers = #tpu.dot_dimension_numbers<[1], [0], [0], [1], [0, 0, 1, 1], [], []>} : vector<10x8xf32>, vector<8x128xf32>, vector<10x128xf32> -> vector<10x128xf32>
    %c0_134 = arith.constant 0 : index
    %c0_135 = arith.constant 0 : index
    %478 = vector.load %arg10[%c0_134, %c0_135] : memref<1x128xf32, #tpu.memory_space<vmem>>, vector<1x128xf32>
    %479 = vector.broadcast %478 : vector<1x128xf32> to vector<10x128xf32>
    %480 = arith.addf %477, %479 : vector<10x128xf32>
    %c0_136 = arith.constant 0 : index
    %c0_137 = arith.constant 0 : index
    %481 = vector.load %arg18[%c0_136, %c0_137] : memref<16x128xf32, #tpu.memory_space<vmem>>, vector<10x128xf32>
    tpu.vector_store %arg18[%c0_136, %c0_137], %480 {strides = array<i32>} : memref<16x128xf32, #tpu.memory_space<vmem>>, vector<10x128xf32>,
    %c0_138 = arith.constant 0 : index
    %c0_139 = arith.constant 0 : index
    %482 = vector.load %arg18[%c0_138, %c0_139] : memref<16x128xf32, #tpu.memory_space<vmem>>, vector<2x128xf32>
    %cst_140 = arith.constant dense<0.000000e+00> : vector<2x128xf32>
    %483 = tpu.matmul %240, %475, %cst_140 {dimension_numbers = #tpu.dot_dimension_numbers<[1], [0], [0], [1], [0, 0, 1, 1], [], []>} : vector<2x32xf32>, vector<32x128xf32>, vector<2x128xf32> -> vector<2x128xf32>
    %484 = arith.addf %482, %483 : vector<2x128xf32>
    %485 = vector.extract_strided_slice %484 {offsets = [0, 0], sizes = [2, 32], strides = [1, 1]} : vector<2x128xf32> to vector<2x32xf32>
    %486 = arith.negf %485 : vector<2x32xf32>
    %487 = math.exp %486 : vector<2x32xf32>
    %cst_141 = arith.constant 1.000000e+00 : f32
    %488 = vector.broadcast %cst_141 : f32 to vector<2x32xf32>
    %489 = arith.addf %488, %487 : vector<2x32xf32>
    %490 = arith.divf %488, %489 : vector<2x32xf32>
    %491 = vector.extract_strided_slice %484 {offsets = [0, 32], sizes = [2, 32], strides = [1, 1]} : vector<2x128xf32> to vector<2x32xf32>
    %492 = arith.negf %491 : vector<2x32xf32>
    %493 = math.exp %492 : vector<2x32xf32>
    %cst_142 = arith.constant 1.000000e+00 : f32
    %494 = vector.broadcast %cst_142 : f32 to vector<2x32xf32>
    %495 = arith.addf %494, %493 : vector<2x32xf32>
    %496 = arith.divf %494, %495 : vector<2x32xf32>
    %497 = vector.extract_strided_slice %484 {offsets = [0, 64], sizes = [2, 32], strides = [1, 1]} : vector<2x128xf32> to vector<2x32xf32>
    %498 = math.tanh %497 : vector<2x32xf32>
    %499 = vector.extract_strided_slice %484 {offsets = [0, 96], sizes = [2, 32], strides = [1, 1]} : vector<2x128xf32> to vector<2x32xf32>
    %500 = arith.negf %499 : vector<2x32xf32>
    %501 = math.exp %500 : vector<2x32xf32>
    %cst_143 = arith.constant 1.000000e+00 : f32
    %502 = vector.broadcast %cst_143 : f32 to vector<2x32xf32>
    %503 = arith.addf %502, %501 : vector<2x32xf32>
    %504 = arith.divf %502, %503 : vector<2x32xf32>
    %505 = arith.mulf %496, %238 : vector<2x32xf32>
    %506 = arith.mulf %490, %498 : vector<2x32xf32>
    %507 = arith.addf %505, %506 : vector<2x32xf32>
    %508 = math.tanh %507 : vector<2x32xf32>
    %509 = arith.mulf %504, %508 : vector<2x32xf32>
    %c0_144 = arith.constant 0 : index
    %c0_145 = arith.constant 0 : index
    %510 = vector.load %arg17[%c0_144, %c0_145] : memref<16x32xf32, #tpu.memory_space<vmem>>, vector<2x32xf32>
    tpu.vector_store %arg17[%c0_144, %c0_145], %509 {strides = array<i32>} : memref<16x32xf32, #tpu.memory_space<vmem>>, vector<2x32xf32>,
    %c2_146 = arith.constant 2 : index
    %c0_147 = arith.constant 0 : index
    %511 = vector.load %arg18[%c2_146, %c0_147] : memref<16x128xf32, #tpu.memory_space<vmem>>, vector<2x128xf32>
    %cst_148 = arith.constant dense<0.000000e+00> : vector<2x128xf32>
    %512 = tpu.matmul %509, %475, %cst_148 {dimension_numbers = #tpu.dot_dimension_numbers<[1], [0], [0], [1], [0, 0, 1, 1], [], []>} : vector<2x32xf32>, vector<32x128xf32>, vector<2x128xf32> -> vector<2x128xf32>
    %513 = arith.addf %511, %512 : vector<2x128xf32>
    %514 = vector.extract_strided_slice %513 {offsets = [0, 0], sizes = [2, 32], strides = [1, 1]} : vector<2x128xf32> to vector<2x32xf32>
    %515 = arith.negf %514 : vector<2x32xf32>
    %516 = math.exp %515 : vector<2x32xf32>
    %cst_149 = arith.constant 1.000000e+00 : f32
    %517 = vector.broadcast %cst_149 : f32 to vector<2x32xf32>
    %518 = arith.addf %517, %516 : vector<2x32xf32>
    %519 = arith.divf %517, %518 : vector<2x32xf32>
    %520 = vector.extract_strided_slice %513 {offsets = [0, 32], sizes = [2, 32], strides = [1, 1]} : vector<2x128xf32> to vector<2x32xf32>
    %521 = arith.negf %520 : vector<2x32xf32>
    %522 = math.exp %521 : vector<2x32xf32>
    %cst_150 = arith.constant 1.000000e+00 : f32
    %523 = vector.broadcast %cst_150 : f32 to vector<2x32xf32>
    %524 = arith.addf %523, %522 : vector<2x32xf32>
    %525 = arith.divf %523, %524 : vector<2x32xf32>
    %526 = vector.extract_strided_slice %513 {offsets = [0, 64], sizes = [2, 32], strides = [1, 1]} : vector<2x128xf32> to vector<2x32xf32>
    %527 = math.tanh %526 : vector<2x32xf32>
    %528 = vector.extract_strided_slice %513 {offsets = [0, 96], sizes = [2, 32], strides = [1, 1]} : vector<2x128xf32> to vector<2x32xf32>
    %529 = arith.negf %528 : vector<2x32xf32>
    %530 = math.exp %529 : vector<2x32xf32>
    %cst_151 = arith.constant 1.000000e+00 : f32
    %531 = vector.broadcast %cst_151 : f32 to vector<2x32xf32>
    %532 = arith.addf %531, %530 : vector<2x32xf32>
    %533 = arith.divf %531, %532 : vector<2x32xf32>
    %534 = arith.mulf %525, %507 : vector<2x32xf32>
    %535 = arith.mulf %519, %527 : vector<2x32xf32>
    %536 = arith.addf %534, %535 : vector<2x32xf32>
    %537 = math.tanh %536 : vector<2x32xf32>
    %538 = arith.mulf %533, %537 : vector<2x32xf32>
    %c2_152 = arith.constant 2 : index
    %c0_153 = arith.constant 0 : index
    %539 = vector.load %arg17[%c2_152, %c0_153] : memref<16x32xf32, #tpu.memory_space<vmem>>, vector<2x32xf32>
    tpu.vector_store %arg17[%c2_152, %c0_153], %538 {strides = array<i32>} : memref<16x32xf32, #tpu.memory_space<vmem>>, vector<2x32xf32>,
    %c4_154 = arith.constant 4 : index
    %c0_155 = arith.constant 0 : index
    %540 = vector.load %arg18[%c4_154, %c0_155] : memref<16x128xf32, #tpu.memory_space<vmem>>, vector<2x128xf32>
    %cst_156 = arith.constant dense<0.000000e+00> : vector<2x128xf32>
    %541 = tpu.matmul %538, %475, %cst_156 {dimension_numbers = #tpu.dot_dimension_numbers<[1], [0], [0], [1], [0, 0, 1, 1], [], []>} : vector<2x32xf32>, vector<32x128xf32>, vector<2x128xf32> -> vector<2x128xf32>
    %542 = arith.addf %540, %541 : vector<2x128xf32>
    %543 = vector.extract_strided_slice %542 {offsets = [0, 0], sizes = [2, 32], strides = [1, 1]} : vector<2x128xf32> to vector<2x32xf32>
    %544 = arith.negf %543 : vector<2x32xf32>
    %545 = math.exp %544 : vector<2x32xf32>
    %cst_157 = arith.constant 1.000000e+00 : f32
    %546 = vector.broadcast %cst_157 : f32 to vector<2x32xf32>
    %547 = arith.addf %546, %545 : vector<2x32xf32>
    %548 = arith.divf %546, %547 : vector<2x32xf32>
    %549 = vector.extract_strided_slice %542 {offsets = [0, 32], sizes = [2, 32], strides = [1, 1]} : vector<2x128xf32> to vector<2x32xf32>
    %550 = arith.negf %549 : vector<2x32xf32>
    %551 = math.exp %550 : vector<2x32xf32>
    %cst_158 = arith.constant 1.000000e+00 : f32
    %552 = vector.broadcast %cst_158 : f32 to vector<2x32xf32>
    %553 = arith.addf %552, %551 : vector<2x32xf32>
    %554 = arith.divf %552, %553 : vector<2x32xf32>
    %555 = vector.extract_strided_slice %542 {offsets = [0, 64], sizes = [2, 32], strides = [1, 1]} : vector<2x128xf32> to vector<2x32xf32>
    %556 = math.tanh %555 : vector<2x32xf32>
    %557 = vector.extract_strided_slice %542 {offsets = [0, 96], sizes = [2, 32], strides = [1, 1]} : vector<2x128xf32> to vector<2x32xf32>
    %558 = arith.negf %557 : vector<2x32xf32>
    %559 = math.exp %558 : vector<2x32xf32>
    %cst_159 = arith.constant 1.000000e+00 : f32
    %560 = vector.broadcast %cst_159 : f32 to vector<2x32xf32>
    %561 = arith.addf %560, %559 : vector<2x32xf32>
    %562 = arith.divf %560, %561 : vector<2x32xf32>
    %563 = arith.mulf %554, %536 : vector<2x32xf32>
    %564 = arith.mulf %548, %556 : vector<2x32xf32>
    %565 = arith.addf %563, %564 : vector<2x32xf32>
    %566 = math.tanh %565 : vector<2x32xf32>
    %567 = arith.mulf %562, %566 : vector<2x32xf32>
    %c4_160 = arith.constant 4 : index
    %c0_161 = arith.constant 0 : index
    %568 = vector.load %arg17[%c4_160, %c0_161] : memref<16x32xf32, #tpu.memory_space<vmem>>, vector<2x32xf32>
    tpu.vector_store %arg17[%c4_160, %c0_161], %567 {strides = array<i32>} : memref<16x32xf32, #tpu.memory_space<vmem>>, vector<2x32xf32>,
    %c6_162 = arith.constant 6 : index
    %c0_163 = arith.constant 0 : index
    %569 = vector.load %arg18[%c6_162, %c0_163] : memref<16x128xf32, #tpu.memory_space<vmem>>, vector<2x128xf32>
    %cst_164 = arith.constant dense<0.000000e+00> : vector<2x128xf32>
    %570 = tpu.matmul %567, %475, %cst_164 {dimension_numbers = #tpu.dot_dimension_numbers<[1], [0], [0], [1], [0, 0, 1, 1], [], []>} : vector<2x32xf32>, vector<32x128xf32>, vector<2x128xf32> -> vector<2x128xf32>
    %571 = arith.addf %569, %570 : vector<2x128xf32>
    %572 = vector.extract_strided_slice %571 {offsets = [0, 0], sizes = [2, 32], strides = [1, 1]} : vector<2x128xf32> to vector<2x32xf32>
    %573 = arith.negf %572 : vector<2x32xf32>
    %574 = math.exp %573 : vector<2x32xf32>
    %cst_165 = arith.constant 1.000000e+00 : f32
    %575 = vector.broadcast %cst_165 : f32 to vector<2x32xf32>
    %576 = arith.addf %575, %574 : vector<2x32xf32>
    %577 = arith.divf %575, %576 : vector<2x32xf32>
    %578 = vector.extract_strided_slice %571 {offsets = [0, 32], sizes = [2, 32], strides = [1, 1]} : vector<2x128xf32> to vector<2x32xf32>
    %579 = arith.negf %578 : vector<2x32xf32>
    %580 = math.exp %579 : vector<2x32xf32>
    %cst_166 = arith.constant 1.000000e+00 : f32
    %581 = vector.broadcast %cst_166 : f32 to vector<2x32xf32>
    %582 = arith.addf %581, %580 : vector<2x32xf32>
    %583 = arith.divf %581, %582 : vector<2x32xf32>
    %584 = vector.extract_strided_slice %571 {offsets = [0, 64], sizes = [2, 32], strides = [1, 1]} : vector<2x128xf32> to vector<2x32xf32>
    %585 = math.tanh %584 : vector<2x32xf32>
    %586 = vector.extract_strided_slice %571 {offsets = [0, 96], sizes = [2, 32], strides = [1, 1]} : vector<2x128xf32> to vector<2x32xf32>
    %587 = arith.negf %586 : vector<2x32xf32>
    %588 = math.exp %587 : vector<2x32xf32>
    %cst_167 = arith.constant 1.000000e+00 : f32
    %589 = vector.broadcast %cst_167 : f32 to vector<2x32xf32>
    %590 = arith.addf %589, %588 : vector<2x32xf32>
    %591 = arith.divf %589, %590 : vector<2x32xf32>
    %592 = arith.mulf %583, %565 : vector<2x32xf32>
    %593 = arith.mulf %577, %585 : vector<2x32xf32>
    %594 = arith.addf %592, %593 : vector<2x32xf32>
    %595 = math.tanh %594 : vector<2x32xf32>
    %596 = arith.mulf %591, %595 : vector<2x32xf32>
    %c6_168 = arith.constant 6 : index
    %c0_169 = arith.constant 0 : index
    %597 = vector.load %arg17[%c6_168, %c0_169] : memref<16x32xf32, #tpu.memory_space<vmem>>, vector<2x32xf32>
    tpu.vector_store %arg17[%c6_168, %c0_169], %596 {strides = array<i32>} : memref<16x32xf32, #tpu.memory_space<vmem>>, vector<2x32xf32>,
    %c8_170 = arith.constant 8 : index
    %c0_171 = arith.constant 0 : index
    %598 = vector.load %arg18[%c8_170, %c0_171] : memref<16x128xf32, #tpu.memory_space<vmem>>, vector<2x128xf32>
    %cst_172 = arith.constant dense<0.000000e+00> : vector<2x128xf32>
    %599 = tpu.matmul %596, %475, %cst_172 {dimension_numbers = #tpu.dot_dimension_numbers<[1], [0], [0], [1], [0, 0, 1, 1], [], []>} : vector<2x32xf32>, vector<32x128xf32>, vector<2x128xf32> -> vector<2x128xf32>
    %600 = arith.addf %598, %599 : vector<2x128xf32>
    %601 = vector.extract_strided_slice %600 {offsets = [0, 0], sizes = [2, 32], strides = [1, 1]} : vector<2x128xf32> to vector<2x32xf32>
    %602 = arith.negf %601 : vector<2x32xf32>
    %603 = math.exp %602 : vector<2x32xf32>
    %cst_173 = arith.constant 1.000000e+00 : f32
    %604 = vector.broadcast %cst_173 : f32 to vector<2x32xf32>
    %605 = arith.addf %604, %603 : vector<2x32xf32>
    %606 = arith.divf %604, %605 : vector<2x32xf32>
    %607 = vector.extract_strided_slice %600 {offsets = [0, 32], sizes = [2, 32], strides = [1, 1]} : vector<2x128xf32> to vector<2x32xf32>
    %608 = arith.negf %607 : vector<2x32xf32>
    %609 = math.exp %608 : vector<2x32xf32>
    %cst_174 = arith.constant 1.000000e+00 : f32
    %610 = vector.broadcast %cst_174 : f32 to vector<2x32xf32>
    %611 = arith.addf %610, %609 : vector<2x32xf32>
    %612 = arith.divf %610, %611 : vector<2x32xf32>
    %613 = vector.extract_strided_slice %600 {offsets = [0, 64], sizes = [2, 32], strides = [1, 1]} : vector<2x128xf32> to vector<2x32xf32>
    %614 = math.tanh %613 : vector<2x32xf32>
    %615 = vector.extract_strided_slice %600 {offsets = [0, 96], sizes = [2, 32], strides = [1, 1]} : vector<2x128xf32> to vector<2x32xf32>
    %616 = arith.negf %615 : vector<2x32xf32>
    %617 = math.exp %616 : vector<2x32xf32>
    %cst_175 = arith.constant 1.000000e+00 : f32
    %618 = vector.broadcast %cst_175 : f32 to vector<2x32xf32>
    %619 = arith.addf %618, %617 : vector<2x32xf32>
    %620 = arith.divf %618, %619 : vector<2x32xf32>
    %621 = arith.mulf %612, %594 : vector<2x32xf32>
    %622 = arith.mulf %606, %614 : vector<2x32xf32>
    %623 = arith.addf %621, %622 : vector<2x32xf32>
    %624 = math.tanh %623 : vector<2x32xf32>
    %625 = arith.mulf %620, %624 : vector<2x32xf32>
    %c8_176 = arith.constant 8 : index
    %c0_177 = arith.constant 0 : index
    %626 = vector.load %arg17[%c8_176, %c0_177] : memref<16x32xf32, #tpu.memory_space<vmem>>, vector<2x32xf32>
    tpu.vector_store %arg17[%c8_176, %c0_177], %625 {strides = array<i32>} : memref<16x32xf32, #tpu.memory_space<vmem>>, vector<2x32xf32>,
    %c0_178 = arith.constant 0 : index
    %c0_179 = arith.constant 0 : index
    %627 = vector.load %arg17[%c0_178, %c0_179] : memref<16x32xf32, #tpu.memory_space<vmem>>, vector<10x32xf32>
    %c0_180 = arith.constant 0 : index
    %c0_181 = arith.constant 0 : index
    %628 = vector.load %arg12[%c0_180, %c0_181] : memref<32x128xf32, #tpu.memory_space<vmem>>, vector<32x128xf32>
    %c0_182 = arith.constant 0 : index
    %c0_183 = arith.constant 0 : index
    %629 = vector.load %arg11[%c0_182, %c0_183] : memref<32x128xf32, #tpu.memory_space<vmem>>, vector<32x128xf32>
    %cst_184 = arith.constant dense<0.000000e+00> : vector<10x128xf32>
    %630 = tpu.matmul %627, %629, %cst_184 {dimension_numbers = #tpu.dot_dimension_numbers<[1], [0], [0], [1], [0, 0, 1, 1], [], []>} : vector<10x32xf32>, vector<32x128xf32>, vector<10x128xf32> -> vector<10x128xf32>
    %c0_185 = arith.constant 0 : index
    %c0_186 = arith.constant 0 : index
    %631 = vector.load %arg13[%c0_185, %c0_186] : memref<1x128xf32, #tpu.memory_space<vmem>>, vector<1x128xf32>
    %632 = vector.broadcast %631 : vector<1x128xf32> to vector<10x128xf32>
    %633 = arith.addf %630, %632 : vector<10x128xf32>
    %c0_187 = arith.constant 0 : index
    %c0_188 = arith.constant 0 : index
    %634 = vector.load %arg18[%c0_187, %c0_188] : memref<16x128xf32, #tpu.memory_space<vmem>>, vector<10x128xf32>
    tpu.vector_store %arg18[%c0_187, %c0_188], %633 {strides = array<i32>} : memref<16x128xf32, #tpu.memory_space<vmem>>, vector<10x128xf32>,
    %c0_189 = arith.constant 0 : index
    %c0_190 = arith.constant 0 : index
    %635 = vector.load %arg18[%c0_189, %c0_190] : memref<16x128xf32, #tpu.memory_space<vmem>>, vector<2x128xf32>
    %cst_191 = arith.constant dense<0.000000e+00> : vector<2x128xf32>
    %636 = tpu.matmul %473, %628, %cst_191 {dimension_numbers = #tpu.dot_dimension_numbers<[1], [0], [0], [1], [0, 0, 1, 1], [], []>} : vector<2x32xf32>, vector<32x128xf32>, vector<2x128xf32> -> vector<2x128xf32>
    %637 = arith.addf %635, %636 : vector<2x128xf32>
    %638 = vector.extract_strided_slice %637 {offsets = [0, 0], sizes = [2, 32], strides = [1, 1]} : vector<2x128xf32> to vector<2x32xf32>
    %639 = arith.negf %638 : vector<2x32xf32>
    %640 = math.exp %639 : vector<2x32xf32>
    %cst_192 = arith.constant 1.000000e+00 : f32
    %641 = vector.broadcast %cst_192 : f32 to vector<2x32xf32>
    %642 = arith.addf %641, %640 : vector<2x32xf32>
    %643 = arith.divf %641, %642 : vector<2x32xf32>
    %644 = vector.extract_strided_slice %637 {offsets = [0, 32], sizes = [2, 32], strides = [1, 1]} : vector<2x128xf32> to vector<2x32xf32>
    %645 = arith.negf %644 : vector<2x32xf32>
    %646 = math.exp %645 : vector<2x32xf32>
    %cst_193 = arith.constant 1.000000e+00 : f32
    %647 = vector.broadcast %cst_193 : f32 to vector<2x32xf32>
    %648 = arith.addf %647, %646 : vector<2x32xf32>
    %649 = arith.divf %647, %648 : vector<2x32xf32>
    %650 = vector.extract_strided_slice %637 {offsets = [0, 64], sizes = [2, 32], strides = [1, 1]} : vector<2x128xf32> to vector<2x32xf32>
    %651 = math.tanh %650 : vector<2x32xf32>
    %652 = vector.extract_strided_slice %637 {offsets = [0, 96], sizes = [2, 32], strides = [1, 1]} : vector<2x128xf32> to vector<2x32xf32>
    %653 = arith.negf %652 : vector<2x32xf32>
    %654 = math.exp %653 : vector<2x32xf32>
    %cst_194 = arith.constant 1.000000e+00 : f32
    %655 = vector.broadcast %cst_194 : f32 to vector<2x32xf32>
    %656 = arith.addf %655, %654 : vector<2x32xf32>
    %657 = arith.divf %655, %656 : vector<2x32xf32>
    %658 = arith.mulf %649, %471 : vector<2x32xf32>
    %659 = arith.mulf %643, %651 : vector<2x32xf32>
    %660 = arith.addf %658, %659 : vector<2x32xf32>
    %661 = math.tanh %660 : vector<2x32xf32>
    %662 = arith.mulf %657, %661 : vector<2x32xf32>
    %c0_195 = arith.constant 0 : index
    %c0_196 = arith.constant 0 : index
    %663 = vector.load %arg17[%c0_195, %c0_196] : memref<16x32xf32, #tpu.memory_space<vmem>>, vector<2x32xf32>
    tpu.vector_store %arg17[%c0_195, %c0_196], %662 {strides = array<i32>} : memref<16x32xf32, #tpu.memory_space<vmem>>, vector<2x32xf32>,
    %c2_197 = arith.constant 2 : index
    %c0_198 = arith.constant 0 : index
    %664 = vector.load %arg18[%c2_197, %c0_198] : memref<16x128xf32, #tpu.memory_space<vmem>>, vector<2x128xf32>
    %cst_199 = arith.constant dense<0.000000e+00> : vector<2x128xf32>
    %665 = tpu.matmul %662, %628, %cst_199 {dimension_numbers = #tpu.dot_dimension_numbers<[1], [0], [0], [1], [0, 0, 1, 1], [], []>} : vector<2x32xf32>, vector<32x128xf32>, vector<2x128xf32> -> vector<2x128xf32>
    %666 = arith.addf %664, %665 : vector<2x128xf32>
    %667 = vector.extract_strided_slice %666 {offsets = [0, 0], sizes = [2, 32], strides = [1, 1]} : vector<2x128xf32> to vector<2x32xf32>
    %668 = arith.negf %667 : vector<2x32xf32>
    %669 = math.exp %668 : vector<2x32xf32>
    %cst_200 = arith.constant 1.000000e+00 : f32
    %670 = vector.broadcast %cst_200 : f32 to vector<2x32xf32>
    %671 = arith.addf %670, %669 : vector<2x32xf32>
    %672 = arith.divf %670, %671 : vector<2x32xf32>
    %673 = vector.extract_strided_slice %666 {offsets = [0, 32], sizes = [2, 32], strides = [1, 1]} : vector<2x128xf32> to vector<2x32xf32>
    %674 = arith.negf %673 : vector<2x32xf32>
    %675 = math.exp %674 : vector<2x32xf32>
    %cst_201 = arith.constant 1.000000e+00 : f32
    %676 = vector.broadcast %cst_201 : f32 to vector<2x32xf32>
    %677 = arith.addf %676, %675 : vector<2x32xf32>
    %678 = arith.divf %676, %677 : vector<2x32xf32>
    %679 = vector.extract_strided_slice %666 {offsets = [0, 64], sizes = [2, 32], strides = [1, 1]} : vector<2x128xf32> to vector<2x32xf32>
    %680 = math.tanh %679 : vector<2x32xf32>
    %681 = vector.extract_strided_slice %666 {offsets = [0, 96], sizes = [2, 32], strides = [1, 1]} : vector<2x128xf32> to vector<2x32xf32>
    %682 = arith.negf %681 : vector<2x32xf32>
    %683 = math.exp %682 : vector<2x32xf32>
    %cst_202 = arith.constant 1.000000e+00 : f32
    %684 = vector.broadcast %cst_202 : f32 to vector<2x32xf32>
    %685 = arith.addf %684, %683 : vector<2x32xf32>
    %686 = arith.divf %684, %685 : vector<2x32xf32>
    %687 = arith.mulf %678, %660 : vector<2x32xf32>
    %688 = arith.mulf %672, %680 : vector<2x32xf32>
    %689 = arith.addf %687, %688 : vector<2x32xf32>
    %690 = math.tanh %689 : vector<2x32xf32>
    %691 = arith.mulf %686, %690 : vector<2x32xf32>
    %c2_203 = arith.constant 2 : index
    %c0_204 = arith.constant 0 : index
    %692 = vector.load %arg17[%c2_203, %c0_204] : memref<16x32xf32, #tpu.memory_space<vmem>>, vector<2x32xf32>
    tpu.vector_store %arg17[%c2_203, %c0_204], %691 {strides = array<i32>} : memref<16x32xf32, #tpu.memory_space<vmem>>, vector<2x32xf32>,
    %c4_205 = arith.constant 4 : index
    %c0_206 = arith.constant 0 : index
    %693 = vector.load %arg18[%c4_205, %c0_206] : memref<16x128xf32, #tpu.memory_space<vmem>>, vector<2x128xf32>
    %cst_207 = arith.constant dense<0.000000e+00> : vector<2x128xf32>
    %694 = tpu.matmul %691, %628, %cst_207 {dimension_numbers = #tpu.dot_dimension_numbers<[1], [0], [0], [1], [0, 0, 1, 1], [], []>} : vector<2x32xf32>, vector<32x128xf32>, vector<2x128xf32> -> vector<2x128xf32>
    %695 = arith.addf %693, %694 : vector<2x128xf32>
    %696 = vector.extract_strided_slice %695 {offsets = [0, 0], sizes = [2, 32], strides = [1, 1]} : vector<2x128xf32> to vector<2x32xf32>
    %697 = arith.negf %696 : vector<2x32xf32>
    %698 = math.exp %697 : vector<2x32xf32>
    %cst_208 = arith.constant 1.000000e+00 : f32
    %699 = vector.broadcast %cst_208 : f32 to vector<2x32xf32>
    %700 = arith.addf %699, %698 : vector<2x32xf32>
    %701 = arith.divf %699, %700 : vector<2x32xf32>
    %702 = vector.extract_strided_slice %695 {offsets = [0, 32], sizes = [2, 32], strides = [1, 1]} : vector<2x128xf32> to vector<2x32xf32>
    %703 = arith.negf %702 : vector<2x32xf32>
    %704 = math.exp %703 : vector<2x32xf32>
    %cst_209 = arith.constant 1.000000e+00 : f32
    %705 = vector.broadcast %cst_209 : f32 to vector<2x32xf32>
    %706 = arith.addf %705, %704 : vector<2x32xf32>
    %707 = arith.divf %705, %706 : vector<2x32xf32>
    %708 = vector.extract_strided_slice %695 {offsets = [0, 64], sizes = [2, 32], strides = [1, 1]} : vector<2x128xf32> to vector<2x32xf32>
    %709 = math.tanh %708 : vector<2x32xf32>
    %710 = vector.extract_strided_slice %695 {offsets = [0, 96], sizes = [2, 32], strides = [1, 1]} : vector<2x128xf32> to vector<2x32xf32>
    %711 = arith.negf %710 : vector<2x32xf32>
    %712 = math.exp %711 : vector<2x32xf32>
    %cst_210 = arith.constant 1.000000e+00 : f32
    %713 = vector.broadcast %cst_210 : f32 to vector<2x32xf32>
    %714 = arith.addf %713, %712 : vector<2x32xf32>
    %715 = arith.divf %713, %714 : vector<2x32xf32>
    %716 = arith.mulf %707, %689 : vector<2x32xf32>
    %717 = arith.mulf %701, %709 : vector<2x32xf32>
    %718 = arith.addf %716, %717 : vector<2x32xf32>
    %719 = math.tanh %718 : vector<2x32xf32>
    %720 = arith.mulf %715, %719 : vector<2x32xf32>
    %c4_211 = arith.constant 4 : index
    %c0_212 = arith.constant 0 : index
    %721 = vector.load %arg17[%c4_211, %c0_212] : memref<16x32xf32, #tpu.memory_space<vmem>>, vector<2x32xf32>
    tpu.vector_store %arg17[%c4_211, %c0_212], %720 {strides = array<i32>} : memref<16x32xf32, #tpu.memory_space<vmem>>, vector<2x32xf32>,
    %c6_213 = arith.constant 6 : index
    %c0_214 = arith.constant 0 : index
    %722 = vector.load %arg18[%c6_213, %c0_214] : memref<16x128xf32, #tpu.memory_space<vmem>>, vector<2x128xf32>
    %cst_215 = arith.constant dense<0.000000e+00> : vector<2x128xf32>
    %723 = tpu.matmul %720, %628, %cst_215 {dimension_numbers = #tpu.dot_dimension_numbers<[1], [0], [0], [1], [0, 0, 1, 1], [], []>} : vector<2x32xf32>, vector<32x128xf32>, vector<2x128xf32> -> vector<2x128xf32>
    %724 = arith.addf %722, %723 : vector<2x128xf32>
    %725 = vector.extract_strided_slice %724 {offsets = [0, 0], sizes = [2, 32], strides = [1, 1]} : vector<2x128xf32> to vector<2x32xf32>
    %726 = arith.negf %725 : vector<2x32xf32>
    %727 = math.exp %726 : vector<2x32xf32>
    %cst_216 = arith.constant 1.000000e+00 : f32
    %728 = vector.broadcast %cst_216 : f32 to vector<2x32xf32>
    %729 = arith.addf %728, %727 : vector<2x32xf32>
    %730 = arith.divf %728, %729 : vector<2x32xf32>
    %731 = vector.extract_strided_slice %724 {offsets = [0, 32], sizes = [2, 32], strides = [1, 1]} : vector<2x128xf32> to vector<2x32xf32>
    %732 = arith.negf %731 : vector<2x32xf32>
    %733 = math.exp %732 : vector<2x32xf32>
    %cst_217 = arith.constant 1.000000e+00 : f32
    %734 = vector.broadcast %cst_217 : f32 to vector<2x32xf32>
    %735 = arith.addf %734, %733 : vector<2x32xf32>
    %736 = arith.divf %734, %735 : vector<2x32xf32>
    %737 = vector.extract_strided_slice %724 {offsets = [0, 64], sizes = [2, 32], strides = [1, 1]} : vector<2x128xf32> to vector<2x32xf32>
    %738 = math.tanh %737 : vector<2x32xf32>
    %739 = vector.extract_strided_slice %724 {offsets = [0, 96], sizes = [2, 32], strides = [1, 1]} : vector<2x128xf32> to vector<2x32xf32>
    %740 = arith.negf %739 : vector<2x32xf32>
    %741 = math.exp %740 : vector<2x32xf32>
    %cst_218 = arith.constant 1.000000e+00 : f32
    %742 = vector.broadcast %cst_218 : f32 to vector<2x32xf32>
    %743 = arith.addf %742, %741 : vector<2x32xf32>
    %744 = arith.divf %742, %743 : vector<2x32xf32>
    %745 = arith.mulf %736, %718 : vector<2x32xf32>
    %746 = arith.mulf %730, %738 : vector<2x32xf32>
    %747 = arith.addf %745, %746 : vector<2x32xf32>
    %748 = math.tanh %747 : vector<2x32xf32>
    %749 = arith.mulf %744, %748 : vector<2x32xf32>
    %c6_219 = arith.constant 6 : index
    %c0_220 = arith.constant 0 : index
    %750 = vector.load %arg17[%c6_219, %c0_220] : memref<16x32xf32, #tpu.memory_space<vmem>>, vector<2x32xf32>
    tpu.vector_store %arg17[%c6_219, %c0_220], %749 {strides = array<i32>} : memref<16x32xf32, #tpu.memory_space<vmem>>, vector<2x32xf32>,
    %c8_221 = arith.constant 8 : index
    %c0_222 = arith.constant 0 : index
    %751 = vector.load %arg18[%c8_221, %c0_222] : memref<16x128xf32, #tpu.memory_space<vmem>>, vector<2x128xf32>
    %cst_223 = arith.constant dense<0.000000e+00> : vector<2x128xf32>
    %752 = tpu.matmul %749, %628, %cst_223 {dimension_numbers = #tpu.dot_dimension_numbers<[1], [0], [0], [1], [0, 0, 1, 1], [], []>} : vector<2x32xf32>, vector<32x128xf32>, vector<2x128xf32> -> vector<2x128xf32>
    %753 = arith.addf %751, %752 : vector<2x128xf32>
    %754 = vector.extract_strided_slice %753 {offsets = [0, 0], sizes = [2, 32], strides = [1, 1]} : vector<2x128xf32> to vector<2x32xf32>
    %755 = arith.negf %754 : vector<2x32xf32>
    %756 = math.exp %755 : vector<2x32xf32>
    %cst_224 = arith.constant 1.000000e+00 : f32
    %757 = vector.broadcast %cst_224 : f32 to vector<2x32xf32>
    %758 = arith.addf %757, %756 : vector<2x32xf32>
    %759 = arith.divf %757, %758 : vector<2x32xf32>
    %760 = vector.extract_strided_slice %753 {offsets = [0, 32], sizes = [2, 32], strides = [1, 1]} : vector<2x128xf32> to vector<2x32xf32>
    %761 = arith.negf %760 : vector<2x32xf32>
    %762 = math.exp %761 : vector<2x32xf32>
    %cst_225 = arith.constant 1.000000e+00 : f32
    %763 = vector.broadcast %cst_225 : f32 to vector<2x32xf32>
    %764 = arith.addf %763, %762 : vector<2x32xf32>
    %765 = arith.divf %763, %764 : vector<2x32xf32>
    %766 = vector.extract_strided_slice %753 {offsets = [0, 64], sizes = [2, 32], strides = [1, 1]} : vector<2x128xf32> to vector<2x32xf32>
    %767 = math.tanh %766 : vector<2x32xf32>
    %768 = vector.extract_strided_slice %753 {offsets = [0, 96], sizes = [2, 32], strides = [1, 1]} : vector<2x128xf32> to vector<2x32xf32>
    %769 = arith.negf %768 : vector<2x32xf32>
    %770 = math.exp %769 : vector<2x32xf32>
    %cst_226 = arith.constant 1.000000e+00 : f32
    %771 = vector.broadcast %cst_226 : f32 to vector<2x32xf32>
    %772 = arith.addf %771, %770 : vector<2x32xf32>
    %773 = arith.divf %771, %772 : vector<2x32xf32>
    %774 = arith.mulf %765, %747 : vector<2x32xf32>
    %775 = arith.mulf %759, %767 : vector<2x32xf32>
    %776 = arith.addf %774, %775 : vector<2x32xf32>
    %777 = math.tanh %776 : vector<2x32xf32>
    %778 = arith.mulf %773, %777 : vector<2x32xf32>
    %c8_227 = arith.constant 8 : index
    %c0_228 = arith.constant 0 : index
    %779 = vector.load %arg17[%c8_227, %c0_228] : memref<16x32xf32, #tpu.memory_space<vmem>>, vector<2x32xf32>
    tpu.vector_store %arg17[%c8_227, %c0_228], %778 {strides = array<i32>} : memref<16x32xf32, #tpu.memory_space<vmem>>, vector<2x32xf32>,
    %c0_229 = arith.constant 0 : index
    %c0_230 = arith.constant 0 : index
    %780 = vector.load %arg17[%c0_229, %c0_230] : memref<16x32xf32, #tpu.memory_space<vmem>>, vector<10x32xf32>
    %c0_231 = arith.constant 0 : index
    %c0_232 = arith.constant 0 : index
    %781 = vector.load %arg14[%c0_231, %c0_232] : memref<32x8xf32, #tpu.memory_space<vmem>>, vector<32x8xf32>
    %cst_233 = arith.constant dense<0.000000e+00> : vector<10x8xf32>
    %782 = tpu.matmul %780, %781, %cst_233 {dimension_numbers = #tpu.dot_dimension_numbers<[1], [0], [0], [1], [0, 0, 1, 1], [], []>} : vector<10x32xf32>, vector<32x8xf32>, vector<10x8xf32> -> vector<10x8xf32>
    %c0_234 = arith.constant 0 : index
    %c0_235 = arith.constant 0 : index
    %783 = vector.load %arg15[%c0_234, %c0_235] : memref<1x8xf32, #tpu.memory_space<vmem>>, vector<1x8xf32>
    %784 = vector.broadcast %783 : vector<1x8xf32> to vector<10x8xf32>
    %785 = arith.addf %782, %784 : vector<10x8xf32>
    %c0_236 = arith.constant 0 : index
    %c0_237 = arith.constant 0 : index
    %786 = vector.load %arg16[%c0_236, %c0_237] : memref<10x8xf32, #tpu.memory_space<vmem>>, vector<10x8xf32>
    tpu.vector_store %arg16[%c0_236, %c0_237], %785 {strides = array<i32>} : memref<10x8xf32, #tpu.memory_space<vmem>>, vector<10x8xf32>,
    return
  }
}

</mosaic_0001>

<llo_original>
// kernel: tpu_custom_call.1
$region0: #{tpu_custom_call.1}
  #allocation0 [shape = 'u32[]', space=smem, size = 0x4, offset = 0x4, fixed_abs, tag = 'smem constant byte address 0x4 - core index']
  #allocation1 [shape = 'u32[144,128]{1,0:T(1,128)}', space=vmem, size = 0x12000, scoped, tag = 'internal scratch']
  #allocation2 [shape = 'f32[16,32]{1,0:T(8,128)}', space=vmem, size = 0x2000, scoped, tag = 'scratch operand']
  #allocation3 [shape = 'f32[16,128]{1,0:T(8,128)}', space=vmem, size = 0x2000, scoped, tag = 'scratch operand']
  %s0 = inlined_call_operand.vmem [shape: f32[16,8], index: 0, kind: input, shape index: {}]
  %s1 = inlined_call_operand.vmem [shape: f32[10,8], index: 1, kind: input, shape index: {}]
  %s2 = inlined_call_operand.hbm [shape: f32[8,128], index: 2, kind: input, shape index: {}]
  %s3 = inlined_call_operand.vmem [shape: f32[32,128], index: 3, kind: input, shape index: {}]
  %s4 = inlined_call_operand.hbm [shape: f32[1,128], index: 4, kind: input, shape index: {}]
  %s5 = inlined_call_operand.vmem [shape: f32[32,128], index: 5, kind: input, shape index: {}]
  %s6 = inlined_call_operand.vmem [shape: f32[32,128], index: 6, kind: input, shape index: {}]
  %s7 = inlined_call_operand.hbm [shape: f32[1,128], index: 7, kind: input, shape index: {}]
  %s8 = inlined_call_operand.hbm [shape: f32[8,128], index: 8, kind: input, shape index: {}]
  %s9 = inlined_call_operand.hbm [shape: f32[32,128], index: 9, kind: input, shape index: {}]
  %s10 = inlined_call_operand.vmem [shape: f32[1,128], index: 10, kind: input, shape index: {}]
  %s11 = inlined_call_operand.hbm [shape: f32[32,128], index: 11, kind: input, shape index: {}]
  %s12 = inlined_call_operand.hbm [shape: f32[32,128], index: 12, kind: input, shape index: {}]
  %s13 = inlined_call_operand.vmem [shape: f32[1,128], index: 13, kind: input, shape index: {}]
  %s14 = inlined_call_operand.vmem [shape: f32[32,8], index: 14, kind: input, shape index: {}]
  %s15 = inlined_call_operand.vmem [shape: f32[1,8], index: 15, kind: input, shape index: {}]
  %s16 = inlined_call_operand.vmem [shape: f32[10,8], index: 16, kind: output, shape index: {}]
  %s17 = sld [smem:[#allocation0]]
  $region102: #{tpu_custom_call.1} parent=0
    _
  %s19 = ssub.s32 1, %s17
  %s20 = scalar_select 0, %s19, %s17
  $region1: #{tpu_custom_call.1} parent=0
    #allocation4 [shape = 'u8[4096]{0}', space=vmem, size = 0x1000, scoped, tag = 'input window, operand 2, single buffered']
    #allocation5 [shape = 's32[1]{0}', space=sflag, size = 0x4, scoped, tag = 'scoped memory for tpu_custom_call.1']
    #allocation6 [shape = 'u8[512]{0}', space=vmem, size = 0x400, scoped, tag = 'input window, operand 4, single buffered']
    #allocation7 [shape = 's32[1]{0}', space=sflag, size = 0x4, scoped, tag = 'scoped memory for tpu_custom_call.1']
    #allocation8 [shape = 'u8[512]{0}', space=vmem, size = 0x400, scoped, tag = 'input window, operand 7, single buffered']
    #allocation9 [shape = 'u8[4096]{0}', space=vmem, size = 0x1000, scoped, tag = 'input window, operand 8, single buffered']
    #allocation10 [shape = 's32[1]{0}', space=sflag, size = 0x4, scoped, tag = 'scoped memory for tpu_custom_call.1']
    #allocation11 [shape = 'u8[16384]{0}', space=vmem, size = 0x4000, scoped, tag = 'input window, operand 9, single buffered']
    #allocation12 [shape = 'u8[16384]{0}', space=vmem, size = 0x4000, scoped, tag = 'input window, operand 11, single buffered']
    #allocation13 [shape = 's32[1]{0}', space=sflag, size = 0x4, scoped, tag = 'scoped memory for tpu_custom_call.1']
    #allocation14 [shape = 'u8[16384]{0}', space=vmem, size = 0x4000, scoped, tag = 'input window, operand 12, single buffered']
    %21 = vsyncpa [#allocation5], 0
    %22 = vsyncpa [#allocation7], 0
    %23 = vsyncpa [#allocation10], 0
    %24 = vsyncpa [#allocation13], 0
    // Predicated region
    $region2: #{tpu_custom_call.1} parent=1 // pred_check
      _
    $region3: #{tpu_custom_call.1} parent=1 // pred_check_branch
      %26 = sbr.rel (0) target = $region5
    $region4: #{tpu_custom_call.1} parent=1 // pred_region
      _
    $region5: #{tpu_custom_call.1} parent=1 // pred_fallthru
      _
    // Predicated region
    $region6: #{tpu_custom_call.1} parent=1 // pred_check
      _
    $region7: #{tpu_custom_call.1} parent=1 // pred_check_branch
      %28 = sbr.rel (0) target = $region9
    $region8: #{tpu_custom_call.1} parent=1 // pred_region
      _
    $region9: #{tpu_custom_call.1} parent=1 // pred_fallthru
      _
    // Predicated region
    $region10: #{tpu_custom_call.1} parent=1 // pred_check
      _
    $region11: #{tpu_custom_call.1} parent=1 // pred_check_branch
      %30 = sbr.rel (0) target = $region13
    $region12: #{tpu_custom_call.1} parent=1 // pred_region
      %s32 = ssub.s32 128, 128
      %33 = vsyncadd [#allocation5], %s32
      %s35 = sshll.u32 [#allocation4], 4
      %s36 = int_to_ptr.vmem [resolvable:$true] %s35
      %38 = dma.hbm_to_vmem [thread:$0]  %s2, 128, %s36, [#allocation5]
    $region13: #{tpu_custom_call.1} parent=1 // pred_fallthru
      _
    // Predicated region
    $region14: #{tpu_custom_call.1} parent=1 // pred_check
      _
    $region15: #{tpu_custom_call.1} parent=1 // pred_check_branch
      %40 = sbr.rel (0) target = $region17
    $region16: #{tpu_custom_call.1} parent=1 // pred_region
      _
    $region17: #{tpu_custom_call.1} parent=1 // pred_fallthru
      _
    // Predicated region
    $region18: #{tpu_custom_call.1} parent=1 // pred_check
      _
    $region19: #{tpu_custom_call.1} parent=1 // pred_check_branch
      %42 = sbr.rel (0) target = $region21
    $region20: #{tpu_custom_call.1} parent=1 // pred_region
      %s44 = ssub.s32 16, 16
      %45 = vsyncadd [#allocation7], %s44
      %s47 = sshll.u32 [#allocation6], 4
      %s48 = int_to_ptr.vmem [resolvable:$true] %s47
      %50 = dma.hbm_to_vmem [thread:$0]  %s4, 16, %s48, [#allocation7]
    $region21: #{tpu_custom_call.1} parent=1 // pred_fallthru
      _
    // Predicated region
    $region22: #{tpu_custom_call.1} parent=1 // pred_check
      _
    $region23: #{tpu_custom_call.1} parent=1 // pred_check_branch
      %52 = sbr.rel (0) target = $region25
    $region24: #{tpu_custom_call.1} parent=1 // pred_region
      _
    $region25: #{tpu_custom_call.1} parent=1 // pred_fallthru
      _
    // Predicated region
    $region26: #{tpu_custom_call.1} parent=1 // pred_check
      _
    $region27: #{tpu_custom_call.1} parent=1 // pred_check_branch
      %54 = sbr.rel (0) target = $region29
    $region28: #{tpu_custom_call.1} parent=1 // pred_region
      _
    $region29: #{tpu_custom_call.1} parent=1 // pred_fallthru
      _
    // Predicated region
    $region30: #{tpu_custom_call.1} parent=1 // pred_check
      _
    $region31: #{tpu_custom_call.1} parent=1 // pred_check_branch
      %56 = sbr.rel (0) target = $region33
    $region32: #{tpu_custom_call.1} parent=1 // pred_region
      %s58 = ssub.s32 16, 16
      %59 = vsyncadd [#allocation7], %s58
      %s61 = sshll.u32 [#allocation8], 4
      %s62 = int_to_ptr.vmem [resolvable:$true] %s61
      %64 = dma.hbm_to_vmem [thread:$0]  %s7, 16, %s62, [#allocation7]
    $region33: #{tpu_custom_call.1} parent=1 // pred_fallthru
      _
    // Predicated region
    $region34: #{tpu_custom_call.1} parent=1 // pred_check
      _
    $region35: #{tpu_custom_call.1} parent=1 // pred_check_branch
      %66 = sbr.rel (0) target = $region37
    $region36: #{tpu_custom_call.1} parent=1 // pred_region
      %s68 = ssub.s32 128, 128
      %69 = vsyncadd [#allocation10], %s68
      %s71 = sshll.u32 [#allocation9], 4
      %s72 = int_to_ptr.vmem [resolvable:$true] %s71
      %74 = dma.hbm_to_vmem [thread:$0]  %s8, 128, %s72, [#allocation10]
    $region37: #{tpu_custom_call.1} parent=1 // pred_fallthru
      _
    // Predicated region
    $region38: #{tpu_custom_call.1} parent=1 // pred_check
      _
    $region39: #{tpu_custom_call.1} parent=1 // pred_check_branch
      %76 = sbr.rel (0) target = $region41
    $region40: #{tpu_custom_call.1} parent=1 // pred_region
      %s78 = ssub.s32 512, 512
      %79 = vsyncadd [#allocation10], %s78
      %s80 = sshll.u32 [#allocation11], 4
      %s81 = int_to_ptr.vmem [resolvable:$true] %s80
      %86 = dma.hbm_to_vmem [thread:$0]  %s9, 512, %s81, [#allocation10], 128, 128, 8
    $region41: #{tpu_custom_call.1} parent=1 // pred_fallthru
      _
    // Predicated region
    $region42: #{tpu_custom_call.1} parent=1 // pred_check
      _
    $region43: #{tpu_custom_call.1} parent=1 // pred_check_branch
      %88 = sbr.rel (0) target = $region45
    $region44: #{tpu_custom_call.1} parent=1 // pred_region
      _
    $region45: #{tpu_custom_call.1} parent=1 // pred_fallthru
      _
    // Predicated region
    $region46: #{tpu_custom_call.1} parent=1 // pred_check
      _
    $region47: #{tpu_custom_call.1} parent=1 // pred_check_branch
      %90 = sbr.rel (0) target = $region49
    $region48: #{tpu_custom_call.1} parent=1 // pred_region
      %s92 = ssub.s32 512, 512
      %93 = vsyncadd [#allocation13], %s92
      %s94 = sshll.u32 [#allocation12], 4
      %s95 = int_to_ptr.vmem [resolvable:$true] %s94
      %100 = dma.hbm_to_vmem [thread:$0]  %s11, 512, %s95, [#allocation13], 128, 128, 8
    $region49: #{tpu_custom_call.1} parent=1 // pred_fallthru
      _
    // Predicated region
    $region50: #{tpu_custom_call.1} parent=1 // pred_check
      _
    $region51: #{tpu_custom_call.1} parent=1 // pred_check_branch
      %102 = sbr.rel (0) target = $region53
    $region52: #{tpu_custom_call.1} parent=1 // pred_region
      %s104 = ssub.s32 512, 512
      %105 = vsyncadd [#allocation13], %s104
      %s106 = sshll.u32 [#allocation14], 4
      %s107 = int_to_ptr.vmem [resolvable:$true] %s106
      %112 = dma.hbm_to_vmem [thread:$0]  %s12, 512, %s107, [#allocation13], 128, 128, 8
    $region53: #{tpu_custom_call.1} parent=1 // pred_fallthru
      _
    // Predicated region
    $region54: #{tpu_custom_call.1} parent=1 // pred_check
      _
    $region55: #{tpu_custom_call.1} parent=1 // pred_check_branch
      %114 = sbr.rel (0) target = $region57
    $region56: #{tpu_custom_call.1} parent=1 // pred_region
      _
    $region57: #{tpu_custom_call.1} parent=1 // pred_fallthru
      _
    // Predicated region
    $region58: #{tpu_custom_call.1} parent=1 // pred_check
      _
    $region59: #{tpu_custom_call.1} parent=1 // pred_check_branch
      %116 = sbr.rel (0) target = $region61
    $region60: #{tpu_custom_call.1} parent=1 // pred_region
      _
    $region61: #{tpu_custom_call.1} parent=1 // pred_fallthru
      _
    // Predicated region
    $region62: #{tpu_custom_call.1} parent=1 // pred_check
      _
    $region63: #{tpu_custom_call.1} parent=1 // pred_check_branch
      %118 = sbr.rel (0) target = $region65
    $region64: #{tpu_custom_call.1} parent=1 // pred_region
      _
    $region65: #{tpu_custom_call.1} parent=1 // pred_fallthru
      _
    // Predicated region
    $region66: #{tpu_custom_call.1} parent=1 // pred_check
      _
    $region67: #{tpu_custom_call.1} parent=1 // pred_check_branch
      %120 = sbr.rel (0) target = $region69
    $region68: #{tpu_custom_call.1} parent=1 // pred_region
      %121 = dma.done [#allocation5], 128
    $region69: #{tpu_custom_call.1} parent=1 // pred_fallthru
      _
    // Predicated region
    $region70: #{tpu_custom_call.1} parent=1 // pred_check
      _
    $region71: #{tpu_custom_call.1} parent=1 // pred_check_branch
      %123 = sbr.rel (0) target = $region73
    $region72: #{tpu_custom_call.1} parent=1 // pred_region
      %124 = dma.done [#allocation7], 16
    $region73: #{tpu_custom_call.1} parent=1 // pred_fallthru
      _
    // Predicated region
    $region74: #{tpu_custom_call.1} parent=1 // pred_check
      _
    $region75: #{tpu_custom_call.1} parent=1 // pred_check_branch
      %126 = sbr.rel (0) target = $region77
    $region76: #{tpu_custom_call.1} parent=1 // pred_region
      %127 = dma.done [#allocation7], 16
    $region77: #{tpu_custom_call.1} parent=1 // pred_fallthru
      _
    // Predicated region
    $region78: #{tpu_custom_call.1} parent=1 // pred_check
      _
    $region79: #{tpu_custom_call.1} parent=1 // pred_check_branch
      %129 = sbr.rel (0) target = $region81
    $region80: #{tpu_custom_call.1} parent=1 // pred_region
      %130 = dma.done [#allocation10], 128
    $region81: #{tpu_custom_call.1} parent=1 // pred_fallthru
      _
    // Predicated region
    $region82: #{tpu_custom_call.1} parent=1 // pred_check
      _
    $region83: #{tpu_custom_call.1} parent=1 // pred_check_branch
      %132 = sbr.rel (0) target = $region85
    $region84: #{tpu_custom_call.1} parent=1 // pred_region
      %133 = dma.done [#allocation10], 512
    $region85: #{tpu_custom_call.1} parent=1 // pred_fallthru
      _
    // Predicated region
    $region86: #{tpu_custom_call.1} parent=1 // pred_check
      _
    $region87: #{tpu_custom_call.1} parent=1 // pred_check_branch
      %135 = sbr.rel (0) target = $region89
    $region88: #{tpu_custom_call.1} parent=1 // pred_region
      %136 = dma.done [#allocation13], 512
    $region89: #{tpu_custom_call.1} parent=1 // pred_fallthru
      _
    // Predicated region
    $region90: #{tpu_custom_call.1} parent=1 // pred_check
      _
    $region91: #{tpu_custom_call.1} parent=1 // pred_check_branch
      %138 = sbr.rel (0) target = $region93
    $region92: #{tpu_custom_call.1} parent=1 // pred_region
      %139 = dma.done [#allocation13], 512
    $region93: #{tpu_custom_call.1} parent=1 // pred_fallthru
      _
    %v140 = vld [vmem:[%s0] sm:$0xff]
    %v141 = vld [vmem:[%s0 + $0x8] sm:$0xff]
    %v142 = vld [vmem:[%s3] sm:$0xff]
    %v143 = vld [vmem:[%s3 + $0x8] sm:$0xff]
    %v144 = vld [vmem:[%s3 + $0x10] sm:$0xff]
    %v145 = vld [vmem:[%s3 + $0x18] sm:$0xff]
    %v146 = vld [vmem:[#allocation4] sm:$0xff]
    %v147 = vld [vmem:[#allocation6] sm:$0x1]
    %v149 = vlaneseq
    %v150 = vshrl.u32 %v149, 7
    %v151 = vsub.s32 0, %v150
    %v152 = vrot.slane %v147, %v151
    %vm154 = vcmask 64512
    %v156 = vsel %vm154, %v140, 0
    %v159 = vsel %vm154, %v141, 0
    %161 = vmatprep.subr.mxu0 0.0
    %162 = vmatpush1.msra.mxu0 0.0
    %163 = vmatprep.subr.mxu0 0.0
    %164 = vmatpush1.msra.mxu0 0.0
    %165 = vmatprep.subr.mxu0 0.0
    %166 = vmatpush1.msra.mxu0 0.0
    %167 = vmatprep.subr.mxu0 0.0
    %168 = vmatpush1.msra.mxu0 0.0
    %169 = vmatprep.subr.mxu0 0.0
    %170 = vmatpush1.msra.mxu0 0.0
    %171 = vmatprep.subr.mxu0 0.0
    %172 = vmatpush1.msra.mxu0 0.0
    %173 = vmatprep.subr.mxu0 0.0
    %174 = vmatpush1.msra.mxu0 0.0
    %175 = vmatprep.subr.mxu0 0.0
    %176 = vmatpush1.msra.mxu0 0.0
    %177 = vmatprep.subr.mxu0 0.0
    %178 = vmatpush1.msra.mxu0 0.0
    %179 = vmatprep.subr.mxu0 0.0
    %180 = vmatpush1.msra.mxu0 0.0
    %181 = vmatprep.subr.mxu0 0.0
    %182 = vmatpush1.msra.mxu0 0.0
    %183 = vmatprep.subr.mxu0 0.0
    %184 = vmatpush1.msra.mxu0 0.0
    %185 = vmatprep.subr.mxu0 0.0
    %186 = vmatpush1.msra.mxu0 0.0
    %187 = vmatprep.subr.mxu0 0.0
    %188 = vmatpush1.msra.mxu0 0.0
    %189 = vmatprep.subr.mxu0 0.0
    %190 = vmatpush1.msra.mxu0 0.0
    %191 = vmatprep.subr.mxu0 0.0
    %192 = vmatpush1.msra.mxu0 %v146
    %193 = vmatprep.subr.mxu0 0.0
    %194 = vmatpush2.msra.mxu0 0.0
    %195 = vmatprep.subr.mxu0 0.0
    %196 = vmatpush2.msra.mxu0 0.0
    %197 = vmatprep.subr.mxu0 0.0
    %198 = vmatpush2.msra.mxu0 0.0
    %199 = vmatprep.subr.mxu0 0.0
    %200 = vmatpush2.msra.mxu0 0.0
    %201 = vmatprep.subr.mxu0 0.0
    %202 = vmatpush2.msra.mxu0 0.0
    %203 = vmatprep.subr.mxu0 0.0
    %204 = vmatpush2.msra.mxu0 0.0
    %205 = vmatprep.subr.mxu0 0.0
    %206 = vmatpush2.msra.mxu0 0.0
    %207 = vmatprep.subr.mxu0 0.0
    %208 = vmatpush2.msra.mxu0 0.0
    %209 = vmatprep.subr.mxu0 0.0
    %210 = vmatpush2.msra.mxu0 0.0
    %211 = vmatprep.subr.mxu0 0.0
    %212 = vmatpush2.msra.mxu0 0.0
    %213 = vmatprep.subr.mxu0 0.0
    %214 = vmatpush2.msra.mxu0 0.0
    %215 = vmatprep.subr.mxu0 0.0
    %216 = vmatpush2.msra.mxu0 0.0
    %217 = vmatprep.subr.mxu0 0.0
    %218 = vmatpush2.msra.mxu0 0.0
    %219 = vmatprep.subr.mxu0 0.0
    %220 = vmatpush2.msra.mxu0 0.0
    %221 = vmatprep.subr.mxu0 0.0
    %222 = vmatpush2.msra.mxu0 0.0
    %223 = vmatprep.subr.mxu0 0.0
    %224 = vmatpush2.msra.mxu0 0.0
    %225 = vmatprep.mubr.f32.mxu0 0.0
    %226 = vmatmul.mubr.f32.gmra.mxu0 %v156
    %v227 = vpop.f32.mrf.mxu0
    %v228 = vadd.f32 %v152, %v227
    %v229 = vpop.f32.mrf.mxu0
    %230 = vmatprep.mubr.f32.mxu0 0.0
    %231 = vmatmul.mubr.f32.gmra.mxu0 %v159
    %v232 = vpop.f32.mrf.mxu0
    %v233 = vadd.f32 %v152, %v232
    %v234 = vpop.f32.mrf.mxu0
    %235 = vdwg.mxu0
    %236 = vst [vmem:[#allocation3] sm:$0xff] %v228
    %237 = vst [vmem:[#allocation3 + $0x8] sm:$0xff] %v233
    %v238 = vld [vmem:[#allocation3] sm:$0x3]
    %vm239 = vcmask 261120
    %v241 = vsel %vm239, 0.0, 0
    %243 = vmatprep.subr.mxu0 0.0
    %244 = vmatpush1.msra.mxu0 0.0
    %245 = vmatprep.subr.mxu0 0.0
    %246 = vmatpush1.msra.mxu0 0.0
    %247 = vmatprep.subr.mxu0 0.0
    %248 = vmatpush1.msra.mxu0 0.0
    %249 = vmatprep.subr.mxu0 0.0
    %250 = vmatpush1.msra.mxu0 0.0
    %251 = vmatprep.subr.mxu0 0.0
    %252 = vmatpush1.msra.mxu0 0.0
    %253 = vmatprep.subr.mxu0 0.0
    %254 = vmatpush1.msra.mxu0 0.0
    %255 = vmatprep.subr.mxu0 0.0
    %256 = vmatpush1.msra.mxu0 0.0
    %257 = vmatprep.subr.mxu0 0.0
    %258 = vmatpush1.msra.mxu0 0.0
    %259 = vmatprep.subr.mxu0 0.0
    %260 = vmatpush1.msra.mxu0 0.0
    %261 = vmatprep.subr.mxu0 0.0
    %262 = vmatpush1.msra.mxu0 0.0
    %263 = vmatprep.subr.mxu0 0.0
    %264 = vmatpush1.msra.mxu0 0.0
    %265 = vmatprep.subr.mxu0 0.0
    %266 = vmatpush1.msra.mxu0 0.0
    %267 = vmatprep.subr.mxu0 0.0
    %268 = vmatpush1.msra.mxu0 %v145
    %269 = vmatprep.subr.mxu0 0.0
    %270 = vmatpush1.msra.mxu0 %v144
    %271 = vmatprep.subr.mxu0 0.0
    %272 = vmatpush1.msra.mxu0 %v143
    %273 = vmatprep.subr.mxu0 0.0
    %274 = vmatpush1.msra.mxu0 %v142
    %275 = vmatprep.subr.mxu0 0.0
    %276 = vmatpush2.msra.mxu0 0.0
    %277 = vmatprep.subr.mxu0 0.0
    %278 = vmatpush2.msra.mxu0 0.0
    %279 = vmatprep.subr.mxu0 0.0
    %280 = vmatpush2.msra.mxu0 0.0
    %281 = vmatprep.subr.mxu0 0.0
    %282 = vmatpush2.msra.mxu0 0.0
    %283 = vmatprep.subr.mxu0 0.0
    %284 = vmatpush2.msra.mxu0 0.0
    %285 = vmatprep.subr.mxu0 0.0
    %286 = vmatpush2.msra.mxu0 0.0
    %287 = vmatprep.subr.mxu0 0.0
    %288 = vmatpush2.msra.mxu0 0.0
    %289 = vmatprep.subr.mxu0 0.0
    %290 = vmatpush2.msra.mxu0 0.0
    %291 = vmatprep.subr.mxu0 0.0
    %292 = vmatpush2.msra.mxu0 0.0
    %293 = vmatprep.subr.mxu0 0.0
    %294 = vmatpush2.msra.mxu0 0.0
    %295 = vmatprep.subr.mxu0 0.0
    %296 = vmatpush2.msra.mxu0 0.0
    %297 = vmatprep.subr.mxu0 0.0
    %298 = vmatpush2.msra.mxu0 0.0
    %299 = vmatprep.subr.mxu0 0.0
    %300 = vmatpush2.msra.mxu0 0.0
    %301 = vmatprep.subr.mxu0 0.0
    %302 = vmatpush2.msra.mxu0 0.0
    %303 = vmatprep.subr.mxu0 0.0
    %304 = vmatpush2.msra.mxu0 0.0
    %305 = vmatprep.subr.mxu0 0.0
    %306 = vmatpush2.msra.mxu0 0.0
    %307 = vmatprep.mubr.f32.mxu0 0.0
    %308 = vmatmul.mubr.f32.gmra.mxu0 %v241
    %v309 = vpop.f32.mrf.mxu0
    %v310 = vadd.f32 0.0, %v309
    %v311 = vpop.f32.mrf.mxu0
    %312 = vdwg.mxu0
    %v313 = vadd.f32 %v238, %v310
    %v314 = vxor.u32 %v313, 2147483648
    %v315 = vmul.f32 %v314, 1.442695
    %v316 = vpow.pop %v315
    %v317 = vadd.f32 %v316, 1.0
    %v318 = vrcp.pop %v317
    %v319 = vmul.f32 1.0, %v318
    %v320 = vtanh.pop %v313
    %v321 = vmul.f32 %v319, 0.0
    %323 = vrot.lane.b32.xlu0 %v320, 64
    %v324 = vpop.permute.xlu0 %323
    %v326 = vmul.f32 %v319, %v324
    %328 = vrot.lane.b32.xlu0 %v326, 32
    %v329 = vpop.permute.xlu0 %328
    %v331 = vadd.f32 %v321, %v329
    %v332 = vtanh.pop %v331
    %334 = vrot.lane.b32.xlu0 %v332, 64
    %v335 = vpop.permute.xlu0 %334
    %v337 = vmul.f32 %v319, %v335
    %339 = vrot.lane.b32.xlu0 %v337, 32
    %v340 = vpop.permute.xlu0 %339
    %vm342 = vcmask 254976
    %343 = vst.msk [vmem:[#allocation2] sm:$0x3] %vm342, %v340
    %v344 = vld [vmem:[#allocation3 + $0x2] sm:$0x3]
    %v345 = vsel %vm239, %v340, 0
    %347 = vmatprep.subr.mxu0 0.0
    %348 = vmatpush1.msra.mxu0 0.0
    %349 = vmatprep.subr.mxu0 0.0
    %350 = vmatpush1.msra.mxu0 0.0
    %351 = vmatprep.subr.mxu0 0.0
    %352 = vmatpush1.msra.mxu0 0.0
    %353 = vmatprep.subr.mxu0 0.0
    %354 = vmatpush1.msra.mxu0 0.0
    %355 = vmatprep.subr.mxu0 0.0
    %356 = vmatpush1.msra.mxu0 0.0
    %357 = vmatprep.subr.mxu0 0.0
    %358 = vmatpush1.msra.mxu0 0.0
    %359 = vmatprep.subr.mxu0 0.0
    %360 = vmatpush1.msra.mxu0 0.0
    %361 = vmatprep.subr.mxu0 0.0
    %362 = vmatpush1.msra.mxu0 0.0
    %363 = vmatprep.subr.mxu0 0.0
    %364 = vmatpush1.msra.mxu0 0.0
    %365 = vmatprep.subr.mxu0 0.0
    %366 = vmatpush1.msra.mxu0 0.0
    %367 = vmatprep.subr.mxu0 0.0
    %368 = vmatpush1.msra.mxu0 0.0
    %369 = vmatprep.subr.mxu0 0.0
    %370 = vmatpush1.msra.mxu0 0.0
    %371 = vmatprep.subr.mxu0 0.0
    %372 = vmatpush1.msra.mxu0 %v145
    %373 = vmatprep.subr.mxu0 0.0
    %374 = vmatpush1.msra.mxu0 %v144
    %375 = vmatprep.subr.mxu0 0.0
    %376 = vmatpush1.msra.mxu0 %v143
    %377 = vmatprep.subr.mxu0 0.0
    %378 = vmatpush1.msra.mxu0 %v142
    %379 = vmatprep.subr.mxu0 0.0
    %380 = vmatpush2.msra.mxu0 0.0
    %381 = vmatprep.subr.mxu0 0.0
    %382 = vmatpush2.msra.mxu0 0.0
    %383 = vmatprep.subr.mxu0 0.0
    %384 = vmatpush2.msra.mxu0 0.0
    %385 = vmatprep.subr.mxu0 0.0
    %386 = vmatpush2.msra.mxu0 0.0
    %387 = vmatprep.subr.mxu0 0.0
    %388 = vmatpush2.msra.mxu0 0.0
    %389 = vmatprep.subr.mxu0 0.0
    %390 = vmatpush2.msra.mxu0 0.0
    %391 = vmatprep.subr.mxu0 0.0
    %392 = vmatpush2.msra.mxu0 0.0
    %393 = vmatprep.subr.mxu0 0.0
    %394 = vmatpush2.msra.mxu0 0.0
    %395 = vmatprep.subr.mxu0 0.0
    %396 = vmatpush2.msra.mxu0 0.0
    %397 = vmatprep.subr.mxu0 0.0
    %398 = vmatpush2.msra.mxu0 0.0
    %399 = vmatprep.subr.mxu0 0.0
    %400 = vmatpush2.msra.mxu0 0.0
    %401 = vmatprep.subr.mxu0 0.0
    %402 = vmatpush2.msra.mxu0 0.0
    %403 = vmatprep.subr.mxu0 0.0
    %404 = vmatpush2.msra.mxu0 0.0
    %405 = vmatprep.subr.mxu0 0.0
    %406 = vmatpush2.msra.mxu0 0.0
    %407 = vmatprep.subr.mxu0 0.0
    %408 = vmatpush2.msra.mxu0 0.0
    %409 = vmatprep.subr.mxu0 0.0
    %410 = vmatpush2.msra.mxu0 0.0
    %411 = vmatprep.mubr.f32.mxu0 0.0
    %412 = vmatmul.mubr.f32.gmra.mxu0 %v345
    %v413 = vpop.f32.mrf.mxu0
    %v414 = vadd.f32 0.0, %v413
    %v415 = vpop.f32.mrf.mxu0
    %416 = vdwg.mxu0
    %v417 = vadd.f32 %v344, %v414
    %v418 = vxor.u32 %v417, 2147483648
    %v419 = vmul.f32 %v418, 1.442695
    %v420 = vpow.pop %v419
    %v421 = vadd.f32 %v420, 1.0
    %v422 = vrcp.pop %v421
    %v423 = vmul.f32 1.0, %v422
    %v424 = vtanh.pop %v417
    %v425 = vmul.f32 %v423, %v331
    %427 = vrot.lane.b32.xlu0 %v424, 64
    %v428 = vpop.permute.xlu0 %427
    %v430 = vmul.f32 %v423, %v428
    %432 = vrot.lane.b32.xlu0 %v430, 32
    %v433 = vpop.permute.xlu0 %432
    %v435 = vadd.f32 %v425, %v433
    %v436 = vtanh.pop %v435
    %438 = vrot.lane.b32.xlu0 %v436, 64
    %v439 = vpop.permute.xlu0 %438
    %v441 = vmul.f32 %v423, %v439
    %443 = vrot.lane.b32.xlu0 %v441, 32
    %v444 = vpop.permute.xlu0 %443
    %446 = vst.msk [vmem:[#allocation2 + $0x2] sm:$0x3] %vm342, %v444
    %v447 = vld [vmem:[#allocation3 + $0x4] sm:$0x3]
    %v448 = vsel %vm239, %v444, 0
    %450 = vmatprep.subr.mxu0 0.0
    %451 = vmatpush1.msra.mxu0 0.0
    %452 = vmatprep.subr.mxu0 0.0
    %453 = vmatpush1.msra.mxu0 0.0
    %454 = vmatprep.subr.mxu0 0.0
    %455 = vmatpush1.msra.mxu0 0.0
    %456 = vmatprep.subr.mxu0 0.0
    %457 = vmatpush1.msra.mxu0 0.0
    %458 = vmatprep.subr.mxu0 0.0
    %459 = vmatpush1.msra.mxu0 0.0
    %460 = vmatprep.subr.mxu0 0.0
    %461 = vmatpush1.msra.mxu0 0.0
    %462 = vmatprep.subr.mxu0 0.0
    %463 = vmatpush1.msra.mxu0 0.0
    %464 = vmatprep.subr.mxu0 0.0
    %465 = vmatpush1.msra.mxu0 0.0
    %466 = vmatprep.subr.mxu0 0.0
    %467 = vmatpush1.msra.mxu0 0.0
    %468 = vmatprep.subr.mxu0 0.0
    %469 = vmatpush1.msra.mxu0 0.0
    %470 = vmatprep.subr.mxu0 0.0
    %471 = vmatpush1.msra.mxu0 0.0
    %472 = vmatprep.subr.mxu0 0.0
    %473 = vmatpush1.msra.mxu0 0.0
    %474 = vmatprep.subr.mxu0 0.0
    %475 = vmatpush1.msra.mxu0 %v145
    %476 = vmatprep.subr.mxu0 0.0
    %477 = vmatpush1.msra.mxu0 %v144
    %478 = vmatprep.subr.mxu0 0.0
    %479 = vmatpush1.msra.mxu0 %v143
    %480 = vmatprep.subr.mxu0 0.0
    %481 = vmatpush1.msra.mxu0 %v142
    %482 = vmatprep.subr.mxu0 0.0
    %483 = vmatpush2.msra.mxu0 0.0
    %484 = vmatprep.subr.mxu0 0.0
    %485 = vmatpush2.msra.mxu0 0.0
    %486 = vmatprep.subr.mxu0 0.0
    %487 = vmatpush2.msra.mxu0 0.0
    %488 = vmatprep.subr.mxu0 0.0
    %489 = vmatpush2.msra.mxu0 0.0
    %490 = vmatprep.subr.mxu0 0.0
    %491 = vmatpush2.msra.mxu0 0.0
    %492 = vmatprep.subr.mxu0 0.0
    %493 = vmatpush2.msra.mxu0 0.0
    %494 = vmatprep.subr.mxu0 0.0
    %495 = vmatpush2.msra.mxu0 0.0
    %496 = vmatprep.subr.mxu0 0.0
    %497 = vmatpush2.msra.mxu0 0.0
    %498 = vmatprep.subr.mxu0 0.0
    %499 = vmatpush2.msra.mxu0 0.0
    %500 = vmatprep.subr.mxu0 0.0
    %501 = vmatpush2.msra.mxu0 0.0
    %502 = vmatprep.subr.mxu0 0.0
    %503 = vmatpush2.msra.mxu0 0.0
    %504 = vmatprep.subr.mxu0 0.0
    %505 = vmatpush2.msra.mxu0 0.0
    %506 = vmatprep.subr.mxu0 0.0
    %507 = vmatpush2.msra.mxu0 0.0
    %508 = vmatprep.subr.mxu0 0.0
    %509 = vmatpush2.msra.mxu0 0.0
    %510 = vmatprep.subr.mxu0 0.0
    %511 = vmatpush2.msra.mxu0 0.0
    %512 = vmatprep.subr.mxu0 0.0
    %513 = vmatpush2.msra.mxu0 0.0
    %514 = vmatprep.mubr.f32.mxu0 0.0
    %515 = vmatmul.mubr.f32.gmra.mxu0 %v448
    %v516 = vpop.f32.mrf.mxu0
    %v517 = vadd.f32 0.0, %v516
    %v518 = vpop.f32.mrf.mxu0
    %519 = vdwg.mxu0
    %v520 = vadd.f32 %v447, %v517
    %v521 = vxor.u32 %v520, 2147483648
    %v522 = vmul.f32 %v521, 1.442695
    %v523 = vpow.pop %v522
    %v524 = vadd.f32 %v523, 1.0
    %v525 = vrcp.pop %v524
    %v526 = vmul.f32 1.0, %v525
    %v527 = vtanh.pop %v520
    %v528 = vmul.f32 %v526, %v435
    %530 = vrot.lane.b32.xlu0 %v527, 64
    %v531 = vpop.permute.xlu0 %530
    %v533 = vmul.f32 %v526, %v531
    %535 = vrot.lane.b32.xlu0 %v533, 32
    %v536 = vpop.permute.xlu0 %535
    %v538 = vadd.f32 %v528, %v536
    %v539 = vtanh.pop %v538
    %541 = vrot.lane.b32.xlu0 %v539, 64
    %v542 = vpop.permute.xlu0 %541
    %v544 = vmul.f32 %v526, %v542
    %546 = vrot.lane.b32.xlu0 %v544, 32
    %v547 = vpop.permute.xlu0 %546
    %549 = vst.msk [vmem:[#allocation2 + $0x4] sm:$0x3] %vm342, %v547
    %v550 = vld [vmem:[#allocation3 + $0x6] sm:$0x3]
    %v551 = vsel %vm239, %v547, 0
    %553 = vmatprep.subr.mxu0 0.0
    %554 = vmatpush1.msra.mxu0 0.0
    %555 = vmatprep.subr.mxu0 0.0
    %556 = vmatpush1.msra.mxu0 0.0
    %557 = vmatprep.subr.mxu0 0.0
    %558 = vmatpush1.msra.mxu0 0.0
    %559 = vmatprep.subr.mxu0 0.0
    %560 = vmatpush1.msra.mxu0 0.0
    %561 = vmatprep.subr.mxu0 0.0
    %562 = vmatpush1.msra.mxu0 0.0
    %563 = vmatprep.subr.mxu0 0.0
    %564 = vmatpush1.msra.mxu0 0.0
    %565 = vmatprep.subr.mxu0 0.0
    %566 = vmatpush1.msra.mxu0 0.0
    %567 = vmatprep.subr.mxu0 0.0
    %568 = vmatpush1.msra.mxu0 0.0
    %569 = vmatprep.subr.mxu0 0.0
    %570 = vmatpush1.msra.mxu0 0.0
    %571 = vmatprep.subr.mxu0 0.0
    %572 = vmatpush1.msra.mxu0 0.0
    %573 = vmatprep.subr.mxu0 0.0
    %574 = vmatpush1.msra.mxu0 0.0
    %575 = vmatprep.subr.mxu0 0.0
    %576 = vmatpush1.msra.mxu0 0.0
    %577 = vmatprep.subr.mxu0 0.0
    %578 = vmatpush1.msra.mxu0 %v145
    %579 = vmatprep.subr.mxu0 0.0
    %580 = vmatpush1.msra.mxu0 %v144
    %581 = vmatprep.subr.mxu0 0.0
    %582 = vmatpush1.msra.mxu0 %v143
    %583 = vmatprep.subr.mxu0 0.0
    %584 = vmatpush1.msra.mxu0 %v142
    %585 = vmatprep.subr.mxu0 0.0
    %586 = vmatpush2.msra.mxu0 0.0
    %587 = vmatprep.subr.mxu0 0.0
    %588 = vmatpush2.msra.mxu0 0.0
    %589 = vmatprep.subr.mxu0 0.0
    %590 = vmatpush2.msra.mxu0 0.0
    %591 = vmatprep.subr.mxu0 0.0
    %592 = vmatpush2.msra.mxu0 0.0
    %593 = vmatprep.subr.mxu0 0.0
    %594 = vmatpush2.msra.mxu0 0.0
    %595 = vmatprep.subr.mxu0 0.0
    %596 = vmatpush2.msra.mxu0 0.0
    %597 = vmatprep.subr.mxu0 0.0
    %598 = vmatpush2.msra.mxu0 0.0
    %599 = vmatprep.subr.mxu0 0.0
    %600 = vmatpush2.msra.mxu0 0.0
    %601 = vmatprep.subr.mxu0 0.0
    %602 = vmatpush2.msra.mxu0 0.0
    %603 = vmatprep.subr.mxu0 0.0
    %604 = vmatpush2.msra.mxu0 0.0
    %605 = vmatprep.subr.mxu0 0.0
    %606 = vmatpush2.msra.mxu0 0.0
    %607 = vmatprep.subr.mxu0 0.0
    %608 = vmatpush2.msra.mxu0 0.0
    %609 = vmatprep.subr.mxu0 0.0
    %610 = vmatpush2.msra.mxu0 0.0
    %611 = vmatprep.subr.mxu0 0.0
    %612 = vmatpush2.msra.mxu0 0.0
    %613 = vmatprep.subr.mxu0 0.0
    %614 = vmatpush2.msra.mxu0 0.0
    %615 = vmatprep.subr.mxu0 0.0
    %616 = vmatpush2.msra.mxu0 0.0
    %617 = vmatprep.mubr.f32.mxu0 0.0
    %618 = vmatmul.mubr.f32.gmra.mxu0 %v551
    %v619 = vpop.f32.mrf.mxu0
    %v620 = vadd.f32 0.0, %v619
    %v621 = vpop.f32.mrf.mxu0
    %622 = vdwg.mxu0
    %v623 = vadd.f32 %v550, %v620
    %v624 = vxor.u32 %v623, 2147483648
    %v625 = vmul.f32 %v624, 1.442695
    %v626 = vpow.pop %v625
    %v627 = vadd.f32 %v626, 1.0
    %v628 = vrcp.pop %v627
    %v629 = vmul.f32 1.0, %v628
    %v630 = vtanh.pop %v623
    %v631 = vmul.f32 %v629, %v538
    %633 = vrot.lane.b32.xlu0 %v630, 64
    %v634 = vpop.permute.xlu0 %633
    %v636 = vmul.f32 %v629, %v634
    %638 = vrot.lane.b32.xlu0 %v636, 32
    %v639 = vpop.permute.xlu0 %638
    %v641 = vadd.f32 %v631, %v639
    %v642 = vtanh.pop %v641
    %644 = vrot.lane.b32.xlu0 %v642, 64
    %v645 = vpop.permute.xlu0 %644
    %v647 = vmul.f32 %v629, %v645
    %649 = vrot.lane.b32.xlu0 %v647, 32
    %v650 = vpop.permute.xlu0 %649
    %652 = vst.msk [vmem:[#allocation2 + $0x6] sm:$0x3] %vm342, %v650
    %v653 = vld [vmem:[#allocation3 + $0x8] sm:$0x3]
    %v654 = vsel %vm239, %v650, 0
    %656 = vmatprep.subr.mxu0 0.0
    %657 = vmatpush1.msra.mxu0 0.0
    %658 = vmatprep.subr.mxu0 0.0
    %659 = vmatpush1.msra.mxu0 0.0
    %660 = vmatprep.subr.mxu0 0.0
    %661 = vmatpush1.msra.mxu0 0.0
    %662 = vmatprep.subr.mxu0 0.0
    %663 = vmatpush1.msra.mxu0 0.0
    %664 = vmatprep.subr.mxu0 0.0
    %665 = vmatpush1.msra.mxu0 0.0
    %666 = vmatprep.subr.mxu0 0.0
    %667 = vmatpush1.msra.mxu0 0.0
    %668 = vmatprep.subr.mxu0 0.0
    %669 = vmatpush1.msra.mxu0 0.0
    %670 = vmatprep.subr.mxu0 0.0
    %671 = vmatpush1.msra.mxu0 0.0
    %672 = vmatprep.subr.mxu0 0.0
    %673 = vmatpush1.msra.mxu0 0.0
    %674 = vmatprep.subr.mxu0 0.0
    %675 = vmatpush1.msra.mxu0 0.0
    %676 = vmatprep.subr.mxu0 0.0
    %677 = vmatpush1.msra.mxu0 0.0
    %678 = vmatprep.subr.mxu0 0.0
    %679 = vmatpush1.msra.mxu0 0.0
    %680 = vmatprep.subr.mxu0 0.0
    %681 = vmatpush1.msra.mxu0 %v145
    %682 = vmatprep.subr.mxu0 0.0
    %683 = vmatpush1.msra.mxu0 %v144
    %684 = vmatprep.subr.mxu0 0.0
    %685 = vmatpush1.msra.mxu0 %v143
    %686 = vmatprep.subr.mxu0 0.0
    %687 = vmatpush1.msra.mxu0 %v142
    %688 = vmatprep.subr.mxu0 0.0
    %689 = vmatpush2.msra.mxu0 0.0
    %690 = vmatprep.subr.mxu0 0.0
    %691 = vmatpush2.msra.mxu0 0.0
    %692 = vmatprep.subr.mxu0 0.0
    %693 = vmatpush2.msra.mxu0 0.0
    %694 = vmatprep.subr.mxu0 0.0
    %695 = vmatpush2.msra.mxu0 0.0
    %696 = vmatprep.subr.mxu0 0.0
    %697 = vmatpush2.msra.mxu0 0.0
    %698 = vmatprep.subr.mxu0 0.0
    %699 = vmatpush2.msra.mxu0 0.0
    %700 = vmatprep.subr.mxu0 0.0
    %701 = vmatpush2.msra.mxu0 0.0
    %702 = vmatprep.subr.mxu0 0.0
    %703 = vmatpush2.msra.mxu0 0.0
    %704 = vmatprep.subr.mxu0 0.0
    %705 = vmatpush2.msra.mxu0 0.0
    %706 = vmatprep.subr.mxu0 0.0
    %707 = vmatpush2.msra.mxu0 0.0
    %708 = vmatprep.subr.mxu0 0.0
    %709 = vmatpush2.msra.mxu0 0.0
    %710 = vmatprep.subr.mxu0 0.0
    %711 = vmatpush2.msra.mxu0 0.0
    %712 = vmatprep.subr.mxu0 0.0
    %713 = vmatpush2.msra.mxu0 0.0
    %714 = vmatprep.subr.mxu0 0.0
    %715 = vmatpush2.msra.mxu0 0.0
    %716 = vmatprep.subr.mxu0 0.0
    %717 = vmatpush2.msra.mxu0 0.0
    %718 = vmatprep.subr.mxu0 0.0
    %719 = vmatpush2.msra.mxu0 0.0
    %720 = vmatprep.mubr.f32.mxu0 0.0
    %721 = vmatmul.mubr.f32.gmra.mxu0 %v654
    %v722 = vpop.f32.mrf.mxu0
    %v723 = vadd.f32 0.0, %v722
    %v724 = vpop.f32.mrf.mxu0
    %725 = vdwg.mxu0
    %v726 = vadd.f32 %v653, %v723
    %v727 = vxor.u32 %v726, 2147483648
    %v728 = vmul.f32 %v727, 1.442695
    %v729 = vpow.pop %v728
    %v730 = vadd.f32 %v729, 1.0
    %v731 = vrcp.pop %v730
    %v732 = vmul.f32 1.0, %v731
    %v733 = vtanh.pop %v726
    %v734 = vmul.f32 %v732, %v641
    %736 = vrot.lane.b32.xlu0 %v733, 64
    %v737 = vpop.permute.xlu0 %736
    %v739 = vmul.f32 %v732, %v737
    %741 = vrot.lane.b32.xlu0 %v739, 32
    %v742 = vpop.permute.xlu0 %741
    %v744 = vadd.f32 %v734, %v742
    %v745 = vtanh.pop %v744
    %747 = vrot.lane.b32.xlu0 %v745, 64
    %v748 = vpop.permute.xlu0 %747
    %v750 = vmul.f32 %v732, %v748
    %752 = vrot.lane.b32.xlu0 %v750, 32
    %v753 = vpop.permute.xlu0 %752
    %755 = vst.msk [vmem:[#allocation2 + $0x8] sm:$0x3] %vm342, %v753
    %v756 = vld [vmem:[#allocation3 + $0xa] sm:$0x3]
    %v757 = vsel %vm239, %v753, 0
    %759 = vmatprep.subr.mxu0 0.0
    %760 = vmatpush1.msra.mxu0 0.0
    %761 = vmatprep.subr.mxu0 0.0
    %762 = vmatpush1.msra.mxu0 0.0
    %763 = vmatprep.subr.mxu0 0.0
    %764 = vmatpush1.msra.mxu0 0.0
    %765 = vmatprep.subr.mxu0 0.0
    %766 = vmatpush1.msra.mxu0 0.0
    %767 = vmatprep.subr.mxu0 0.0
    %768 = vmatpush1.msra.mxu0 0.0
    %769 = vmatprep.subr.mxu0 0.0
    %770 = vmatpush1.msra.mxu0 0.0
    %771 = vmatprep.subr.mxu0 0.0
    %772 = vmatpush1.msra.mxu0 0.0
    %773 = vmatprep.subr.mxu0 0.0
    %774 = vmatpush1.msra.mxu0 0.0
    %775 = vmatprep.subr.mxu0 0.0
    %776 = vmatpush1.msra.mxu0 0.0
    %777 = vmatprep.subr.mxu0 0.0
    %778 = vmatpush1.msra.mxu0 0.0
    %779 = vmatprep.subr.mxu0 0.0
    %780 = vmatpush1.msra.mxu0 0.0
    %781 = vmatprep.subr.mxu0 0.0
    %782 = vmatpush1.msra.mxu0 0.0
    %783 = vmatprep.subr.mxu0 0.0
    %784 = vmatpush1.msra.mxu0 %v145
    %785 = vmatprep.subr.mxu0 0.0
    %786 = vmatpush1.msra.mxu0 %v144
    %787 = vmatprep.subr.mxu0 0.0
    %788 = vmatpush1.msra.mxu0 %v143
    %789 = vmatprep.subr.mxu0 0.0
    %790 = vmatpush1.msra.mxu0 %v142
    %791 = vmatprep.subr.mxu0 0.0
    %792 = vmatpush2.msra.mxu0 0.0
    %793 = vmatprep.subr.mxu0 0.0
    %794 = vmatpush2.msra.mxu0 0.0
    %795 = vmatprep.subr.mxu0 0.0
    %796 = vmatpush2.msra.mxu0 0.0
    %797 = vmatprep.subr.mxu0 0.0
    %798 = vmatpush2.msra.mxu0 0.0
    %799 = vmatprep.subr.mxu0 0.0
    %800 = vmatpush2.msra.mxu0 0.0
    %801 = vmatprep.subr.mxu0 0.0
    %802 = vmatpush2.msra.mxu0 0.0
    %803 = vmatprep.subr.mxu0 0.0
    %804 = vmatpush2.msra.mxu0 0.0
    %805 = vmatprep.subr.mxu0 0.0
    %806 = vmatpush2.msra.mxu0 0.0
    %807 = vmatprep.subr.mxu0 0.0
    %808 = vmatpush2.msra.mxu0 0.0
    %809 = vmatprep.subr.mxu0 0.0
    %810 = vmatpush2.msra.mxu0 0.0
    %811 = vmatprep.subr.mxu0 0.0
    %812 = vmatpush2.msra.mxu0 0.0
    %813 = vmatprep.subr.mxu0 0.0
    %814 = vmatpush2.msra.mxu0 0.0
    %815 = vmatprep.subr.mxu0 0.0
    %816 = vmatpush2.msra.mxu0 0.0
    %817 = vmatprep.subr.mxu0 0.0
    %818 = vmatpush2.msra.mxu0 0.0
    %819 = vmatprep.subr.mxu0 0.0
    %820 = vmatpush2.msra.mxu0 0.0
    %821 = vmatprep.subr.mxu0 0.0
    %822 = vmatpush2.msra.mxu0 0.0
    %823 = vmatprep.mubr.f32.mxu0 0.0
    %824 = vmatmul.mubr.f32.gmra.mxu0 %v757
    %v825 = vpop.f32.mrf.mxu0
    %v826 = vadd.f32 0.0, %v825
    %v827 = vpop.f32.mrf.mxu0
    %828 = vdwg.mxu0
    %v829 = vadd.f32 %v756, %v826
    %v830 = vxor.u32 %v829, 2147483648
    %v831 = vmul.f32 %v830, 1.442695
    %v832 = vpow.pop %v831
    %v833 = vadd.f32 %v832, 1.0
    %v834 = vrcp.pop %v833
    %v835 = vmul.f32 1.0, %v834
    %v836 = vtanh.pop %v829
    %v837 = vmul.f32 %v835, %v744
    %839 = vrot.lane.b32.xlu0 %v836, 64
    %v840 = vpop.permute.xlu0 %839
    %v842 = vmul.f32 %v835, %v840
    %844 = vrot.lane.b32.xlu0 %v842, 32
    %v845 = vpop.permute.xlu0 %844
    %v847 = vadd.f32 %v837, %v845
    %v848 = vtanh.pop %v847
    %850 = vrot.lane.b32.xlu0 %v848, 64
    %v851 = vpop.permute.xlu0 %850
    %v853 = vmul.f32 %v835, %v851
    %855 = vrot.lane.b32.xlu0 %v853, 32
    %v856 = vpop.permute.xlu0 %855
    %858 = vst.msk [vmem:[#allocation2 + $0xa] sm:$0x3] %vm342, %v856
    %v859 = vld [vmem:[#allocation3 + $0xc] sm:$0x3]
    %v860 = vsel %vm239, %v856, 0
    %862 = vmatprep.subr.mxu0 0.0
    %863 = vmatpush1.msra.mxu0 0.0
    %864 = vmatprep.subr.mxu0 0.0
    %865 = vmatpush1.msra.mxu0 0.0
    %866 = vmatprep.subr.mxu0 0.0
    %867 = vmatpush1.msra.mxu0 0.0
    %868 = vmatprep.subr.mxu0 0.0
    %869 = vmatpush1.msra.mxu0 0.0
    %870 = vmatprep.subr.mxu0 0.0
    %871 = vmatpush1.msra.mxu0 0.0
    %872 = vmatprep.subr.mxu0 0.0
    %873 = vmatpush1.msra.mxu0 0.0
    %874 = vmatprep.subr.mxu0 0.0
    %875 = vmatpush1.msra.mxu0 0.0
    %876 = vmatprep.subr.mxu0 0.0
    %877 = vmatpush1.msra.mxu0 0.0
    %878 = vmatprep.subr.mxu0 0.0
    %879 = vmatpush1.msra.mxu0 0.0
    %880 = vmatprep.subr.mxu0 0.0
    %881 = vmatpush1.msra.mxu0 0.0
    %882 = vmatprep.subr.mxu0 0.0
    %883 = vmatpush1.msra.mxu0 0.0
    %884 = vmatprep.subr.mxu0 0.0
    %885 = vmatpush1.msra.mxu0 0.0
    %886 = vmatprep.subr.mxu0 0.0
    %887 = vmatpush1.msra.mxu0 %v145
    %888 = vmatprep.subr.mxu0 0.0
    %889 = vmatpush1.msra.mxu0 %v144
    %890 = vmatprep.subr.mxu0 0.0
    %891 = vmatpush1.msra.mxu0 %v143
    %892 = vmatprep.subr.mxu0 0.0
    %893 = vmatpush1.msra.mxu0 %v142
    %894 = vmatprep.subr.mxu0 0.0
    %895 = vmatpush2.msra.mxu0 0.0
    %896 = vmatprep.subr.mxu0 0.0
    %897 = vmatpush2.msra.mxu0 0.0
    %898 = vmatprep.subr.mxu0 0.0
    %899 = vmatpush2.msra.mxu0 0.0
    %900 = vmatprep.subr.mxu0 0.0
    %901 = vmatpush2.msra.mxu0 0.0
    %902 = vmatprep.subr.mxu0 0.0
    %903 = vmatpush2.msra.mxu0 0.0
    %904 = vmatprep.subr.mxu0 0.0
    %905 = vmatpush2.msra.mxu0 0.0
    %906 = vmatprep.subr.mxu0 0.0
    %907 = vmatpush2.msra.mxu0 0.0
    %908 = vmatprep.subr.mxu0 0.0
    %909 = vmatpush2.msra.mxu0 0.0
    %910 = vmatprep.subr.mxu0 0.0
    %911 = vmatpush2.msra.mxu0 0.0
    %912 = vmatprep.subr.mxu0 0.0
    %913 = vmatpush2.msra.mxu0 0.0
    %914 = vmatprep.subr.mxu0 0.0
    %915 = vmatpush2.msra.mxu0 0.0
    %916 = vmatprep.subr.mxu0 0.0
    %917 = vmatpush2.msra.mxu0 0.0
    %918 = vmatprep.subr.mxu0 0.0
    %919 = vmatpush2.msra.mxu0 0.0
    %920 = vmatprep.subr.mxu0 0.0
    %921 = vmatpush2.msra.mxu0 0.0
    %922 = vmatprep.subr.mxu0 0.0
    %923 = vmatpush2.msra.mxu0 0.0
    %924 = vmatprep.subr.mxu0 0.0
    %925 = vmatpush2.msra.mxu0 0.0
    %926 = vmatprep.mubr.f32.mxu0 0.0
    %927 = vmatmul.mubr.f32.gmra.mxu0 %v860
    %v928 = vpop.f32.mrf.mxu0
    %v929 = vadd.f32 0.0, %v928
    %v930 = vpop.f32.mrf.mxu0
    %931 = vdwg.mxu0
    %v932 = vadd.f32 %v859, %v929
    %v933 = vxor.u32 %v932, 2147483648
    %v934 = vmul.f32 %v933, 1.442695
    %v935 = vpow.pop %v934
    %v936 = vadd.f32 %v935, 1.0
    %v937 = vrcp.pop %v936
    %v938 = vmul.f32 1.0, %v937
    %v939 = vtanh.pop %v932
    %v940 = vmul.f32 %v938, %v847
    %942 = vrot.lane.b32.xlu0 %v939, 64
    %v943 = vpop.permute.xlu0 %942
    %v945 = vmul.f32 %v938, %v943
    %947 = vrot.lane.b32.xlu0 %v945, 32
    %v948 = vpop.permute.xlu0 %947
    %v950 = vadd.f32 %v940, %v948
    %v951 = vtanh.pop %v950
    %953 = vrot.lane.b32.xlu0 %v951, 64
    %v954 = vpop.permute.xlu0 %953
    %v956 = vmul.f32 %v938, %v954
    %958 = vrot.lane.b32.xlu0 %v956, 32
    %v959 = vpop.permute.xlu0 %958
    %961 = vst.msk [vmem:[#allocation2 + $0xc] sm:$0x3] %vm342, %v959
    %v962 = vld [vmem:[#allocation3 + $0xe] sm:$0x3]
    %v963 = vsel %vm239, %v959, 0
    %965 = vmatprep.subr.mxu0 0.0
    %966 = vmatpush1.msra.mxu0 0.0
    %967 = vmatprep.subr.mxu0 0.0
    %968 = vmatpush1.msra.mxu0 0.0
    %969 = vmatprep.subr.mxu0 0.0
    %970 = vmatpush1.msra.mxu0 0.0
    %971 = vmatprep.subr.mxu0 0.0
    %972 = vmatpush1.msra.mxu0 0.0
    %973 = vmatprep.subr.mxu0 0.0
    %974 = vmatpush1.msra.mxu0 0.0
    %975 = vmatprep.subr.mxu0 0.0
    %976 = vmatpush1.msra.mxu0 0.0
    %977 = vmatprep.subr.mxu0 0.0
    %978 = vmatpush1.msra.mxu0 0.0
    %979 = vmatprep.subr.mxu0 0.0
    %980 = vmatpush1.msra.mxu0 0.0
    %981 = vmatprep.subr.mxu0 0.0
    %982 = vmatpush1.msra.mxu0 0.0
    %983 = vmatprep.subr.mxu0 0.0
    %984 = vmatpush1.msra.mxu0 0.0
    %985 = vmatprep.subr.mxu0 0.0
    %986 = vmatpush1.msra.mxu0 0.0
    %987 = vmatprep.subr.mxu0 0.0
    %988 = vmatpush1.msra.mxu0 0.0
    %989 = vmatprep.subr.mxu0 0.0
    %990 = vmatpush1.msra.mxu0 %v145
    %991 = vmatprep.subr.mxu0 0.0
    %992 = vmatpush1.msra.mxu0 %v144
    %993 = vmatprep.subr.mxu0 0.0
    %994 = vmatpush1.msra.mxu0 %v143
    %995 = vmatprep.subr.mxu0 0.0
    %996 = vmatpush1.msra.mxu0 %v142
    %997 = vmatprep.subr.mxu0 0.0
    %998 = vmatpush2.msra.mxu0 0.0
    %999 = vmatprep.subr.mxu0 0.0
    %1000 = vmatpush2.msra.mxu0 0.0
    %1001 = vmatprep.subr.mxu0 0.0
    %1002 = vmatpush2.msra.mxu0 0.0
    %1003 = vmatprep.subr.mxu0 0.0
    %1004 = vmatpush2.msra.mxu0 0.0
    %1005 = vmatprep.subr.mxu0 0.0
    %1006 = vmatpush2.msra.mxu0 0.0
    %1007 = vmatprep.subr.mxu0 0.0
    %1008 = vmatpush2.msra.mxu0 0.0
    %1009 = vmatprep.subr.mxu0 0.0
    %1010 = vmatpush2.msra.mxu0 0.0
    %1011 = vmatprep.subr.mxu0 0.0
    %1012 = vmatpush2.msra.mxu0 0.0
    %1013 = vmatprep.subr.mxu0 0.0
    %1014 = vmatpush2.msra.mxu0 0.0
    %1015 = vmatprep.subr.mxu0 0.0
    %1016 = vmatpush2.msra.mxu0 0.0
    %1017 = vmatprep.subr.mxu0 0.0
    %1018 = vmatpush2.msra.mxu0 0.0
    %1019 = vmatprep.subr.mxu0 0.0
    %1020 = vmatpush2.msra.mxu0 0.0
    %1021 = vmatprep.subr.mxu0 0.0
    %1022 = vmatpush2.msra.mxu0 0.0
    %1023 = vmatprep.subr.mxu0 0.0
    %1024 = vmatpush2.msra.mxu0 0.0
    %1025 = vmatprep.subr.mxu0 0.0
    %1026 = vmatpush2.msra.mxu0 0.0
    %1027 = vmatprep.subr.mxu0 0.0
    %1028 = vmatpush2.msra.mxu0 0.0
    %1029 = vmatprep.mubr.f32.mxu0 0.0
    %1030 = vmatmul.mubr.f32.gmra.mxu0 %v963
    %v1031 = vpop.f32.mrf.mxu0
    %v1032 = vadd.f32 0.0, %v1031
    %v1033 = vpop.f32.mrf.mxu0
    %1034 = vdwg.mxu0
    %v1035 = vadd.f32 %v962, %v1032
    %v1036 = vxor.u32 %v1035, 2147483648
    %v1037 = vmul.f32 %v1036, 1.442695
    %v1038 = vpow.pop %v1037
    %v1039 = vadd.f32 %v1038, 1.0
    %v1040 = vrcp.pop %v1039
    %v1041 = vmul.f32 1.0, %v1040
    %v1042 = vtanh.pop %v1035
    %v1043 = vmul.f32 %v1041, %v950
    %1045 = vrot.lane.b32.xlu0 %v1042, 64
    %v1046 = vpop.permute.xlu0 %1045
    %v1048 = vmul.f32 %v1041, %v1046
    %1050 = vrot.lane.b32.xlu0 %v1048, 32
    %v1051 = vpop.permute.xlu0 %1050
    %v1053 = vadd.f32 %v1043, %v1051
    %v1054 = vtanh.pop %v1053
    %1056 = vrot.lane.b32.xlu0 %v1054, 64
    %v1057 = vpop.permute.xlu0 %1056
    %v1059 = vmul.f32 %v1041, %v1057
    %1061 = vrot.lane.b32.xlu0 %v1059, 32
    %v1062 = vpop.permute.xlu0 %1061
    %1064 = vst.msk [vmem:[#allocation2 + $0xe] sm:$0x3] %vm342, %v1062
    %v1065 = vld [vmem:[#allocation2] sm:$0xff]
    %v1066 = vld [vmem:[#allocation2 + $0x8] sm:$0xff]
    %v1067 = vld [vmem:[%s6] sm:$0xff]
    %v1068 = vld [vmem:[%s6 + $0x8] sm:$0xff]
    %v1069 = vld [vmem:[%s6 + $0x10] sm:$0xff]
    %v1070 = vld [vmem:[%s6 + $0x18] sm:$0xff]
    %v1071 = vld [vmem:[%s5] sm:$0xff]
    %v1072 = vld [vmem:[%s5 + $0x8] sm:$0xff]
    %v1073 = vld [vmem:[%s5 + $0x10] sm:$0xff]
    %v1074 = vld [vmem:[%s5 + $0x18] sm:$0xff]
    %v1075 = vld [vmem:[#allocation8] sm:$0x1]
    %v1077 = vlaneseq
    %v1078 = vshrl.u32 %v1077, 7
    %v1079 = vsub.s32 0, %v1078
    %v1080 = vrot.slane %v1075, %v1079
    %v1083 = vsel %vm239, %v1065, 0
    %v1086 = vsel %vm239, %v1066, 0
    %1088 = vmatprep.subr.mxu0 0.0
    %1089 = vmatpush1.msra.mxu0 0.0
    %1090 = vmatprep.subr.mxu0 0.0
    %1091 = vmatpush1.msra.mxu0 0.0
    %1092 = vmatprep.subr.mxu0 0.0
    %1093 = vmatpush1.msra.mxu0 0.0
    %1094 = vmatprep.subr.mxu0 0.0
    %1095 = vmatpush1.msra.mxu0 0.0
    %1096 = vmatprep.subr.mxu0 0.0
    %1097 = vmatpush1.msra.mxu0 0.0
    %1098 = vmatprep.subr.mxu0 0.0
    %1099 = vmatpush1.msra.mxu0 0.0
    %1100 = vmatprep.subr.mxu0 0.0
    %1101 = vmatpush1.msra.mxu0 0.0
    %1102 = vmatprep.subr.mxu0 0.0
    %1103 = vmatpush1.msra.mxu0 0.0
    %1104 = vmatprep.subr.mxu0 0.0
    %1105 = vmatpush1.msra.mxu0 0.0
    %1106 = vmatprep.subr.mxu0 0.0
    %1107 = vmatpush1.msra.mxu0 0.0
    %1108 = vmatprep.subr.mxu0 0.0
    %1109 = vmatpush1.msra.mxu0 0.0
    %1110 = vmatprep.subr.mxu0 0.0
    %1111 = vmatpush1.msra.mxu0 0.0
    %1112 = vmatprep.subr.mxu0 0.0
    %1113 = vmatpush1.msra.mxu0 %v1074
    %1114 = vmatprep.subr.mxu0 0.0
    %1115 = vmatpush1.msra.mxu0 %v1073
    %1116 = vmatprep.subr.mxu0 0.0
    %1117 = vmatpush1.msra.mxu0 %v1072
    %1118 = vmatprep.subr.mxu0 0.0
    %1119 = vmatpush1.msra.mxu0 %v1071
    %1120 = vmatprep.subr.mxu0 0.0
    %1121 = vmatpush2.msra.mxu0 0.0
    %1122 = vmatprep.subr.mxu0 0.0
    %1123 = vmatpush2.msra.mxu0 0.0
    %1124 = vmatprep.subr.mxu0 0.0
    %1125 = vmatpush2.msra.mxu0 0.0
    %1126 = vmatprep.subr.mxu0 0.0
    %1127 = vmatpush2.msra.mxu0 0.0
    %1128 = vmatprep.subr.mxu0 0.0
    %1129 = vmatpush2.msra.mxu0 0.0
    %1130 = vmatprep.subr.mxu0 0.0
    %1131 = vmatpush2.msra.mxu0 0.0
    %1132 = vmatprep.subr.mxu0 0.0
    %1133 = vmatpush2.msra.mxu0 0.0
    %1134 = vmatprep.subr.mxu0 0.0
    %1135 = vmatpush2.msra.mxu0 0.0
    %1136 = vmatprep.subr.mxu0 0.0
    %1137 = vmatpush2.msra.mxu0 0.0
    %1138 = vmatprep.subr.mxu0 0.0
    %1139 = vmatpush2.msra.mxu0 0.0
    %1140 = vmatprep.subr.mxu0 0.0
    %1141 = vmatpush2.msra.mxu0 0.0
    %1142 = vmatprep.subr.mxu0 0.0
    %1143 = vmatpush2.msra.mxu0 0.0
    %1144 = vmatprep.subr.mxu0 0.0
    %1145 = vmatpush2.msra.mxu0 0.0
    %1146 = vmatprep.subr.mxu0 0.0
    %1147 = vmatpush2.msra.mxu0 0.0
    %1148 = vmatprep.subr.mxu0 0.0
    %1149 = vmatpush2.msra.mxu0 0.0
    %1150 = vmatprep.subr.mxu0 0.0
    %1151 = vmatpush2.msra.mxu0 0.0
    %1152 = vmatprep.mubr.f32.mxu0 0.0
    %1153 = vmatmul.mubr.f32.gmra.mxu0 %v1083
    %v1154 = vpop.f32.mrf.mxu0
    %v1155 = vadd.f32 %v1080, %v1154
    %v1156 = vpop.f32.mrf.mxu0
    %1157 = vmatprep.mubr.f32.mxu0 0.0
    %1158 = vmatmul.mubr.f32.gmra.mxu0 %v1086
    %v1159 = vpop.f32.mrf.mxu0
    %v1160 = vadd.f32 %v1080, %v1159
    %v1161 = vpop.f32.mrf.mxu0
    %1162 = vdwg.mxu0
    %1163 = vst [vmem:[#allocation3] sm:$0xff] %v1155
    %1164 = vst [vmem:[#allocation3 + $0x8] sm:$0xff] %v1160
    %v1165 = vld [vmem:[#allocation3] sm:$0x3]
    %1166 = vmatprep.subr.mxu0 0.0
    %1167 = vmatpush1.msra.mxu0 0.0
    %1168 = vmatprep.subr.mxu0 0.0
    %1169 = vmatpush1.msra.mxu0 0.0
    %1170 = vmatprep.subr.mxu0 0.0
    %1171 = vmatpush1.msra.mxu0 0.0
    %1172 = vmatprep.subr.mxu0 0.0
    %1173 = vmatpush1.msra.mxu0 0.0
    %1174 = vmatprep.subr.mxu0 0.0
    %1175 = vmatpush1.msra.mxu0 0.0
    %1176 = vmatprep.subr.mxu0 0.0
    %1177 = vmatpush1.msra.mxu0 0.0
    %1178 = vmatprep.subr.mxu0 0.0
    %1179 = vmatpush1.msra.mxu0 0.0
    %1180 = vmatprep.subr.mxu0 0.0
    %1181 = vmatpush1.msra.mxu0 0.0
    %1182 = vmatprep.subr.mxu0 0.0
    %1183 = vmatpush1.msra.mxu0 0.0
    %1184 = vmatprep.subr.mxu0 0.0
    %1185 = vmatpush1.msra.mxu0 0.0
    %1186 = vmatprep.subr.mxu0 0.0
    %1187 = vmatpush1.msra.mxu0 0.0
    %1188 = vmatprep.subr.mxu0 0.0
    %1189 = vmatpush1.msra.mxu0 0.0
    %1190 = vmatprep.subr.mxu0 0.0
    %1191 = vmatpush1.msra.mxu0 %v1070
    %1192 = vmatprep.subr.mxu0 0.0
    %1193 = vmatpush1.msra.mxu0 %v1069
    %1194 = vmatprep.subr.mxu0 0.0
    %1195 = vmatpush1.msra.mxu0 %v1068
    %1196 = vmatprep.subr.mxu0 0.0
    %1197 = vmatpush1.msra.mxu0 %v1067
    %1198 = vmatprep.subr.mxu0 0.0
    %1199 = vmatpush2.msra.mxu0 0.0
    %1200 = vmatprep.subr.mxu0 0.0
    %1201 = vmatpush2.msra.mxu0 0.0
    %1202 = vmatprep.subr.mxu0 0.0
    %1203 = vmatpush2.msra.mxu0 0.0
    %1204 = vmatprep.subr.mxu0 0.0
    %1205 = vmatpush2.msra.mxu0 0.0
    %1206 = vmatprep.subr.mxu0 0.0
    %1207 = vmatpush2.msra.mxu0 0.0
    %1208 = vmatprep.subr.mxu0 0.0
    %1209 = vmatpush2.msra.mxu0 0.0
    %1210 = vmatprep.subr.mxu0 0.0
    %1211 = vmatpush2.msra.mxu0 0.0
    %1212 = vmatprep.subr.mxu0 0.0
    %1213 = vmatpush2.msra.mxu0 0.0
    %1214 = vmatprep.subr.mxu0 0.0
    %1215 = vmatpush2.msra.mxu0 0.0
    %1216 = vmatprep.subr.mxu0 0.0
    %1217 = vmatpush2.msra.mxu0 0.0
    %1218 = vmatprep.subr.mxu0 0.0
    %1219 = vmatpush2.msra.mxu0 0.0
    %1220 = vmatprep.subr.mxu0 0.0
    %1221 = vmatpush2.msra.mxu0 0.0
    %1222 = vmatprep.subr.mxu0 0.0
    %1223 = vmatpush2.msra.mxu0 0.0
    %1224 = vmatprep.subr.mxu0 0.0
    %1225 = vmatpush2.msra.mxu0 0.0
    %1226 = vmatprep.subr.mxu0 0.0
    %1227 = vmatpush2.msra.mxu0 0.0
    %1228 = vmatprep.subr.mxu0 0.0
    %1229 = vmatpush2.msra.mxu0 0.0
    %1230 = vmatprep.mubr.f32.mxu0 0.0
    %1231 = vmatmul.mubr.f32.gmra.mxu0 %v241
    %v1232 = vpop.f32.mrf.mxu0
    %v1233 = vadd.f32 0.0, %v1232
    %v1234 = vpop.f32.mrf.mxu0
    %1235 = vdwg.mxu0
    %v1236 = vadd.f32 %v1165, %v1233
    %v1237 = vxor.u32 %v1236, 2147483648
    %v1238 = vmul.f32 %v1237, 1.442695
    %v1239 = vpow.pop %v1238
    %v1240 = vadd.f32 %v1239, 1.0
    %v1241 = vrcp.pop %v1240
    %v1242 = vmul.f32 1.0, %v1241
    %v1243 = vtanh.pop %v1236
    %v1244 = vmul.f32 %v1242, 0.0
    %1246 = vrot.lane.b32.xlu0 %v1243, 64
    %v1247 = vpop.permute.xlu0 %1246
    %v1249 = vmul.f32 %v1242, %v1247
    %1251 = vrot.lane.b32.xlu0 %v1249, 32
    %v1252 = vpop.permute.xlu0 %1251
    %v1254 = vadd.f32 %v1244, %v1252
    %v1255 = vtanh.pop %v1254
    %1257 = vrot.lane.b32.xlu0 %v1255, 64
    %v1258 = vpop.permute.xlu0 %1257
    %v1260 = vmul.f32 %v1242, %v1258
    %v1261 = vld [vmem:[#allocation3 + $0x2] sm:$0x3]
    %1263 = vrot.lane.b32.xlu0 %v1260, 32
    %v1264 = vpop.permute.xlu0 %1263
    %v1265 = vsel %vm239, %v1264, 0
    %1267 = vmatprep.subr.mxu0 0.0
    %1268 = vmatpush1.msra.mxu0 0.0
    %1269 = vmatprep.subr.mxu0 0.0
    %1270 = vmatpush1.msra.mxu0 0.0
    %1271 = vmatprep.subr.mxu0 0.0
    %1272 = vmatpush1.msra.mxu0 0.0
    %1273 = vmatprep.subr.mxu0 0.0
    %1274 = vmatpush1.msra.mxu0 0.0
    %1275 = vmatprep.subr.mxu0 0.0
    %1276 = vmatpush1.msra.mxu0 0.0
    %1277 = vmatprep.subr.mxu0 0.0
    %1278 = vmatpush1.msra.mxu0 0.0
    %1279 = vmatprep.subr.mxu0 0.0
    %1280 = vmatpush1.msra.mxu0 0.0
    %1281 = vmatprep.subr.mxu0 0.0
    %1282 = vmatpush1.msra.mxu0 0.0
    %1283 = vmatprep.subr.mxu0 0.0
    %1284 = vmatpush1.msra.mxu0 0.0
    %1285 = vmatprep.subr.mxu0 0.0
    %1286 = vmatpush1.msra.mxu0 0.0
    %1287 = vmatprep.subr.mxu0 0.0
    %1288 = vmatpush1.msra.mxu0 0.0
    %1289 = vmatprep.subr.mxu0 0.0
    %1290 = vmatpush1.msra.mxu0 0.0
    %1291 = vmatprep.subr.mxu0 0.0
    %1292 = vmatpush1.msra.mxu0 %v1070
    %1293 = vmatprep.subr.mxu0 0.0
    %1294 = vmatpush1.msra.mxu0 %v1069
    %1295 = vmatprep.subr.mxu0 0.0
    %1296 = vmatpush1.msra.mxu0 %v1068
    %1297 = vmatprep.subr.mxu0 0.0
    %1298 = vmatpush1.msra.mxu0 %v1067
    %1299 = vmatprep.subr.mxu0 0.0
    %1300 = vmatpush2.msra.mxu0 0.0
    %1301 = vmatprep.subr.mxu0 0.0
    %1302 = vmatpush2.msra.mxu0 0.0
    %1303 = vmatprep.subr.mxu0 0.0
    %1304 = vmatpush2.msra.mxu0 0.0
    %1305 = vmatprep.subr.mxu0 0.0
    %1306 = vmatpush2.msra.mxu0 0.0
    %1307 = vmatprep.subr.mxu0 0.0
    %1308 = vmatpush2.msra.mxu0 0.0
    %1309 = vmatprep.subr.mxu0 0.0
    %1310 = vmatpush2.msra.mxu0 0.0
    %1311 = vmatprep.subr.mxu0 0.0
    %1312 = vmatpush2.msra.mxu0 0.0
    %1313 = vmatprep.subr.mxu0 0.0
    %1314 = vmatpush2.msra.mxu0 0.0
    %1315 = vmatprep.subr.mxu0 0.0
    %1316 = vmatpush2.msra.mxu0 0.0
    %1317 = vmatprep.subr.mxu0 0.0
    %1318 = vmatpush2.msra.mxu0 0.0
    %1319 = vmatprep.subr.mxu0 0.0
    %1320 = vmatpush2.msra.mxu0 0.0
    %1321 = vmatprep.subr.mxu0 0.0
    %1322 = vmatpush2.msra.mxu0 0.0
    %1323 = vmatprep.subr.mxu0 0.0
    %1324 = vmatpush2.msra.mxu0 0.0
    %1325 = vmatprep.subr.mxu0 0.0
    %1326 = vmatpush2.msra.mxu0 0.0
    %1327 = vmatprep.subr.mxu0 0.0
    %1328 = vmatpush2.msra.mxu0 0.0
    %1329 = vmatprep.subr.mxu0 0.0
    %1330 = vmatpush2.msra.mxu0 0.0
    %1331 = vmatprep.mubr.f32.mxu0 0.0
    %1332 = vmatmul.mubr.f32.gmra.mxu0 %v1265
    %v1333 = vpop.f32.mrf.mxu0
    %v1334 = vadd.f32 0.0, %v1333
    %v1335 = vpop.f32.mrf.mxu0
    %1336 = vdwg.mxu0
    %v1337 = vadd.f32 %v1261, %v1334
    %v1338 = vxor.u32 %v1337, 2147483648
    %v1339 = vmul.f32 %v1338, 1.442695
    %v1340 = vpow.pop %v1339
    %v1341 = vadd.f32 %v1340, 1.0
    %v1342 = vrcp.pop %v1341
    %v1343 = vmul.f32 1.0, %v1342
    %v1344 = vtanh.pop %v1337
    %v1345 = vmul.f32 %v1343, %v1254
    %1347 = vrot.lane.b32.xlu0 %v1344, 64
    %v1348 = vpop.permute.xlu0 %1347
    %v1350 = vmul.f32 %v1343, %v1348
    %1352 = vrot.lane.b32.xlu0 %v1350, 32
    %v1353 = vpop.permute.xlu0 %1352
    %v1355 = vadd.f32 %v1345, %v1353
    %v1356 = vtanh.pop %v1355
    %1358 = vrot.lane.b32.xlu0 %v1356, 64
    %v1359 = vpop.permute.xlu0 %1358
    %v1361 = vmul.f32 %v1343, %v1359
    %v1362 = vld [vmem:[#allocation3 + $0x4] sm:$0x3]
    %1364 = vrot.lane.b32.xlu0 %v1361, 32
    %v1365 = vpop.permute.xlu0 %1364
    %v1366 = vsel %vm239, %v1365, 0
    %1368 = vmatprep.subr.mxu0 0.0
    %1369 = vmatpush1.msra.mxu0 0.0
    %1370 = vmatprep.subr.mxu0 0.0
    %1371 = vmatpush1.msra.mxu0 0.0
    %1372 = vmatprep.subr.mxu0 0.0
    %1373 = vmatpush1.msra.mxu0 0.0
    %1374 = vmatprep.subr.mxu0 0.0
    %1375 = vmatpush1.msra.mxu0 0.0
    %1376 = vmatprep.subr.mxu0 0.0
    %1377 = vmatpush1.msra.mxu0 0.0
    %1378 = vmatprep.subr.mxu0 0.0
    %1379 = vmatpush1.msra.mxu0 0.0
    %1380 = vmatprep.subr.mxu0 0.0
    %1381 = vmatpush1.msra.mxu0 0.0
    %1382 = vmatprep.subr.mxu0 0.0
    %1383 = vmatpush1.msra.mxu0 0.0
    %1384 = vmatprep.subr.mxu0 0.0
    %1385 = vmatpush1.msra.mxu0 0.0
    %1386 = vmatprep.subr.mxu0 0.0
    %1387 = vmatpush1.msra.mxu0 0.0
    %1388 = vmatprep.subr.mxu0 0.0
    %1389 = vmatpush1.msra.mxu0 0.0
    %1390 = vmatprep.subr.mxu0 0.0
    %1391 = vmatpush1.msra.mxu0 0.0
    %1392 = vmatprep.subr.mxu0 0.0
    %1393 = vmatpush1.msra.mxu0 %v1070
    %1394 = vmatprep.subr.mxu0 0.0
    %1395 = vmatpush1.msra.mxu0 %v1069
    %1396 = vmatprep.subr.mxu0 0.0
    %1397 = vmatpush1.msra.mxu0 %v1068
    %1398 = vmatprep.subr.mxu0 0.0
    %1399 = vmatpush1.msra.mxu0 %v1067
    %1400 = vmatprep.subr.mxu0 0.0
    %1401 = vmatpush2.msra.mxu0 0.0
    %1402 = vmatprep.subr.mxu0 0.0
    %1403 = vmatpush2.msra.mxu0 0.0
    %1404 = vmatprep.subr.mxu0 0.0
    %1405 = vmatpush2.msra.mxu0 0.0
    %1406 = vmatprep.subr.mxu0 0.0
    %1407 = vmatpush2.msra.mxu0 0.0
    %1408 = vmatprep.subr.mxu0 0.0
    %1409 = vmatpush2.msra.mxu0 0.0
    %1410 = vmatprep.subr.mxu0 0.0
    %1411 = vmatpush2.msra.mxu0 0.0
    %1412 = vmatprep.subr.mxu0 0.0
    %1413 = vmatpush2.msra.mxu0 0.0
    %1414 = vmatprep.subr.mxu0 0.0
    %1415 = vmatpush2.msra.mxu0 0.0
    %1416 = vmatprep.subr.mxu0 0.0
    %1417 = vmatpush2.msra.mxu0 0.0
    %1418 = vmatprep.subr.mxu0 0.0
    %1419 = vmatpush2.msra.mxu0 0.0
    %1420 = vmatprep.subr.mxu0 0.0
    %1421 = vmatpush2.msra.mxu0 0.0
    %1422 = vmatprep.subr.mxu0 0.0
    %1423 = vmatpush2.msra.mxu0 0.0
    %1424 = vmatprep.subr.mxu0 0.0
    %1425 = vmatpush2.msra.mxu0 0.0
    %1426 = vmatprep.subr.mxu0 0.0
    %1427 = vmatpush2.msra.mxu0 0.0
    %1428 = vmatprep.subr.mxu0 0.0
    %1429 = vmatpush2.msra.mxu0 0.0
    %1430 = vmatprep.subr.mxu0 0.0
    %1431 = vmatpush2.msra.mxu0 0.0
    %1432 = vmatprep.mubr.f32.mxu0 0.0
    %1433 = vmatmul.mubr.f32.gmra.mxu0 %v1366
    %v1434 = vpop.f32.mrf.mxu0
    %v1435 = vadd.f32 0.0, %v1434
    %v1436 = vpop.f32.mrf.mxu0
    %1437 = vdwg.mxu0
    %v1438 = vadd.f32 %v1362, %v1435
    %v1439 = vxor.u32 %v1438, 2147483648
    %v1440 = vmul.f32 %v1439, 1.442695
    %v1441 = vpow.pop %v1440
    %v1442 = vadd.f32 %v1441, 1.0
    %v1443 = vrcp.pop %v1442
    %v1444 = vmul.f32 1.0, %v1443
    %v1445 = vtanh.pop %v1438
    %v1446 = vmul.f32 %v1444, %v1355
    %1448 = vrot.lane.b32.xlu0 %v1445, 64
    %v1449 = vpop.permute.xlu0 %1448
    %v1451 = vmul.f32 %v1444, %v1449
    %1453 = vrot.lane.b32.xlu0 %v1451, 32
    %v1454 = vpop.permute.xlu0 %1453
    %v1456 = vadd.f32 %v1446, %v1454
    %v1457 = vtanh.pop %v1456
    %1459 = vrot.lane.b32.xlu0 %v1457, 64
    %v1460 = vpop.permute.xlu0 %1459
    %v1462 = vmul.f32 %v1444, %v1460
    %v1463 = vld [vmem:[#allocation3 + $0x6] sm:$0x3]
    %1465 = vrot.lane.b32.xlu0 %v1462, 32
    %v1466 = vpop.permute.xlu0 %1465
    %v1467 = vsel %vm239, %v1466, 0
    %1469 = vmatprep.subr.mxu0 0.0
    %1470 = vmatpush1.msra.mxu0 0.0
    %1471 = vmatprep.subr.mxu0 0.0
    %1472 = vmatpush1.msra.mxu0 0.0
    %1473 = vmatprep.subr.mxu0 0.0
    %1474 = vmatpush1.msra.mxu0 0.0
    %1475 = vmatprep.subr.mxu0 0.0
    %1476 = vmatpush1.msra.mxu0 0.0
    %1477 = vmatprep.subr.mxu0 0.0
    %1478 = vmatpush1.msra.mxu0 0.0
    %1479 = vmatprep.subr.mxu0 0.0
    %1480 = vmatpush1.msra.mxu0 0.0
    %1481 = vmatprep.subr.mxu0 0.0
    %1482 = vmatpush1.msra.mxu0 0.0
    %1483 = vmatprep.subr.mxu0 0.0
    %1484 = vmatpush1.msra.mxu0 0.0
    %1485 = vmatprep.subr.mxu0 0.0
    %1486 = vmatpush1.msra.mxu0 0.0
    %1487 = vmatprep.subr.mxu0 0.0
    %1488 = vmatpush1.msra.mxu0 0.0
    %1489 = vmatprep.subr.mxu0 0.0
    %1490 = vmatpush1.msra.mxu0 0.0
    %1491 = vmatprep.subr.mxu0 0.0
    %1492 = vmatpush1.msra.mxu0 0.0
    %1493 = vmatprep.subr.mxu0 0.0
    %1494 = vmatpush1.msra.mxu0 %v1070
    %1495 = vmatprep.subr.mxu0 0.0
    %1496 = vmatpush1.msra.mxu0 %v1069
    %1497 = vmatprep.subr.mxu0 0.0
    %1498 = vmatpush1.msra.mxu0 %v1068
    %1499 = vmatprep.subr.mxu0 0.0
    %1500 = vmatpush1.msra.mxu0 %v1067
    %1501 = vmatprep.subr.mxu0 0.0
    %1502 = vmatpush2.msra.mxu0 0.0
    %1503 = vmatprep.subr.mxu0 0.0
    %1504 = vmatpush2.msra.mxu0 0.0
    %1505 = vmatprep.subr.mxu0 0.0
    %1506 = vmatpush2.msra.mxu0 0.0
    %1507 = vmatprep.subr.mxu0 0.0
    %1508 = vmatpush2.msra.mxu0 0.0
    %1509 = vmatprep.subr.mxu0 0.0
    %1510 = vmatpush2.msra.mxu0 0.0
    %1511 = vmatprep.subr.mxu0 0.0
    %1512 = vmatpush2.msra.mxu0 0.0
    %1513 = vmatprep.subr.mxu0 0.0
    %1514 = vmatpush2.msra.mxu0 0.0
    %1515 = vmatprep.subr.mxu0 0.0
    %1516 = vmatpush2.msra.mxu0 0.0
    %1517 = vmatprep.subr.mxu0 0.0
    %1518 = vmatpush2.msra.mxu0 0.0
    %1519 = vmatprep.subr.mxu0 0.0
    %1520 = vmatpush2.msra.mxu0 0.0
    %1521 = vmatprep.subr.mxu0 0.0
    %1522 = vmatpush2.msra.mxu0 0.0
    %1523 = vmatprep.subr.mxu0 0.0
    %1524 = vmatpush2.msra.mxu0 0.0
    %1525 = vmatprep.subr.mxu0 0.0
    %1526 = vmatpush2.msra.mxu0 0.0
    %1527 = vmatprep.subr.mxu0 0.0
    %1528 = vmatpush2.msra.mxu0 0.0
    %1529 = vmatprep.subr.mxu0 0.0
    %1530 = vmatpush2.msra.mxu0 0.0
    %1531 = vmatprep.subr.mxu0 0.0
    %1532 = vmatpush2.msra.mxu0 0.0
    %1533 = vmatprep.mubr.f32.mxu0 0.0
    %1534 = vmatmul.mubr.f32.gmra.mxu0 %v1467
    %v1535 = vpop.f32.mrf.mxu0
    %v1536 = vadd.f32 0.0, %v1535
    %v1537 = vpop.f32.mrf.mxu0
    %1538 = vdwg.mxu0
    %v1539 = vadd.f32 %v1463, %v1536
    %v1540 = vxor.u32 %v1539, 2147483648
    %v1541 = vmul.f32 %v1540, 1.442695
    %v1542 = vpow.pop %v1541
    %v1543 = vadd.f32 %v1542, 1.0
    %v1544 = vrcp.pop %v1543
    %v1545 = vmul.f32 1.0, %v1544
    %v1546 = vtanh.pop %v1539
    %v1547 = vmul.f32 %v1545, %v1456
    %1549 = vrot.lane.b32.xlu0 %v1546, 64
    %v1550 = vpop.permute.xlu0 %1549
    %v1552 = vmul.f32 %v1545, %v1550
    %1554 = vrot.lane.b32.xlu0 %v1552, 32
    %v1555 = vpop.permute.xlu0 %1554
    %v1557 = vadd.f32 %v1547, %v1555
    %v1558 = vtanh.pop %v1557
    %1560 = vrot.lane.b32.xlu0 %v1558, 64
    %v1561 = vpop.permute.xlu0 %1560
    %v1563 = vmul.f32 %v1545, %v1561
    %v1564 = vld [vmem:[#allocation3 + $0x8] sm:$0x3]
    %1566 = vrot.lane.b32.xlu0 %v1563, 32
    %v1567 = vpop.permute.xlu0 %1566
    %v1568 = vsel %vm239, %v1567, 0
    %1570 = vmatprep.subr.mxu0 0.0
    %1571 = vmatpush1.msra.mxu0 0.0
    %1572 = vmatprep.subr.mxu0 0.0
    %1573 = vmatpush1.msra.mxu0 0.0
    %1574 = vmatprep.subr.mxu0 0.0
    %1575 = vmatpush1.msra.mxu0 0.0
    %1576 = vmatprep.subr.mxu0 0.0
    %1577 = vmatpush1.msra.mxu0 0.0
    %1578 = vmatprep.subr.mxu0 0.0
    %1579 = vmatpush1.msra.mxu0 0.0
    %1580 = vmatprep.subr.mxu0 0.0
    %1581 = vmatpush1.msra.mxu0 0.0
    %1582 = vmatprep.subr.mxu0 0.0
    %1583 = vmatpush1.msra.mxu0 0.0
    %1584 = vmatprep.subr.mxu0 0.0
    %1585 = vmatpush1.msra.mxu0 0.0
    %1586 = vmatprep.subr.mxu0 0.0
    %1587 = vmatpush1.msra.mxu0 0.0
    %1588 = vmatprep.subr.mxu0 0.0
    %1589 = vmatpush1.msra.mxu0 0.0
    %1590 = vmatprep.subr.mxu0 0.0
    %1591 = vmatpush1.msra.mxu0 0.0
    %1592 = vmatprep.subr.mxu0 0.0
    %1593 = vmatpush1.msra.mxu0 0.0
    %1594 = vmatprep.subr.mxu0 0.0
    %1595 = vmatpush1.msra.mxu0 %v1070
    %1596 = vmatprep.subr.mxu0 0.0
    %1597 = vmatpush1.msra.mxu0 %v1069
    %1598 = vmatprep.subr.mxu0 0.0
    %1599 = vmatpush1.msra.mxu0 %v1068
    %1600 = vmatprep.subr.mxu0 0.0
    %1601 = vmatpush1.msra.mxu0 %v1067
    %1602 = vmatprep.subr.mxu0 0.0
    %1603 = vmatpush2.msra.mxu0 0.0
    %1604 = vmatprep.subr.mxu0 0.0
    %1605 = vmatpush2.msra.mxu0 0.0
    %1606 = vmatprep.subr.mxu0 0.0
    %1607 = vmatpush2.msra.mxu0 0.0
    %1608 = vmatprep.subr.mxu0 0.0
    %1609 = vmatpush2.msra.mxu0 0.0
    %1610 = vmatprep.subr.mxu0 0.0
    %1611 = vmatpush2.msra.mxu0 0.0
    %1612 = vmatprep.subr.mxu0 0.0
    %1613 = vmatpush2.msra.mxu0 0.0
    %1614 = vmatprep.subr.mxu0 0.0
    %1615 = vmatpush2.msra.mxu0 0.0
    %1616 = vmatprep.subr.mxu0 0.0
    %1617 = vmatpush2.msra.mxu0 0.0
    %1618 = vmatprep.subr.mxu0 0.0
    %1619 = vmatpush2.msra.mxu0 0.0
    %1620 = vmatprep.subr.mxu0 0.0
    %1621 = vmatpush2.msra.mxu0 0.0
    %1622 = vmatprep.subr.mxu0 0.0
    %1623 = vmatpush2.msra.mxu0 0.0
    %1624 = vmatprep.subr.mxu0 0.0
    %1625 = vmatpush2.msra.mxu0 0.0
    %1626 = vmatprep.subr.mxu0 0.0
    %1627 = vmatpush2.msra.mxu0 0.0
    %1628 = vmatprep.subr.mxu0 0.0
    %1629 = vmatpush2.msra.mxu0 0.0
    %1630 = vmatprep.subr.mxu0 0.0
    %1631 = vmatpush2.msra.mxu0 0.0
    %1632 = vmatprep.subr.mxu0 0.0
    %1633 = vmatpush2.msra.mxu0 0.0
    %1634 = vmatprep.mubr.f32.mxu0 0.0
    %1635 = vmatmul.mubr.f32.gmra.mxu0 %v1568
    %v1636 = vpop.f32.mrf.mxu0
    %v1637 = vadd.f32 0.0, %v1636
    %v1638 = vpop.f32.mrf.mxu0
    %1639 = vdwg.mxu0
    %v1640 = vadd.f32 %v1564, %v1637
    %v1641 = vxor.u32 %v1640, 2147483648
    %v1642 = vmul.f32 %v1641, 1.442695
    %v1643 = vpow.pop %v1642
    %v1644 = vadd.f32 %v1643, 1.0
    %v1645 = vrcp.pop %v1644
    %v1646 = vmul.f32 1.0, %v1645
    %v1647 = vtanh.pop %v1640
    %v1648 = vmul.f32 %v1646, %v1557
    %1650 = vrot.lane.b32.xlu0 %v1647, 64
    %v1651 = vpop.permute.xlu0 %1650
    %v1653 = vmul.f32 %v1646, %v1651
    %1655 = vrot.lane.b32.xlu0 %v1653, 32
    %v1656 = vpop.permute.xlu0 %1655
    %v1658 = vadd.f32 %v1648, %v1656
    %v1659 = vtanh.pop %v1658
    %1661 = vrot.lane.b32.xlu0 %v1659, 64
    %v1662 = vpop.permute.xlu0 %1661
    %v1664 = vmul.f32 %v1646, %v1662
    %v1665 = vld [vmem:[#allocation3 + $0xa] sm:$0x3]
    %1667 = vrot.lane.b32.xlu0 %v1664, 32
    %v1668 = vpop.permute.xlu0 %1667
    %v1669 = vsel %vm239, %v1668, 0
    %1671 = vmatprep.subr.mxu0 0.0
    %1672 = vmatpush1.msra.mxu0 0.0
    %1673 = vmatprep.subr.mxu0 0.0
    %1674 = vmatpush1.msra.mxu0 0.0
    %1675 = vmatprep.subr.mxu0 0.0
    %1676 = vmatpush1.msra.mxu0 0.0
    %1677 = vmatprep.subr.mxu0 0.0
    %1678 = vmatpush1.msra.mxu0 0.0
    %1679 = vmatprep.subr.mxu0 0.0
    %1680 = vmatpush1.msra.mxu0 0.0
    %1681 = vmatprep.subr.mxu0 0.0
    %1682 = vmatpush1.msra.mxu0 0.0
    %1683 = vmatprep.subr.mxu0 0.0
    %1684 = vmatpush1.msra.mxu0 0.0
    %1685 = vmatprep.subr.mxu0 0.0
    %1686 = vmatpush1.msra.mxu0 0.0
    %1687 = vmatprep.subr.mxu0 0.0
    %1688 = vmatpush1.msra.mxu0 0.0
    %1689 = vmatprep.subr.mxu0 0.0
    %1690 = vmatpush1.msra.mxu0 0.0
    %1691 = vmatprep.subr.mxu0 0.0
    %1692 = vmatpush1.msra.mxu0 0.0
    %1693 = vmatprep.subr.mxu0 0.0
    %1694 = vmatpush1.msra.mxu0 0.0
    %1695 = vmatprep.subr.mxu0 0.0
    %1696 = vmatpush1.msra.mxu0 %v1070
    %1697 = vmatprep.subr.mxu0 0.0
    %1698 = vmatpush1.msra.mxu0 %v1069
    %1699 = vmatprep.subr.mxu0 0.0
    %1700 = vmatpush1.msra.mxu0 %v1068
    %1701 = vmatprep.subr.mxu0 0.0
    %1702 = vmatpush1.msra.mxu0 %v1067
    %1703 = vmatprep.subr.mxu0 0.0
    %1704 = vmatpush2.msra.mxu0 0.0
    %1705 = vmatprep.subr.mxu0 0.0
    %1706 = vmatpush2.msra.mxu0 0.0
    %1707 = vmatprep.subr.mxu0 0.0
    %1708 = vmatpush2.msra.mxu0 0.0
    %1709 = vmatprep.subr.mxu0 0.0
    %1710 = vmatpush2.msra.mxu0 0.0
    %1711 = vmatprep.subr.mxu0 0.0
    %1712 = vmatpush2.msra.mxu0 0.0
    %1713 = vmatprep.subr.mxu0 0.0
    %1714 = vmatpush2.msra.mxu0 0.0
    %1715 = vmatprep.subr.mxu0 0.0
    %1716 = vmatpush2.msra.mxu0 0.0
    %1717 = vmatprep.subr.mxu0 0.0
    %1718 = vmatpush2.msra.mxu0 0.0
    %1719 = vmatprep.subr.mxu0 0.0
    %1720 = vmatpush2.msra.mxu0 0.0
    %1721 = vmatprep.subr.mxu0 0.0
    %1722 = vmatpush2.msra.mxu0 0.0
    %1723 = vmatprep.subr.mxu0 0.0
    %1724 = vmatpush2.msra.mxu0 0.0
    %1725 = vmatprep.subr.mxu0 0.0
    %1726 = vmatpush2.msra.mxu0 0.0
    %1727 = vmatprep.subr.mxu0 0.0
    %1728 = vmatpush2.msra.mxu0 0.0
    %1729 = vmatprep.subr.mxu0 0.0
    %1730 = vmatpush2.msra.mxu0 0.0
    %1731 = vmatprep.subr.mxu0 0.0
    %1732 = vmatpush2.msra.mxu0 0.0
    %1733 = vmatprep.subr.mxu0 0.0
    %1734 = vmatpush2.msra.mxu0 0.0
    %1735 = vmatprep.mubr.f32.mxu0 0.0
    %1736 = vmatmul.mubr.f32.gmra.mxu0 %v1669
    %v1737 = vpop.f32.mrf.mxu0
    %v1738 = vadd.f32 0.0, %v1737
    %v1739 = vpop.f32.mrf.mxu0
    %1740 = vdwg.mxu0
    %v1741 = vadd.f32 %v1665, %v1738
    %v1742 = vxor.u32 %v1741, 2147483648
    %v1743 = vmul.f32 %v1742, 1.442695
    %v1744 = vpow.pop %v1743
    %v1745 = vadd.f32 %v1744, 1.0
    %v1746 = vrcp.pop %v1745
    %v1747 = vmul.f32 1.0, %v1746
    %v1748 = vtanh.pop %v1741
    %v1749 = vmul.f32 %v1747, %v1658
    %1751 = vrot.lane.b32.xlu0 %v1748, 64
    %v1752 = vpop.permute.xlu0 %1751
    %v1754 = vmul.f32 %v1747, %v1752
    %1756 = vrot.lane.b32.xlu0 %v1754, 32
    %v1757 = vpop.permute.xlu0 %1756
    %v1759 = vadd.f32 %v1749, %v1757
    %v1760 = vtanh.pop %v1759
    %1762 = vrot.lane.b32.xlu0 %v1760, 64
    %v1763 = vpop.permute.xlu0 %1762
    %v1765 = vmul.f32 %v1747, %v1763
    %v1766 = vld [vmem:[#allocation3 + $0xc] sm:$0x3]
    %1768 = vrot.lane.b32.xlu0 %v1765, 32
    %v1769 = vpop.permute.xlu0 %1768
    %v1770 = vsel %vm239, %v1769, 0
    %1772 = vmatprep.subr.mxu0 0.0
    %1773 = vmatpush1.msra.mxu0 0.0
    %1774 = vmatprep.subr.mxu0 0.0
    %1775 = vmatpush1.msra.mxu0 0.0
    %1776 = vmatprep.subr.mxu0 0.0
    %1777 = vmatpush1.msra.mxu0 0.0
    %1778 = vmatprep.subr.mxu0 0.0
    %1779 = vmatpush1.msra.mxu0 0.0
    %1780 = vmatprep.subr.mxu0 0.0
    %1781 = vmatpush1.msra.mxu0 0.0
    %1782 = vmatprep.subr.mxu0 0.0
    %1783 = vmatpush1.msra.mxu0 0.0
    %1784 = vmatprep.subr.mxu0 0.0
    %1785 = vmatpush1.msra.mxu0 0.0
    %1786 = vmatprep.subr.mxu0 0.0
    %1787 = vmatpush1.msra.mxu0 0.0
    %1788 = vmatprep.subr.mxu0 0.0
    %1789 = vmatpush1.msra.mxu0 0.0
    %1790 = vmatprep.subr.mxu0 0.0
    %1791 = vmatpush1.msra.mxu0 0.0
    %1792 = vmatprep.subr.mxu0 0.0
    %1793 = vmatpush1.msra.mxu0 0.0
    %1794 = vmatprep.subr.mxu0 0.0
    %1795 = vmatpush1.msra.mxu0 0.0
    %1796 = vmatprep.subr.mxu0 0.0
    %1797 = vmatpush1.msra.mxu0 %v1070
    %1798 = vmatprep.subr.mxu0 0.0
    %1799 = vmatpush1.msra.mxu0 %v1069
    %1800 = vmatprep.subr.mxu0 0.0
    %1801 = vmatpush1.msra.mxu0 %v1068
    %1802 = vmatprep.subr.mxu0 0.0
    %1803 = vmatpush1.msra.mxu0 %v1067
    %1804 = vmatprep.subr.mxu0 0.0
    %1805 = vmatpush2.msra.mxu0 0.0
    %1806 = vmatprep.subr.mxu0 0.0
    %1807 = vmatpush2.msra.mxu0 0.0
    %1808 = vmatprep.subr.mxu0 0.0
    %1809 = vmatpush2.msra.mxu0 0.0
    %1810 = vmatprep.subr.mxu0 0.0
    %1811 = vmatpush2.msra.mxu0 0.0
    %1812 = vmatprep.subr.mxu0 0.0
    %1813 = vmatpush2.msra.mxu0 0.0
    %1814 = vmatprep.subr.mxu0 0.0
    %1815 = vmatpush2.msra.mxu0 0.0
    %1816 = vmatprep.subr.mxu0 0.0
    %1817 = vmatpush2.msra.mxu0 0.0
    %1818 = vmatprep.subr.mxu0 0.0
    %1819 = vmatpush2.msra.mxu0 0.0
    %1820 = vmatprep.subr.mxu0 0.0
    %1821 = vmatpush2.msra.mxu0 0.0
    %1822 = vmatprep.subr.mxu0 0.0
    %1823 = vmatpush2.msra.mxu0 0.0
    %1824 = vmatprep.subr.mxu0 0.0
    %1825 = vmatpush2.msra.mxu0 0.0
    %1826 = vmatprep.subr.mxu0 0.0
    %1827 = vmatpush2.msra.mxu0 0.0
    %1828 = vmatprep.subr.mxu0 0.0
    %1829 = vmatpush2.msra.mxu0 0.0
    %1830 = vmatprep.subr.mxu0 0.0
    %1831 = vmatpush2.msra.mxu0 0.0
    %1832 = vmatprep.subr.mxu0 0.0
    %1833 = vmatpush2.msra.mxu0 0.0
    %1834 = vmatprep.subr.mxu0 0.0
    %1835 = vmatpush2.msra.mxu0 0.0
    %1836 = vmatprep.mubr.f32.mxu0 0.0
    %1837 = vmatmul.mubr.f32.gmra.mxu0 %v1770
    %v1838 = vpop.f32.mrf.mxu0
    %v1839 = vadd.f32 0.0, %v1838
    %v1840 = vpop.f32.mrf.mxu0
    %1841 = vdwg.mxu0
    %v1842 = vadd.f32 %v1766, %v1839
    %v1843 = vxor.u32 %v1842, 2147483648
    %v1844 = vmul.f32 %v1843, 1.442695
    %v1845 = vpow.pop %v1844
    %v1846 = vadd.f32 %v1845, 1.0
    %v1847 = vrcp.pop %v1846
    %v1848 = vmul.f32 1.0, %v1847
    %v1849 = vtanh.pop %v1842
    %v1850 = vmul.f32 %v1848, %v1759
    %1852 = vrot.lane.b32.xlu0 %v1849, 64
    %v1853 = vpop.permute.xlu0 %1852
    %v1855 = vmul.f32 %v1848, %v1853
    %1857 = vrot.lane.b32.xlu0 %v1855, 32
    %v1858 = vpop.permute.xlu0 %1857
    %v1860 = vadd.f32 %v1850, %v1858
    %v1861 = vtanh.pop %v1860
    %1863 = vrot.lane.b32.xlu0 %v1861, 64
    %v1864 = vpop.permute.xlu0 %1863
    %v1866 = vmul.f32 %v1848, %v1864
    %v1867 = vld [vmem:[#allocation3 + $0xe] sm:$0x3]
    %1869 = vrot.lane.b32.xlu0 %v1866, 32
    %v1870 = vpop.permute.xlu0 %1869
    %v1871 = vsel %vm239, %v1870, 0
    %1873 = vmatprep.subr.mxu0 0.0
    %1874 = vmatpush1.msra.mxu0 0.0
    %1875 = vmatprep.subr.mxu0 0.0
    %1876 = vmatpush1.msra.mxu0 0.0
    %1877 = vmatprep.subr.mxu0 0.0
    %1878 = vmatpush1.msra.mxu0 0.0
    %1879 = vmatprep.subr.mxu0 0.0
    %1880 = vmatpush1.msra.mxu0 0.0
    %1881 = vmatprep.subr.mxu0 0.0
    %1882 = vmatpush1.msra.mxu0 0.0
    %1883 = vmatprep.subr.mxu0 0.0
    %1884 = vmatpush1.msra.mxu0 0.0
    %1885 = vmatprep.subr.mxu0 0.0
    %1886 = vmatpush1.msra.mxu0 0.0
    %1887 = vmatprep.subr.mxu0 0.0
    %1888 = vmatpush1.msra.mxu0 0.0
    %1889 = vmatprep.subr.mxu0 0.0
    %1890 = vmatpush1.msra.mxu0 0.0
    %1891 = vmatprep.subr.mxu0 0.0
    %1892 = vmatpush1.msra.mxu0 0.0
    %1893 = vmatprep.subr.mxu0 0.0
    %1894 = vmatpush1.msra.mxu0 0.0
    %1895 = vmatprep.subr.mxu0 0.0
    %1896 = vmatpush1.msra.mxu0 0.0
    %1897 = vmatprep.subr.mxu0 0.0
    %1898 = vmatpush1.msra.mxu0 %v1070
    %1899 = vmatprep.subr.mxu0 0.0
    %1900 = vmatpush1.msra.mxu0 %v1069
    %1901 = vmatprep.subr.mxu0 0.0
    %1902 = vmatpush1.msra.mxu0 %v1068
    %1903 = vmatprep.subr.mxu0 0.0
    %1904 = vmatpush1.msra.mxu0 %v1067
    %1905 = vmatprep.subr.mxu0 0.0
    %1906 = vmatpush2.msra.mxu0 0.0
    %1907 = vmatprep.subr.mxu0 0.0
    %1908 = vmatpush2.msra.mxu0 0.0
    %1909 = vmatprep.subr.mxu0 0.0
    %1910 = vmatpush2.msra.mxu0 0.0
    %1911 = vmatprep.subr.mxu0 0.0
    %1912 = vmatpush2.msra.mxu0 0.0
    %1913 = vmatprep.subr.mxu0 0.0
    %1914 = vmatpush2.msra.mxu0 0.0
    %1915 = vmatprep.subr.mxu0 0.0
    %1916 = vmatpush2.msra.mxu0 0.0
    %1917 = vmatprep.subr.mxu0 0.0
    %1918 = vmatpush2.msra.mxu0 0.0
    %1919 = vmatprep.subr.mxu0 0.0
    %1920 = vmatpush2.msra.mxu0 0.0
    %1921 = vmatprep.subr.mxu0 0.0
    %1922 = vmatpush2.msra.mxu0 0.0
    %1923 = vmatprep.subr.mxu0 0.0
    %1924 = vmatpush2.msra.mxu0 0.0
    %1925 = vmatprep.subr.mxu0 0.0
    %1926 = vmatpush2.msra.mxu0 0.0
    %1927 = vmatprep.subr.mxu0 0.0
    %1928 = vmatpush2.msra.mxu0 0.0
    %1929 = vmatprep.subr.mxu0 0.0
    %1930 = vmatpush2.msra.mxu0 0.0
    %1931 = vmatprep.subr.mxu0 0.0
    %1932 = vmatpush2.msra.mxu0 0.0
    %1933 = vmatprep.subr.mxu0 0.0
    %1934 = vmatpush2.msra.mxu0 0.0
    %1935 = vmatprep.subr.mxu0 0.0
    %1936 = vmatpush2.msra.mxu0 0.0
    %1937 = vmatprep.mubr.f32.mxu0 0.0
    %1938 = vmatmul.mubr.f32.gmra.mxu0 %v1871
    %v1939 = vpop.f32.mrf.mxu0
    %v1940 = vadd.f32 0.0, %v1939
    %v1941 = vpop.f32.mrf.mxu0
    %1942 = vdwg.mxu0
    %v1943 = vadd.f32 %v1867, %v1940
    %v1944 = vxor.u32 %v1943, 2147483648
    %v1945 = vmul.f32 %v1944, 1.442695
    %v1946 = vpow.pop %v1945
    %v1947 = vadd.f32 %v1946, 1.0
    %v1948 = vrcp.pop %v1947
    %v1949 = vmul.f32 1.0, %v1948
    %v1950 = vtanh.pop %v1943
    %v1951 = vmul.f32 %v1949, %v1860
    %1953 = vrot.lane.b32.xlu0 %v1950, 64
    %v1954 = vpop.permute.xlu0 %1953
    %v1956 = vmul.f32 %v1949, %v1954
    %1958 = vrot.lane.b32.xlu0 %v1956, 32
    %v1959 = vpop.permute.xlu0 %1958
    %v1961 = vadd.f32 %v1951, %v1959
    %v1962 = vtanh.pop %v1961
    %1964 = vrot.lane.b32.xlu0 %v1962, 64
    %v1965 = vpop.permute.xlu0 %1964
    %v1967 = vmul.f32 %v1949, %v1965
    %v1968 = vld [vmem:[%s1] sm:$0xff]
    %v1969 = vld [vmem:[%s1 + $0x8] sm:$0x3]
    %v1970 = vld [vmem:[#allocation11] sm:$0xff]
    %v1971 = vld [vmem:[#allocation11 + $0x8] sm:$0xff]
    %v1972 = vld [vmem:[#allocation11 + $0x10] sm:$0xff]
    %v1973 = vld [vmem:[#allocation11 + $0x18] sm:$0xff]
    %v1974 = vld [vmem:[#allocation9] sm:$0xff]
    %v1975 = vld [vmem:[%s10] sm:$0x1]
    %v1977 = vlaneseq
    %v1978 = vshrl.u32 %v1977, 7
    %v1979 = vsub.s32 0, %v1978
    %v1980 = vrot.slane %v1975, %v1979
    %v1983 = vsel %vm154, %v1968, 0
    %v1986 = vsel %vm154, %v1969, 0
    %1988 = vmatprep.subr.mxu0 0.0
    %1989 = vmatpush1.msra.mxu0 0.0
    %1990 = vmatprep.subr.mxu0 0.0
    %1991 = vmatpush1.msra.mxu0 0.0
    %1992 = vmatprep.subr.mxu0 0.0
    %1993 = vmatpush1.msra.mxu0 0.0
    %1994 = vmatprep.subr.mxu0 0.0
    %1995 = vmatpush1.msra.mxu0 0.0
    %1996 = vmatprep.subr.mxu0 0.0
    %1997 = vmatpush1.msra.mxu0 0.0
    %1998 = vmatprep.subr.mxu0 0.0
    %1999 = vmatpush1.msra.mxu0 0.0
    %2000 = vmatprep.subr.mxu0 0.0
    %2001 = vmatpush1.msra.mxu0 0.0
    %2002 = vmatprep.subr.mxu0 0.0
    %2003 = vmatpush1.msra.mxu0 0.0
    %2004 = vmatprep.subr.mxu0 0.0
    %2005 = vmatpush1.msra.mxu0 0.0
    %2006 = vmatprep.subr.mxu0 0.0
    %2007 = vmatpush1.msra.mxu0 0.0
    %2008 = vmatprep.subr.mxu0 0.0
    %2009 = vmatpush1.msra.mxu0 0.0
    %2010 = vmatprep.subr.mxu0 0.0
    %2011 = vmatpush1.msra.mxu0 0.0
    %2012 = vmatprep.subr.mxu0 0.0
    %2013 = vmatpush1.msra.mxu0 0.0
    %2014 = vmatprep.subr.mxu0 0.0
    %2015 = vmatpush1.msra.mxu0 0.0
    %2016 = vmatprep.subr.mxu0 0.0
    %2017 = vmatpush1.msra.mxu0 0.0
    %2018 = vmatprep.subr.mxu0 0.0
    %2019 = vmatpush1.msra.mxu0 %v1974
    %2020 = vmatprep.subr.mxu0 0.0
    %2021 = vmatpush2.msra.mxu0 0.0
    %2022 = vmatprep.subr.mxu0 0.0
    %2023 = vmatpush2.msra.mxu0 0.0
    %2024 = vmatprep.subr.mxu0 0.0
    %2025 = vmatpush2.msra.mxu0 0.0
    %2026 = vmatprep.subr.mxu0 0.0
    %2027 = vmatpush2.msra.mxu0 0.0
    %2028 = vmatprep.subr.mxu0 0.0
    %2029 = vmatpush2.msra.mxu0 0.0
    %2030 = vmatprep.subr.mxu0 0.0
    %2031 = vmatpush2.msra.mxu0 0.0
    %2032 = vmatprep.subr.mxu0 0.0
    %2033 = vmatpush2.msra.mxu0 0.0
    %2034 = vmatprep.subr.mxu0 0.0
    %2035 = vmatpush2.msra.mxu0 0.0
    %2036 = vmatprep.subr.mxu0 0.0
    %2037 = vmatpush2.msra.mxu0 0.0
    %2038 = vmatprep.subr.mxu0 0.0
    %2039 = vmatpush2.msra.mxu0 0.0
    %2040 = vmatprep.subr.mxu0 0.0
    %2041 = vmatpush2.msra.mxu0 0.0
    %2042 = vmatprep.subr.mxu0 0.0
    %2043 = vmatpush2.msra.mxu0 0.0
    %2044 = vmatprep.subr.mxu0 0.0
    %2045 = vmatpush2.msra.mxu0 0.0
    %2046 = vmatprep.subr.mxu0 0.0
    %2047 = vmatpush2.msra.mxu0 0.0
    %2048 = vmatprep.subr.mxu0 0.0
    %2049 = vmatpush2.msra.mxu0 0.0
    %2050 = vmatprep.subr.mxu0 0.0
    %2051 = vmatpush2.msra.mxu0 0.0
    %2052 = vmatprep.mubr.f32.mxu0 0.0
    %2053 = vmatmul.mubr.f32.gmra.mxu0 %v1983
    %v2054 = vpop.f32.mrf.mxu0
    %v2055 = vadd.f32 %v1980, %v2054
    %v2056 = vpop.f32.mrf.mxu0
    %2057 = vmatprep.mubr.f32.mxu0 0.0
    %2058 = vmatmul.mubr.f32.gmra.mxu0 %v1986
    %v2059 = vpop.f32.mrf.mxu0
    %v2060 = vadd.f32 %v1980, %v2059
    %v2061 = vpop.f32.mrf.mxu0
    %2062 = vdwg.mxu0
    %2063 = vst [vmem:[#allocation3] sm:$0xff] %v2055
    %2064 = vst [vmem:[#allocation3 + $0x8] sm:$0x3] %v2060
    %v2065 = vld [vmem:[#allocation3] sm:$0x3]
    %v2066 = vsel %vm239, %v1062, 0
    %2068 = vmatprep.subr.mxu0 0.0
    %2069 = vmatpush1.msra.mxu0 0.0
    %2070 = vmatprep.subr.mxu0 0.0
    %2071 = vmatpush1.msra.mxu0 0.0
    %2072 = vmatprep.subr.mxu0 0.0
    %2073 = vmatpush1.msra.mxu0 0.0
    %2074 = vmatprep.subr.mxu0 0.0
    %2075 = vmatpush1.msra.mxu0 0.0
    %2076 = vmatprep.subr.mxu0 0.0
    %2077 = vmatpush1.msra.mxu0 0.0
    %2078 = vmatprep.subr.mxu0 0.0
    %2079 = vmatpush1.msra.mxu0 0.0
    %2080 = vmatprep.subr.mxu0 0.0
    %2081 = vmatpush1.msra.mxu0 0.0
    %2082 = vmatprep.subr.mxu0 0.0
    %2083 = vmatpush1.msra.mxu0 0.0
    %2084 = vmatprep.subr.mxu0 0.0
    %2085 = vmatpush1.msra.mxu0 0.0
    %2086 = vmatprep.subr.mxu0 0.0
    %2087 = vmatpush1.msra.mxu0 0.0
    %2088 = vmatprep.subr.mxu0 0.0
    %2089 = vmatpush1.msra.mxu0 0.0
    %2090 = vmatprep.subr.mxu0 0.0
    %2091 = vmatpush1.msra.mxu0 0.0
    %2092 = vmatprep.subr.mxu0 0.0
    %2093 = vmatpush1.msra.mxu0 %v1973
    %2094 = vmatprep.subr.mxu0 0.0
    %2095 = vmatpush1.msra.mxu0 %v1972
    %2096 = vmatprep.subr.mxu0 0.0
    %2097 = vmatpush1.msra.mxu0 %v1971
    %2098 = vmatprep.subr.mxu0 0.0
    %2099 = vmatpush1.msra.mxu0 %v1970
    %2100 = vmatprep.subr.mxu0 0.0
    %2101 = vmatpush2.msra.mxu0 0.0
    %2102 = vmatprep.subr.mxu0 0.0
    %2103 = vmatpush2.msra.mxu0 0.0
    %2104 = vmatprep.subr.mxu0 0.0
    %2105 = vmatpush2.msra.mxu0 0.0
    %2106 = vmatprep.subr.mxu0 0.0
    %2107 = vmatpush2.msra.mxu0 0.0
    %2108 = vmatprep.subr.mxu0 0.0
    %2109 = vmatpush2.msra.mxu0 0.0
    %2110 = vmatprep.subr.mxu0 0.0
    %2111 = vmatpush2.msra.mxu0 0.0
    %2112 = vmatprep.subr.mxu0 0.0
    %2113 = vmatpush2.msra.mxu0 0.0
    %2114 = vmatprep.subr.mxu0 0.0
    %2115 = vmatpush2.msra.mxu0 0.0
    %2116 = vmatprep.subr.mxu0 0.0
    %2117 = vmatpush2.msra.mxu0 0.0
    %2118 = vmatprep.subr.mxu0 0.0
    %2119 = vmatpush2.msra.mxu0 0.0
    %2120 = vmatprep.subr.mxu0 0.0
    %2121 = vmatpush2.msra.mxu0 0.0
    %2122 = vmatprep.subr.mxu0 0.0
    %2123 = vmatpush2.msra.mxu0 0.0
    %2124 = vmatprep.subr.mxu0 0.0
    %2125 = vmatpush2.msra.mxu0 0.0
    %2126 = vmatprep.subr.mxu0 0.0
    %2127 = vmatpush2.msra.mxu0 0.0
    %2128 = vmatprep.subr.mxu0 0.0
    %2129 = vmatpush2.msra.mxu0 0.0
    %2130 = vmatprep.subr.mxu0 0.0
    %2131 = vmatpush2.msra.mxu0 0.0
    %2132 = vmatprep.mubr.f32.mxu0 0.0
    %2133 = vmatmul.mubr.f32.gmra.mxu0 %v2066
    %v2134 = vpop.f32.mrf.mxu0
    %v2135 = vadd.f32 0.0, %v2134
    %v2136 = vpop.f32.mrf.mxu0
    %2137 = vdwg.mxu0
    %v2138 = vadd.f32 %v2065, %v2135
    %v2139 = vxor.u32 %v2138, 2147483648
    %v2140 = vmul.f32 %v2139, 1.442695
    %v2141 = vpow.pop %v2140
    %v2142 = vadd.f32 %v2141, 1.0
    %v2143 = vrcp.pop %v2142
    %v2144 = vmul.f32 1.0, %v2143
    %v2145 = vtanh.pop %v2138
    %v2146 = vmul.f32 %v2144, %v1053
    %2148 = vrot.lane.b32.xlu0 %v2145, 64
    %v2149 = vpop.permute.xlu0 %2148
    %v2151 = vmul.f32 %v2144, %v2149
    %2153 = vrot.lane.b32.xlu0 %v2151, 32
    %v2154 = vpop.permute.xlu0 %2153
    %v2156 = vadd.f32 %v2146, %v2154
    %v2157 = vtanh.pop %v2156
    %2159 = vrot.lane.b32.xlu0 %v2157, 64
    %v2160 = vpop.permute.xlu0 %2159
    %v2162 = vmul.f32 %v2144, %v2160
    %2164 = vrot.lane.b32.xlu0 %v2162, 32
    %v2165 = vpop.permute.xlu0 %2164
    %2167 = vst.msk [vmem:[#allocation2] sm:$0x3] %vm342, %v2165
    %v2168 = vld [vmem:[#allocation3 + $0x2] sm:$0x3]
    %v2169 = vsel %vm239, %v2165, 0
    %2171 = vmatprep.subr.mxu0 0.0
    %2172 = vmatpush1.msra.mxu0 0.0
    %2173 = vmatprep.subr.mxu0 0.0
    %2174 = vmatpush1.msra.mxu0 0.0
    %2175 = vmatprep.subr.mxu0 0.0
    %2176 = vmatpush1.msra.mxu0 0.0
    %2177 = vmatprep.subr.mxu0 0.0
    %2178 = vmatpush1.msra.mxu0 0.0
    %2179 = vmatprep.subr.mxu0 0.0
    %2180 = vmatpush1.msra.mxu0 0.0
    %2181 = vmatprep.subr.mxu0 0.0
    %2182 = vmatpush1.msra.mxu0 0.0
    %2183 = vmatprep.subr.mxu0 0.0
    %2184 = vmatpush1.msra.mxu0 0.0
    %2185 = vmatprep.subr.mxu0 0.0
    %2186 = vmatpush1.msra.mxu0 0.0
    %2187 = vmatprep.subr.mxu0 0.0
    %2188 = vmatpush1.msra.mxu0 0.0
    %2189 = vmatprep.subr.mxu0 0.0
    %2190 = vmatpush1.msra.mxu0 0.0
    %2191 = vmatprep.subr.mxu0 0.0
    %2192 = vmatpush1.msra.mxu0 0.0
    %2193 = vmatprep.subr.mxu0 0.0
    %2194 = vmatpush1.msra.mxu0 0.0
    %2195 = vmatprep.subr.mxu0 0.0
    %2196 = vmatpush1.msra.mxu0 %v1973
    %2197 = vmatprep.subr.mxu0 0.0
    %2198 = vmatpush1.msra.mxu0 %v1972
    %2199 = vmatprep.subr.mxu0 0.0
    %2200 = vmatpush1.msra.mxu0 %v1971
    %2201 = vmatprep.subr.mxu0 0.0
    %2202 = vmatpush1.msra.mxu0 %v1970
    %2203 = vmatprep.subr.mxu0 0.0
    %2204 = vmatpush2.msra.mxu0 0.0
    %2205 = vmatprep.subr.mxu0 0.0
    %2206 = vmatpush2.msra.mxu0 0.0
    %2207 = vmatprep.subr.mxu0 0.0
    %2208 = vmatpush2.msra.mxu0 0.0
    %2209 = vmatprep.subr.mxu0 0.0
    %2210 = vmatpush2.msra.mxu0 0.0
    %2211 = vmatprep.subr.mxu0 0.0
    %2212 = vmatpush2.msra.mxu0 0.0
    %2213 = vmatprep.subr.mxu0 0.0
    %2214 = vmatpush2.msra.mxu0 0.0
    %2215 = vmatprep.subr.mxu0 0.0
    %2216 = vmatpush2.msra.mxu0 0.0
    %2217 = vmatprep.subr.mxu0 0.0
    %2218 = vmatpush2.msra.mxu0 0.0
    %2219 = vmatprep.subr.mxu0 0.0
    %2220 = vmatpush2.msra.mxu0 0.0
    %2221 = vmatprep.subr.mxu0 0.0
    %2222 = vmatpush2.msra.mxu0 0.0
    %2223 = vmatprep.subr.mxu0 0.0
    %2224 = vmatpush2.msra.mxu0 0.0
    %2225 = vmatprep.subr.mxu0 0.0
    %2226 = vmatpush2.msra.mxu0 0.0
    %2227 = vmatprep.subr.mxu0 0.0
    %2228 = vmatpush2.msra.mxu0 0.0
    %2229 = vmatprep.subr.mxu0 0.0
    %2230 = vmatpush2.msra.mxu0 0.0
    %2231 = vmatprep.subr.mxu0 0.0
    %2232 = vmatpush2.msra.mxu0 0.0
    %2233 = vmatprep.subr.mxu0 0.0
    %2234 = vmatpush2.msra.mxu0 0.0
    %2235 = vmatprep.mubr.f32.mxu0 0.0
    %2236 = vmatmul.mubr.f32.gmra.mxu0 %v2169
    %v2237 = vpop.f32.mrf.mxu0
    %v2238 = vadd.f32 0.0, %v2237
    %v2239 = vpop.f32.mrf.mxu0
    %2240 = vdwg.mxu0
    %v2241 = vadd.f32 %v2168, %v2238
    %v2242 = vxor.u32 %v2241, 2147483648
    %v2243 = vmul.f32 %v2242, 1.442695
    %v2244 = vpow.pop %v2243
    %v2245 = vadd.f32 %v2244, 1.0
    %v2246 = vrcp.pop %v2245
    %v2247 = vmul.f32 1.0, %v2246
    %v2248 = vtanh.pop %v2241
    %v2249 = vmul.f32 %v2247, %v2156
    %2251 = vrot.lane.b32.xlu0 %v2248, 64
    %v2252 = vpop.permute.xlu0 %2251
    %v2254 = vmul.f32 %v2247, %v2252
    %2256 = vrot.lane.b32.xlu0 %v2254, 32
    %v2257 = vpop.permute.xlu0 %2256
    %v2259 = vadd.f32 %v2249, %v2257
    %v2260 = vtanh.pop %v2259
    %2262 = vrot.lane.b32.xlu0 %v2260, 64
    %v2263 = vpop.permute.xlu0 %2262
    %v2265 = vmul.f32 %v2247, %v2263
    %2267 = vrot.lane.b32.xlu0 %v2265, 32
    %v2268 = vpop.permute.xlu0 %2267
    %2270 = vst.msk [vmem:[#allocation2 + $0x2] sm:$0x3] %vm342, %v2268
    %v2271 = vld [vmem:[#allocation3 + $0x4] sm:$0x3]
    %v2272 = vsel %vm239, %v2268, 0
    %2274 = vmatprep.subr.mxu0 0.0
    %2275 = vmatpush1.msra.mxu0 0.0
    %2276 = vmatprep.subr.mxu0 0.0
    %2277 = vmatpush1.msra.mxu0 0.0
    %2278 = vmatprep.subr.mxu0 0.0
    %2279 = vmatpush1.msra.mxu0 0.0
    %2280 = vmatprep.subr.mxu0 0.0
    %2281 = vmatpush1.msra.mxu0 0.0
    %2282 = vmatprep.subr.mxu0 0.0
    %2283 = vmatpush1.msra.mxu0 0.0
    %2284 = vmatprep.subr.mxu0 0.0
    %2285 = vmatpush1.msra.mxu0 0.0
    %2286 = vmatprep.subr.mxu0 0.0
    %2287 = vmatpush1.msra.mxu0 0.0
    %2288 = vmatprep.subr.mxu0 0.0
    %2289 = vmatpush1.msra.mxu0 0.0
    %2290 = vmatprep.subr.mxu0 0.0
    %2291 = vmatpush1.msra.mxu0 0.0
    %2292 = vmatprep.subr.mxu0 0.0
    %2293 = vmatpush1.msra.mxu0 0.0
    %2294 = vmatprep.subr.mxu0 0.0
    %2295 = vmatpush1.msra.mxu0 0.0
    %2296 = vmatprep.subr.mxu0 0.0
    %2297 = vmatpush1.msra.mxu0 0.0
    %2298 = vmatprep.subr.mxu0 0.0
    %2299 = vmatpush1.msra.mxu0 %v1973
    %2300 = vmatprep.subr.mxu0 0.0
    %2301 = vmatpush1.msra.mxu0 %v1972
    %2302 = vmatprep.subr.mxu0 0.0
    %2303 = vmatpush1.msra.mxu0 %v1971
    %2304 = vmatprep.subr.mxu0 0.0
    %2305 = vmatpush1.msra.mxu0 %v1970
    %2306 = vmatprep.subr.mxu0 0.0
    %2307 = vmatpush2.msra.mxu0 0.0
    %2308 = vmatprep.subr.mxu0 0.0
    %2309 = vmatpush2.msra.mxu0 0.0
    %2310 = vmatprep.subr.mxu0 0.0
    %2311 = vmatpush2.msra.mxu0 0.0
    %2312 = vmatprep.subr.mxu0 0.0
    %2313 = vmatpush2.msra.mxu0 0.0
    %2314 = vmatprep.subr.mxu0 0.0
    %2315 = vmatpush2.msra.mxu0 0.0
    %2316 = vmatprep.subr.mxu0 0.0
    %2317 = vmatpush2.msra.mxu0 0.0
    %2318 = vmatprep.subr.mxu0 0.0
    %2319 = vmatpush2.msra.mxu0 0.0
    %2320 = vmatprep.subr.mxu0 0.0
    %2321 = vmatpush2.msra.mxu0 0.0
    %2322 = vmatprep.subr.mxu0 0.0
    %2323 = vmatpush2.msra.mxu0 0.0
    %2324 = vmatprep.subr.mxu0 0.0
    %2325 = vmatpush2.msra.mxu0 0.0
    %2326 = vmatprep.subr.mxu0 0.0
    %2327 = vmatpush2.msra.mxu0 0.0
    %2328 = vmatprep.subr.mxu0 0.0
    %2329 = vmatpush2.msra.mxu0 0.0
    %2330 = vmatprep.subr.mxu0 0.0
    %2331 = vmatpush2.msra.mxu0 0.0
    %2332 = vmatprep.subr.mxu0 0.0
    %2333 = vmatpush2.msra.mxu0 0.0
    %2334 = vmatprep.subr.mxu0 0.0
    %2335 = vmatpush2.msra.mxu0 0.0
    %2336 = vmatprep.subr.mxu0 0.0
    %2337 = vmatpush2.msra.mxu0 0.0
    %2338 = vmatprep.mubr.f32.mxu0 0.0
    %2339 = vmatmul.mubr.f32.gmra.mxu0 %v2272
    %v2340 = vpop.f32.mrf.mxu0
    %v2341 = vadd.f32 0.0, %v2340
    %v2342 = vpop.f32.mrf.mxu0
    %2343 = vdwg.mxu0
    %v2344 = vadd.f32 %v2271, %v2341
    %v2345 = vxor.u32 %v2344, 2147483648
    %v2346 = vmul.f32 %v2345, 1.442695
    %v2347 = vpow.pop %v2346
    %v2348 = vadd.f32 %v2347, 1.0
    %v2349 = vrcp.pop %v2348
    %v2350 = vmul.f32 1.0, %v2349
    %v2351 = vtanh.pop %v2344
    %v2352 = vmul.f32 %v2350, %v2259
    %2354 = vrot.lane.b32.xlu0 %v2351, 64
    %v2355 = vpop.permute.xlu0 %2354
    %v2357 = vmul.f32 %v2350, %v2355
    %2359 = vrot.lane.b32.xlu0 %v2357, 32
    %v2360 = vpop.permute.xlu0 %2359
    %v2362 = vadd.f32 %v2352, %v2360
    %v2363 = vtanh.pop %v2362
    %2365 = vrot.lane.b32.xlu0 %v2363, 64
    %v2366 = vpop.permute.xlu0 %2365
    %v2368 = vmul.f32 %v2350, %v2366
    %2370 = vrot.lane.b32.xlu0 %v2368, 32
    %v2371 = vpop.permute.xlu0 %2370
    %2373 = vst.msk [vmem:[#allocation2 + $0x4] sm:$0x3] %vm342, %v2371
    %v2374 = vld [vmem:[#allocation3 + $0x6] sm:$0x3]
    %v2375 = vsel %vm239, %v2371, 0
    %2377 = vmatprep.subr.mxu0 0.0
    %2378 = vmatpush1.msra.mxu0 0.0
    %2379 = vmatprep.subr.mxu0 0.0
    %2380 = vmatpush1.msra.mxu0 0.0
    %2381 = vmatprep.subr.mxu0 0.0
    %2382 = vmatpush1.msra.mxu0 0.0
    %2383 = vmatprep.subr.mxu0 0.0
    %2384 = vmatpush1.msra.mxu0 0.0
    %2385 = vmatprep.subr.mxu0 0.0
    %2386 = vmatpush1.msra.mxu0 0.0
    %2387 = vmatprep.subr.mxu0 0.0
    %2388 = vmatpush1.msra.mxu0 0.0
    %2389 = vmatprep.subr.mxu0 0.0
    %2390 = vmatpush1.msra.mxu0 0.0
    %2391 = vmatprep.subr.mxu0 0.0
    %2392 = vmatpush1.msra.mxu0 0.0
    %2393 = vmatprep.subr.mxu0 0.0
    %2394 = vmatpush1.msra.mxu0 0.0
    %2395 = vmatprep.subr.mxu0 0.0
    %2396 = vmatpush1.msra.mxu0 0.0
    %2397 = vmatprep.subr.mxu0 0.0
    %2398 = vmatpush1.msra.mxu0 0.0
    %2399 = vmatprep.subr.mxu0 0.0
    %2400 = vmatpush1.msra.mxu0 0.0
    %2401 = vmatprep.subr.mxu0 0.0
    %2402 = vmatpush1.msra.mxu0 %v1973
    %2403 = vmatprep.subr.mxu0 0.0
    %2404 = vmatpush1.msra.mxu0 %v1972
    %2405 = vmatprep.subr.mxu0 0.0
    %2406 = vmatpush1.msra.mxu0 %v1971
    %2407 = vmatprep.subr.mxu0 0.0
    %2408 = vmatpush1.msra.mxu0 %v1970
    %2409 = vmatprep.subr.mxu0 0.0
    %2410 = vmatpush2.msra.mxu0 0.0
    %2411 = vmatprep.subr.mxu0 0.0
    %2412 = vmatpush2.msra.mxu0 0.0
    %2413 = vmatprep.subr.mxu0 0.0
    %2414 = vmatpush2.msra.mxu0 0.0
    %2415 = vmatprep.subr.mxu0 0.0
    %2416 = vmatpush2.msra.mxu0 0.0
    %2417 = vmatprep.subr.mxu0 0.0
    %2418 = vmatpush2.msra.mxu0 0.0
    %2419 = vmatprep.subr.mxu0 0.0
    %2420 = vmatpush2.msra.mxu0 0.0
    %2421 = vmatprep.subr.mxu0 0.0
    %2422 = vmatpush2.msra.mxu0 0.0
    %2423 = vmatprep.subr.mxu0 0.0
    %2424 = vmatpush2.msra.mxu0 0.0
    %2425 = vmatprep.subr.mxu0 0.0
    %2426 = vmatpush2.msra.mxu0 0.0
    %2427 = vmatprep.subr.mxu0 0.0
    %2428 = vmatpush2.msra.mxu0 0.0
    %2429 = vmatprep.subr.mxu0 0.0
    %2430 = vmatpush2.msra.mxu0 0.0
    %2431 = vmatprep.subr.mxu0 0.0
    %2432 = vmatpush2.msra.mxu0 0.0
    %2433 = vmatprep.subr.mxu0 0.0
    %2434 = vmatpush2.msra.mxu0 0.0
    %2435 = vmatprep.subr.mxu0 0.0
    %2436 = vmatpush2.msra.mxu0 0.0
    %2437 = vmatprep.subr.mxu0 0.0
    %2438 = vmatpush2.msra.mxu0 0.0
    %2439 = vmatprep.subr.mxu0 0.0
    %2440 = vmatpush2.msra.mxu0 0.0
    %2441 = vmatprep.mubr.f32.mxu0 0.0
    %2442 = vmatmul.mubr.f32.gmra.mxu0 %v2375
    %v2443 = vpop.f32.mrf.mxu0
    %v2444 = vadd.f32 0.0, %v2443
    %v2445 = vpop.f32.mrf.mxu0
    %2446 = vdwg.mxu0
    %v2447 = vadd.f32 %v2374, %v2444
    %v2448 = vxor.u32 %v2447, 2147483648
    %v2449 = vmul.f32 %v2448, 1.442695
    %v2450 = vpow.pop %v2449
    %v2451 = vadd.f32 %v2450, 1.0
    %v2452 = vrcp.pop %v2451
    %v2453 = vmul.f32 1.0, %v2452
    %v2454 = vtanh.pop %v2447
    %v2455 = vmul.f32 %v2453, %v2362
    %2457 = vrot.lane.b32.xlu0 %v2454, 64
    %v2458 = vpop.permute.xlu0 %2457
    %v2460 = vmul.f32 %v2453, %v2458
    %2462 = vrot.lane.b32.xlu0 %v2460, 32
    %v2463 = vpop.permute.xlu0 %2462
    %v2465 = vadd.f32 %v2455, %v2463
    %v2466 = vtanh.pop %v2465
    %2468 = vrot.lane.b32.xlu0 %v2466, 64
    %v2469 = vpop.permute.xlu0 %2468
    %v2471 = vmul.f32 %v2453, %v2469
    %2473 = vrot.lane.b32.xlu0 %v2471, 32
    %v2474 = vpop.permute.xlu0 %2473
    %2476 = vst.msk [vmem:[#allocation2 + $0x6] sm:$0x3] %vm342, %v2474
    %v2477 = vld [vmem:[#allocation3 + $0x8] sm:$0x3]
    %v2478 = vsel %vm239, %v2474, 0
    %2480 = vmatprep.subr.mxu0 0.0
    %2481 = vmatpush1.msra.mxu0 0.0
    %2482 = vmatprep.subr.mxu0 0.0
    %2483 = vmatpush1.msra.mxu0 0.0
    %2484 = vmatprep.subr.mxu0 0.0
    %2485 = vmatpush1.msra.mxu0 0.0
    %2486 = vmatprep.subr.mxu0 0.0
    %2487 = vmatpush1.msra.mxu0 0.0
    %2488 = vmatprep.subr.mxu0 0.0
    %2489 = vmatpush1.msra.mxu0 0.0
    %2490 = vmatprep.subr.mxu0 0.0
    %2491 = vmatpush1.msra.mxu0 0.0
    %2492 = vmatprep.subr.mxu0 0.0
    %2493 = vmatpush1.msra.mxu0 0.0
    %2494 = vmatprep.subr.mxu0 0.0
    %2495 = vmatpush1.msra.mxu0 0.0
    %2496 = vmatprep.subr.mxu0 0.0
    %2497 = vmatpush1.msra.mxu0 0.0
    %2498 = vmatprep.subr.mxu0 0.0
    %2499 = vmatpush1.msra.mxu0 0.0
    %2500 = vmatprep.subr.mxu0 0.0
    %2501 = vmatpush1.msra.mxu0 0.0
    %2502 = vmatprep.subr.mxu0 0.0
    %2503 = vmatpush1.msra.mxu0 0.0
    %2504 = vmatprep.subr.mxu0 0.0
    %2505 = vmatpush1.msra.mxu0 %v1973
    %2506 = vmatprep.subr.mxu0 0.0
    %2507 = vmatpush1.msra.mxu0 %v1972
    %2508 = vmatprep.subr.mxu0 0.0
    %2509 = vmatpush1.msra.mxu0 %v1971
    %2510 = vmatprep.subr.mxu0 0.0
    %2511 = vmatpush1.msra.mxu0 %v1970
    %2512 = vmatprep.subr.mxu0 0.0
    %2513 = vmatpush2.msra.mxu0 0.0
    %2514 = vmatprep.subr.mxu0 0.0
    %2515 = vmatpush2.msra.mxu0 0.0
    %2516 = vmatprep.subr.mxu0 0.0
    %2517 = vmatpush2.msra.mxu0 0.0
    %2518 = vmatprep.subr.mxu0 0.0
    %2519 = vmatpush2.msra.mxu0 0.0
    %2520 = vmatprep.subr.mxu0 0.0
    %2521 = vmatpush2.msra.mxu0 0.0
    %2522 = vmatprep.subr.mxu0 0.0
    %2523 = vmatpush2.msra.mxu0 0.0
    %2524 = vmatprep.subr.mxu0 0.0
    %2525 = vmatpush2.msra.mxu0 0.0
    %2526 = vmatprep.subr.mxu0 0.0
    %2527 = vmatpush2.msra.mxu0 0.0
    %2528 = vmatprep.subr.mxu0 0.0
    %2529 = vmatpush2.msra.mxu0 0.0
    %2530 = vmatprep.subr.mxu0 0.0
    %2531 = vmatpush2.msra.mxu0 0.0
    %2532 = vmatprep.subr.mxu0 0.0
    %2533 = vmatpush2.msra.mxu0 0.0
    %2534 = vmatprep.subr.mxu0 0.0
    %2535 = vmatpush2.msra.mxu0 0.0
    %2536 = vmatprep.subr.mxu0 0.0
    %2537 = vmatpush2.msra.mxu0 0.0
    %2538 = vmatprep.subr.mxu0 0.0
    %2539 = vmatpush2.msra.mxu0 0.0
    %2540 = vmatprep.subr.mxu0 0.0
    %2541 = vmatpush2.msra.mxu0 0.0
    %2542 = vmatprep.subr.mxu0 0.0
    %2543 = vmatpush2.msra.mxu0 0.0
    %2544 = vmatprep.mubr.f32.mxu0 0.0
    %2545 = vmatmul.mubr.f32.gmra.mxu0 %v2478
    %v2546 = vpop.f32.mrf.mxu0
    %v2547 = vadd.f32 0.0, %v2546
    %v2548 = vpop.f32.mrf.mxu0
    %2549 = vdwg.mxu0
    %v2550 = vadd.f32 %v2477, %v2547
    %v2551 = vxor.u32 %v2550, 2147483648
    %v2552 = vmul.f32 %v2551, 1.442695
    %v2553 = vpow.pop %v2552
    %v2554 = vadd.f32 %v2553, 1.0
    %v2555 = vrcp.pop %v2554
    %v2556 = vmul.f32 1.0, %v2555
    %v2557 = vtanh.pop %v2550
    %v2558 = vmul.f32 %v2556, %v2465
    %2560 = vrot.lane.b32.xlu0 %v2557, 64
    %v2561 = vpop.permute.xlu0 %2560
    %v2563 = vmul.f32 %v2556, %v2561
    %2565 = vrot.lane.b32.xlu0 %v2563, 32
    %v2566 = vpop.permute.xlu0 %2565
    %v2568 = vadd.f32 %v2558, %v2566
    %v2569 = vtanh.pop %v2568
    %2571 = vrot.lane.b32.xlu0 %v2569, 64
    %v2572 = vpop.permute.xlu0 %2571
    %v2574 = vmul.f32 %v2556, %v2572
    %2576 = vrot.lane.b32.xlu0 %v2574, 32
    %v2577 = vpop.permute.xlu0 %2576
    %2579 = vst.msk [vmem:[#allocation2 + $0x8] sm:$0x3] %vm342, %v2577
    %v2580 = vld [vmem:[#allocation2] sm:$0xff]
    %v2581 = vld [vmem:[#allocation2 + $0x8] sm:$0x3]
    %v2582 = vld [vmem:[#allocation14] sm:$0xff]
    %v2583 = vld [vmem:[#allocation14 + $0x8] sm:$0xff]
    %v2584 = vld [vmem:[#allocation14 + $0x10] sm:$0xff]
    %v2585 = vld [vmem:[#allocation14 + $0x18] sm:$0xff]
    %v2586 = vld [vmem:[#allocation12] sm:$0xff]
    %v2587 = vld [vmem:[#allocation12 + $0x8] sm:$0xff]
    %v2588 = vld [vmem:[#allocation12 + $0x10] sm:$0xff]
    %v2589 = vld [vmem:[#allocation12 + $0x18] sm:$0xff]
    %v2590 = vld [vmem:[%s13] sm:$0x1]
    %v2592 = vlaneseq
    %v2593 = vshrl.u32 %v2592, 7
    %v2594 = vsub.s32 0, %v2593
    %v2595 = vrot.slane %v2590, %v2594
    %v2598 = vsel %vm239, %v2580, 0
    %v2601 = vsel %vm239, %v2581, 0
    %2603 = vmatprep.subr.mxu0 0.0
    %2604 = vmatpush1.msra.mxu0 0.0
    %2605 = vmatprep.subr.mxu0 0.0
    %2606 = vmatpush1.msra.mxu0 0.0
    %2607 = vmatprep.subr.mxu0 0.0
    %2608 = vmatpush1.msra.mxu0 0.0
    %2609 = vmatprep.subr.mxu0 0.0
    %2610 = vmatpush1.msra.mxu0 0.0
    %2611 = vmatprep.subr.mxu0 0.0
    %2612 = vmatpush1.msra.mxu0 0.0
    %2613 = vmatprep.subr.mxu0 0.0
    %2614 = vmatpush1.msra.mxu0 0.0
    %2615 = vmatprep.subr.mxu0 0.0
    %2616 = vmatpush1.msra.mxu0 0.0
    %2617 = vmatprep.subr.mxu0 0.0
    %2618 = vmatpush1.msra.mxu0 0.0
    %2619 = vmatprep.subr.mxu0 0.0
    %2620 = vmatpush1.msra.mxu0 0.0
    %2621 = vmatprep.subr.mxu0 0.0
    %2622 = vmatpush1.msra.mxu0 0.0
    %2623 = vmatprep.subr.mxu0 0.0
    %2624 = vmatpush1.msra.mxu0 0.0
    %2625 = vmatprep.subr.mxu0 0.0
    %2626 = vmatpush1.msra.mxu0 0.0
    %2627 = vmatprep.subr.mxu0 0.0
    %2628 = vmatpush1.msra.mxu0 %v2589
    %2629 = vmatprep.subr.mxu0 0.0
    %2630 = vmatpush1.msra.mxu0 %v2588
    %2631 = vmatprep.subr.mxu0 0.0
    %2632 = vmatpush1.msra.mxu0 %v2587
    %2633 = vmatprep.subr.mxu0 0.0
    %2634 = vmatpush1.msra.mxu0 %v2586
    %2635 = vmatprep.subr.mxu0 0.0
    %2636 = vmatpush2.msra.mxu0 0.0
    %2637 = vmatprep.subr.mxu0 0.0
    %2638 = vmatpush2.msra.mxu0 0.0
    %2639 = vmatprep.subr.mxu0 0.0
    %2640 = vmatpush2.msra.mxu0 0.0
    %2641 = vmatprep.subr.mxu0 0.0
    %2642 = vmatpush2.msra.mxu0 0.0
    %2643 = vmatprep.subr.mxu0 0.0
    %2644 = vmatpush2.msra.mxu0 0.0
    %2645 = vmatprep.subr.mxu0 0.0
    %2646 = vmatpush2.msra.mxu0 0.0
    %2647 = vmatprep.subr.mxu0 0.0
    %2648 = vmatpush2.msra.mxu0 0.0
    %2649 = vmatprep.subr.mxu0 0.0
    %2650 = vmatpush2.msra.mxu0 0.0
    %2651 = vmatprep.subr.mxu0 0.0
    %2652 = vmatpush2.msra.mxu0 0.0
    %2653 = vmatprep.subr.mxu0 0.0
    %2654 = vmatpush2.msra.mxu0 0.0
    %2655 = vmatprep.subr.mxu0 0.0
    %2656 = vmatpush2.msra.mxu0 0.0
    %2657 = vmatprep.subr.mxu0 0.0
    %2658 = vmatpush2.msra.mxu0 0.0
    %2659 = vmatprep.subr.mxu0 0.0
    %2660 = vmatpush2.msra.mxu0 0.0
    %2661 = vmatprep.subr.mxu0 0.0
    %2662 = vmatpush2.msra.mxu0 0.0
    %2663 = vmatprep.subr.mxu0 0.0
    %2664 = vmatpush2.msra.mxu0 0.0
    %2665 = vmatprep.subr.mxu0 0.0
    %2666 = vmatpush2.msra.mxu0 0.0
    %2667 = vmatprep.mubr.f32.mxu0 0.0
    %2668 = vmatmul.mubr.f32.gmra.mxu0 %v2598
    %v2669 = vpop.f32.mrf.mxu0
    %v2670 = vadd.f32 %v2595, %v2669
    %v2671 = vpop.f32.mrf.mxu0
    %2672 = vmatprep.mubr.f32.mxu0 0.0
    %2673 = vmatmul.mubr.f32.gmra.mxu0 %v2601
    %v2674 = vpop.f32.mrf.mxu0
    %v2675 = vadd.f32 %v2595, %v2674
    %v2676 = vpop.f32.mrf.mxu0
    %2677 = vdwg.mxu0
    %2678 = vst [vmem:[#allocation3] sm:$0xff] %v2670
    %2679 = vst [vmem:[#allocation3 + $0x8] sm:$0x3] %v2675
    %v2680 = vld [vmem:[#allocation3] sm:$0x3]
    %2682 = vrot.lane.b32.xlu0 %v1967, 32
    %v2683 = vpop.permute.xlu0 %2682
    %v2684 = vsel %vm239, %v2683, 0
    %2686 = vmatprep.subr.mxu0 0.0
    %2687 = vmatpush1.msra.mxu0 0.0
    %2688 = vmatprep.subr.mxu0 0.0
    %2689 = vmatpush1.msra.mxu0 0.0
    %2690 = vmatprep.subr.mxu0 0.0
    %2691 = vmatpush1.msra.mxu0 0.0
    %2692 = vmatprep.subr.mxu0 0.0
    %2693 = vmatpush1.msra.mxu0 0.0
    %2694 = vmatprep.subr.mxu0 0.0
    %2695 = vmatpush1.msra.mxu0 0.0
    %2696 = vmatprep.subr.mxu0 0.0
    %2697 = vmatpush1.msra.mxu0 0.0
    %2698 = vmatprep.subr.mxu0 0.0
    %2699 = vmatpush1.msra.mxu0 0.0
    %2700 = vmatprep.subr.mxu0 0.0
    %2701 = vmatpush1.msra.mxu0 0.0
    %2702 = vmatprep.subr.mxu0 0.0
    %2703 = vmatpush1.msra.mxu0 0.0
    %2704 = vmatprep.subr.mxu0 0.0
    %2705 = vmatpush1.msra.mxu0 0.0
    %2706 = vmatprep.subr.mxu0 0.0
    %2707 = vmatpush1.msra.mxu0 0.0
    %2708 = vmatprep.subr.mxu0 0.0
    %2709 = vmatpush1.msra.mxu0 0.0
    %2710 = vmatprep.subr.mxu0 0.0
    %2711 = vmatpush1.msra.mxu0 %v2585
    %2712 = vmatprep.subr.mxu0 0.0
    %2713 = vmatpush1.msra.mxu0 %v2584
    %2714 = vmatprep.subr.mxu0 0.0
    %2715 = vmatpush1.msra.mxu0 %v2583
    %2716 = vmatprep.subr.mxu0 0.0
    %2717 = vmatpush1.msra.mxu0 %v2582
    %2718 = vmatprep.subr.mxu0 0.0
    %2719 = vmatpush2.msra.mxu0 0.0
    %2720 = vmatprep.subr.mxu0 0.0
    %2721 = vmatpush2.msra.mxu0 0.0
    %2722 = vmatprep.subr.mxu0 0.0
    %2723 = vmatpush2.msra.mxu0 0.0
    %2724 = vmatprep.subr.mxu0 0.0
    %2725 = vmatpush2.msra.mxu0 0.0
    %2726 = vmatprep.subr.mxu0 0.0
    %2727 = vmatpush2.msra.mxu0 0.0
    %2728 = vmatprep.subr.mxu0 0.0
    %2729 = vmatpush2.msra.mxu0 0.0
    %2730 = vmatprep.subr.mxu0 0.0
    %2731 = vmatpush2.msra.mxu0 0.0
    %2732 = vmatprep.subr.mxu0 0.0
    %2733 = vmatpush2.msra.mxu0 0.0
    %2734 = vmatprep.subr.mxu0 0.0
    %2735 = vmatpush2.msra.mxu0 0.0
    %2736 = vmatprep.subr.mxu0 0.0
    %2737 = vmatpush2.msra.mxu0 0.0
    %2738 = vmatprep.subr.mxu0 0.0
    %2739 = vmatpush2.msra.mxu0 0.0
    %2740 = vmatprep.subr.mxu0 0.0
    %2741 = vmatpush2.msra.mxu0 0.0
    %2742 = vmatprep.subr.mxu0 0.0
    %2743 = vmatpush2.msra.mxu0 0.0
    %2744 = vmatprep.subr.mxu0 0.0
    %2745 = vmatpush2.msra.mxu0 0.0
    %2746 = vmatprep.subr.mxu0 0.0
    %2747 = vmatpush2.msra.mxu0 0.0
    %2748 = vmatprep.subr.mxu0 0.0
    %2749 = vmatpush2.msra.mxu0 0.0
    %2750 = vmatprep.mubr.f32.mxu0 0.0
    %2751 = vmatmul.mubr.f32.gmra.mxu0 %v2684
    %v2752 = vpop.f32.mrf.mxu0
    %v2753 = vadd.f32 0.0, %v2752
    %v2754 = vpop.f32.mrf.mxu0
    %2755 = vdwg.mxu0
    %v2756 = vadd.f32 %v2680, %v2753
    %v2757 = vxor.u32 %v2756, 2147483648
    %v2758 = vmul.f32 %v2757, 1.442695
    %v2759 = vpow.pop %v2758
    %v2760 = vadd.f32 %v2759, 1.0
    %v2761 = vrcp.pop %v2760
    %v2762 = vmul.f32 1.0, %v2761
    %v2763 = vtanh.pop %v2756
    %v2764 = vmul.f32 %v2762, %v1961
    %2766 = vrot.lane.b32.xlu0 %v2763, 64
    %v2767 = vpop.permute.xlu0 %2766
    %v2769 = vmul.f32 %v2762, %v2767
    %2771 = vrot.lane.b32.xlu0 %v2769, 32
    %v2772 = vpop.permute.xlu0 %2771
    %v2774 = vadd.f32 %v2764, %v2772
    %v2775 = vtanh.pop %v2774
    %2777 = vrot.lane.b32.xlu0 %v2775, 64
    %v2778 = vpop.permute.xlu0 %2777
    %v2780 = vmul.f32 %v2762, %v2778
    %2782 = vrot.lane.b32.xlu0 %v2780, 32
    %v2783 = vpop.permute.xlu0 %2782
    %2785 = vst.msk [vmem:[#allocation2] sm:$0x3] %vm342, %v2783
    %v2786 = vld [vmem:[#allocation3 + $0x2] sm:$0x3]
    %v2787 = vsel %vm239, %v2783, 0
    %2789 = vmatprep.subr.mxu0 0.0
    %2790 = vmatpush1.msra.mxu0 0.0
    %2791 = vmatprep.subr.mxu0 0.0
    %2792 = vmatpush1.msra.mxu0 0.0
    %2793 = vmatprep.subr.mxu0 0.0
    %2794 = vmatpush1.msra.mxu0 0.0
    %2795 = vmatprep.subr.mxu0 0.0
    %2796 = vmatpush1.msra.mxu0 0.0
    %2797 = vmatprep.subr.mxu0 0.0
    %2798 = vmatpush1.msra.mxu0 0.0
    %2799 = vmatprep.subr.mxu0 0.0
    %2800 = vmatpush1.msra.mxu0 0.0
    %2801 = vmatprep.subr.mxu0 0.0
    %2802 = vmatpush1.msra.mxu0 0.0
    %2803 = vmatprep.subr.mxu0 0.0
    %2804 = vmatpush1.msra.mxu0 0.0
    %2805 = vmatprep.subr.mxu0 0.0
    %2806 = vmatpush1.msra.mxu0 0.0
    %2807 = vmatprep.subr.mxu0 0.0
    %2808 = vmatpush1.msra.mxu0 0.0
    %2809 = vmatprep.subr.mxu0 0.0
    %2810 = vmatpush1.msra.mxu0 0.0
    %2811 = vmatprep.subr.mxu0 0.0
    %2812 = vmatpush1.msra.mxu0 0.0
    %2813 = vmatprep.subr.mxu0 0.0
    %2814 = vmatpush1.msra.mxu0 %v2585
    %2815 = vmatprep.subr.mxu0 0.0
    %2816 = vmatpush1.msra.mxu0 %v2584
    %2817 = vmatprep.subr.mxu0 0.0
    %2818 = vmatpush1.msra.mxu0 %v2583
    %2819 = vmatprep.subr.mxu0 0.0
    %2820 = vmatpush1.msra.mxu0 %v2582
    %2821 = vmatprep.subr.mxu0 0.0
    %2822 = vmatpush2.msra.mxu0 0.0
    %2823 = vmatprep.subr.mxu0 0.0
    %2824 = vmatpush2.msra.mxu0 0.0
    %2825 = vmatprep.subr.mxu0 0.0
    %2826 = vmatpush2.msra.mxu0 0.0
    %2827 = vmatprep.subr.mxu0 0.0
    %2828 = vmatpush2.msra.mxu0 0.0
    %2829 = vmatprep.subr.mxu0 0.0
    %2830 = vmatpush2.msra.mxu0 0.0
    %2831 = vmatprep.subr.mxu0 0.0
    %2832 = vmatpush2.msra.mxu0 0.0
    %2833 = vmatprep.subr.mxu0 0.0
    %2834 = vmatpush2.msra.mxu0 0.0
    %2835 = vmatprep.subr.mxu0 0.0
    %2836 = vmatpush2.msra.mxu0 0.0
    %2837 = vmatprep.subr.mxu0 0.0
    %2838 = vmatpush2.msra.mxu0 0.0
    %2839 = vmatprep.subr.mxu0 0.0
    %2840 = vmatpush2.msra.mxu0 0.0
    %2841 = vmatprep.subr.mxu0 0.0
    %2842 = vmatpush2.msra.mxu0 0.0
    %2843 = vmatprep.subr.mxu0 0.0
    %2844 = vmatpush2.msra.mxu0 0.0
    %2845 = vmatprep.subr.mxu0 0.0
    %2846 = vmatpush2.msra.mxu0 0.0
    %2847 = vmatprep.subr.mxu0 0.0
    %2848 = vmatpush2.msra.mxu0 0.0
    %2849 = vmatprep.subr.mxu0 0.0
    %2850 = vmatpush2.msra.mxu0 0.0
    %2851 = vmatprep.subr.mxu0 0.0
    %2852 = vmatpush2.msra.mxu0 0.0
    %2853 = vmatprep.mubr.f32.mxu0 0.0
    %2854 = vmatmul.mubr.f32.gmra.mxu0 %v2787
    %v2855 = vpop.f32.mrf.mxu0
    %v2856 = vadd.f32 0.0, %v2855
    %v2857 = vpop.f32.mrf.mxu0
    %2858 = vdwg.mxu0
    %v2859 = vadd.f32 %v2786, %v2856
    %v2860 = vxor.u32 %v2859, 2147483648
    %v2861 = vmul.f32 %v2860, 1.442695
    %v2862 = vpow.pop %v2861
    %v2863 = vadd.f32 %v2862, 1.0
    %v2864 = vrcp.pop %v2863
    %v2865 = vmul.f32 1.0, %v2864
    %v2866 = vtanh.pop %v2859
    %v2867 = vmul.f32 %v2865, %v2774
    %2869 = vrot.lane.b32.xlu0 %v2866, 64
    %v2870 = vpop.permute.xlu0 %2869
    %v2872 = vmul.f32 %v2865, %v2870
    %2874 = vrot.lane.b32.xlu0 %v2872, 32
    %v2875 = vpop.permute.xlu0 %2874
    %v2877 = vadd.f32 %v2867, %v2875
    %v2878 = vtanh.pop %v2877
    %2880 = vrot.lane.b32.xlu0 %v2878, 64
    %v2881 = vpop.permute.xlu0 %2880
    %v2883 = vmul.f32 %v2865, %v2881
    %2885 = vrot.lane.b32.xlu0 %v2883, 32
    %v2886 = vpop.permute.xlu0 %2885
    %2888 = vst.msk [vmem:[#allocation2 + $0x2] sm:$0x3] %vm342, %v2886
    %v2889 = vld [vmem:[#allocation3 + $0x4] sm:$0x3]
    %v2890 = vsel %vm239, %v2886, 0
    %2892 = vmatprep.subr.mxu0 0.0
    %2893 = vmatpush1.msra.mxu0 0.0
    %2894 = vmatprep.subr.mxu0 0.0
    %2895 = vmatpush1.msra.mxu0 0.0
    %2896 = vmatprep.subr.mxu0 0.0
    %2897 = vmatpush1.msra.mxu0 0.0
    %2898 = vmatprep.subr.mxu0 0.0
    %2899 = vmatpush1.msra.mxu0 0.0
    %2900 = vmatprep.subr.mxu0 0.0
    %2901 = vmatpush1.msra.mxu0 0.0
    %2902 = vmatprep.subr.mxu0 0.0
    %2903 = vmatpush1.msra.mxu0 0.0
    %2904 = vmatprep.subr.mxu0 0.0
    %2905 = vmatpush1.msra.mxu0 0.0
    %2906 = vmatprep.subr.mxu0 0.0
    %2907 = vmatpush1.msra.mxu0 0.0
    %2908 = vmatprep.subr.mxu0 0.0
    %2909 = vmatpush1.msra.mxu0 0.0
    %2910 = vmatprep.subr.mxu0 0.0
    %2911 = vmatpush1.msra.mxu0 0.0
    %2912 = vmatprep.subr.mxu0 0.0
    %2913 = vmatpush1.msra.mxu0 0.0
    %2914 = vmatprep.subr.mxu0 0.0
    %2915 = vmatpush1.msra.mxu0 0.0
    %2916 = vmatprep.subr.mxu0 0.0
    %2917 = vmatpush1.msra.mxu0 %v2585
    %2918 = vmatprep.subr.mxu0 0.0
    %2919 = vmatpush1.msra.mxu0 %v2584
    %2920 = vmatprep.subr.mxu0 0.0
    %2921 = vmatpush1.msra.mxu0 %v2583
    %2922 = vmatprep.subr.mxu0 0.0
    %2923 = vmatpush1.msra.mxu0 %v2582
    %2924 = vmatprep.subr.mxu0 0.0
    %2925 = vmatpush2.msra.mxu0 0.0
    %2926 = vmatprep.subr.mxu0 0.0
    %2927 = vmatpush2.msra.mxu0 0.0
    %2928 = vmatprep.subr.mxu0 0.0
    %2929 = vmatpush2.msra.mxu0 0.0
    %2930 = vmatprep.subr.mxu0 0.0
    %2931 = vmatpush2.msra.mxu0 0.0
    %2932 = vmatprep.subr.mxu0 0.0
    %2933 = vmatpush2.msra.mxu0 0.0
    %2934 = vmatprep.subr.mxu0 0.0
    %2935 = vmatpush2.msra.mxu0 0.0
    %2936 = vmatprep.subr.mxu0 0.0
    %2937 = vmatpush2.msra.mxu0 0.0
    %2938 = vmatprep.subr.mxu0 0.0
    %2939 = vmatpush2.msra.mxu0 0.0
    %2940 = vmatprep.subr.mxu0 0.0
    %2941 = vmatpush2.msra.mxu0 0.0
    %2942 = vmatprep.subr.mxu0 0.0
    %2943 = vmatpush2.msra.mxu0 0.0
    %2944 = vmatprep.subr.mxu0 0.0
    %2945 = vmatpush2.msra.mxu0 0.0
    %2946 = vmatprep.subr.mxu0 0.0
    %2947 = vmatpush2.msra.mxu0 0.0
    %2948 = vmatprep.subr.mxu0 0.0
    %2949 = vmatpush2.msra.mxu0 0.0
    %2950 = vmatprep.subr.mxu0 0.0
    %2951 = vmatpush2.msra.mxu0 0.0
    %2952 = vmatprep.subr.mxu0 0.0
    %2953 = vmatpush2.msra.mxu0 0.0
    %2954 = vmatprep.subr.mxu0 0.0
    %2955 = vmatpush2.msra.mxu0 0.0
    %2956 = vmatprep.mubr.f32.mxu0 0.0
    %2957 = vmatmul.mubr.f32.gmra.mxu0 %v2890
    %v2958 = vpop.f32.mrf.mxu0
    %v2959 = vadd.f32 0.0, %v2958
    %v2960 = vpop.f32.mrf.mxu0
    %2961 = vdwg.mxu0
    %v2962 = vadd.f32 %v2889, %v2959
    %v2963 = vxor.u32 %v2962, 2147483648
    %v2964 = vmul.f32 %v2963, 1.442695
    %v2965 = vpow.pop %v2964
    %v2966 = vadd.f32 %v2965, 1.0
    %v2967 = vrcp.pop %v2966
    %v2968 = vmul.f32 1.0, %v2967
    %v2969 = vtanh.pop %v2962
    %v2970 = vmul.f32 %v2968, %v2877
    %2972 = vrot.lane.b32.xlu0 %v2969, 64
    %v2973 = vpop.permute.xlu0 %2972
    %v2975 = vmul.f32 %v2968, %v2973
    %2977 = vrot.lane.b32.xlu0 %v2975, 32
    %v2978 = vpop.permute.xlu0 %2977
    %v2980 = vadd.f32 %v2970, %v2978
    %v2981 = vtanh.pop %v2980
    %2983 = vrot.lane.b32.xlu0 %v2981, 64
    %v2984 = vpop.permute.xlu0 %2983
    %v2986 = vmul.f32 %v2968, %v2984
    %2988 = vrot.lane.b32.xlu0 %v2986, 32
    %v2989 = vpop.permute.xlu0 %2988
    %2991 = vst.msk [vmem:[#allocation2 + $0x4] sm:$0x3] %vm342, %v2989
    %v2992 = vld [vmem:[#allocation3 + $0x6] sm:$0x3]
    %v2993 = vsel %vm239, %v2989, 0
    %2995 = vmatprep.subr.mxu0 0.0
    %2996 = vmatpush1.msra.mxu0 0.0
    %2997 = vmatprep.subr.mxu0 0.0
    %2998 = vmatpush1.msra.mxu0 0.0
    %2999 = vmatprep.subr.mxu0 0.0
    %3000 = vmatpush1.msra.mxu0 0.0
    %3001 = vmatprep.subr.mxu0 0.0
    %3002 = vmatpush1.msra.mxu0 0.0
    %3003 = vmatprep.subr.mxu0 0.0
    %3004 = vmatpush1.msra.mxu0 0.0
    %3005 = vmatprep.subr.mxu0 0.0
    %3006 = vmatpush1.msra.mxu0 0.0
    %3007 = vmatprep.subr.mxu0 0.0
    %3008 = vmatpush1.msra.mxu0 0.0
    %3009 = vmatprep.subr.mxu0 0.0
    %3010 = vmatpush1.msra.mxu0 0.0
    %3011 = vmatprep.subr.mxu0 0.0
    %3012 = vmatpush1.msra.mxu0 0.0
    %3013 = vmatprep.subr.mxu0 0.0
    %3014 = vmatpush1.msra.mxu0 0.0
    %3015 = vmatprep.subr.mxu0 0.0
    %3016 = vmatpush1.msra.mxu0 0.0
    %3017 = vmatprep.subr.mxu0 0.0
    %3018 = vmatpush1.msra.mxu0 0.0
    %3019 = vmatprep.subr.mxu0 0.0
    %3020 = vmatpush1.msra.mxu0 %v2585
    %3021 = vmatprep.subr.mxu0 0.0
    %3022 = vmatpush1.msra.mxu0 %v2584
    %3023 = vmatprep.subr.mxu0 0.0
    %3024 = vmatpush1.msra.mxu0 %v2583
    %3025 = vmatprep.subr.mxu0 0.0
    %3026 = vmatpush1.msra.mxu0 %v2582
    %3027 = vmatprep.subr.mxu0 0.0
    %3028 = vmatpush2.msra.mxu0 0.0
    %3029 = vmatprep.subr.mxu0 0.0
    %3030 = vmatpush2.msra.mxu0 0.0
    %3031 = vmatprep.subr.mxu0 0.0
    %3032 = vmatpush2.msra.mxu0 0.0
    %3033 = vmatprep.subr.mxu0 0.0
    %3034 = vmatpush2.msra.mxu0 0.0
    %3035 = vmatprep.subr.mxu0 0.0
    %3036 = vmatpush2.msra.mxu0 0.0
    %3037 = vmatprep.subr.mxu0 0.0
    %3038 = vmatpush2.msra.mxu0 0.0
    %3039 = vmatprep.subr.mxu0 0.0
    %3040 = vmatpush2.msra.mxu0 0.0
    %3041 = vmatprep.subr.mxu0 0.0
    %3042 = vmatpush2.msra.mxu0 0.0
    %3043 = vmatprep.subr.mxu0 0.0
    %3044 = vmatpush2.msra.mxu0 0.0
    %3045 = vmatprep.subr.mxu0 0.0
    %3046 = vmatpush2.msra.mxu0 0.0
    %3047 = vmatprep.subr.mxu0 0.0
    %3048 = vmatpush2.msra.mxu0 0.0
    %3049 = vmatprep.subr.mxu0 0.0
    %3050 = vmatpush2.msra.mxu0 0.0
    %3051 = vmatprep.subr.mxu0 0.0
    %3052 = vmatpush2.msra.mxu0 0.0
    %3053 = vmatprep.subr.mxu0 0.0
    %3054 = vmatpush2.msra.mxu0 0.0
    %3055 = vmatprep.subr.mxu0 0.0
    %3056 = vmatpush2.msra.mxu0 0.0
    %3057 = vmatprep.subr.mxu0 0.0
    %3058 = vmatpush2.msra.mxu0 0.0
    %3059 = vmatprep.mubr.f32.mxu0 0.0
    %3060 = vmatmul.mubr.f32.gmra.mxu0 %v2993
    %v3061 = vpop.f32.mrf.mxu0
    %v3062 = vadd.f32 0.0, %v3061
    %v3063 = vpop.f32.mrf.mxu0
    %3064 = vdwg.mxu0
    %v3065 = vadd.f32 %v2992, %v3062
    %v3066 = vxor.u32 %v3065, 2147483648
    %v3067 = vmul.f32 %v3066, 1.442695
    %v3068 = vpow.pop %v3067
    %v3069 = vadd.f32 %v3068, 1.0
    %v3070 = vrcp.pop %v3069
    %v3071 = vmul.f32 1.0, %v3070
    %v3072 = vtanh.pop %v3065
    %v3073 = vmul.f32 %v3071, %v2980
    %3075 = vrot.lane.b32.xlu0 %v3072, 64
    %v3076 = vpop.permute.xlu0 %3075
    %v3078 = vmul.f32 %v3071, %v3076
    %3080 = vrot.lane.b32.xlu0 %v3078, 32
    %v3081 = vpop.permute.xlu0 %3080
    %v3083 = vadd.f32 %v3073, %v3081
    %v3084 = vtanh.pop %v3083
    %3086 = vrot.lane.b32.xlu0 %v3084, 64
    %v3087 = vpop.permute.xlu0 %3086
    %v3089 = vmul.f32 %v3071, %v3087
    %3091 = vrot.lane.b32.xlu0 %v3089, 32
    %v3092 = vpop.permute.xlu0 %3091
    %3094 = vst.msk [vmem:[#allocation2 + $0x6] sm:$0x3] %vm342, %v3092
    %v3095 = vld [vmem:[#allocation3 + $0x8] sm:$0x3]
    %v3096 = vsel %vm239, %v3092, 0
    %3098 = vmatprep.subr.mxu0 0.0
    %3099 = vmatpush1.msra.mxu0 0.0
    %3100 = vmatprep.subr.mxu0 0.0
    %3101 = vmatpush1.msra.mxu0 0.0
    %3102 = vmatprep.subr.mxu0 0.0
    %3103 = vmatpush1.msra.mxu0 0.0
    %3104 = vmatprep.subr.mxu0 0.0
    %3105 = vmatpush1.msra.mxu0 0.0
    %3106 = vmatprep.subr.mxu0 0.0
    %3107 = vmatpush1.msra.mxu0 0.0
    %3108 = vmatprep.subr.mxu0 0.0
    %3109 = vmatpush1.msra.mxu0 0.0
    %3110 = vmatprep.subr.mxu0 0.0
    %3111 = vmatpush1.msra.mxu0 0.0
    %3112 = vmatprep.subr.mxu0 0.0
    %3113 = vmatpush1.msra.mxu0 0.0
    %3114 = vmatprep.subr.mxu0 0.0
    %3115 = vmatpush1.msra.mxu0 0.0
    %3116 = vmatprep.subr.mxu0 0.0
    %3117 = vmatpush1.msra.mxu0 0.0
    %3118 = vmatprep.subr.mxu0 0.0
    %3119 = vmatpush1.msra.mxu0 0.0
    %3120 = vmatprep.subr.mxu0 0.0
    %3121 = vmatpush1.msra.mxu0 0.0
    %3122 = vmatprep.subr.mxu0 0.0
    %3123 = vmatpush1.msra.mxu0 %v2585
    %3124 = vmatprep.subr.mxu0 0.0
    %3125 = vmatpush1.msra.mxu0 %v2584
    %3126 = vmatprep.subr.mxu0 0.0
    %3127 = vmatpush1.msra.mxu0 %v2583
    %3128 = vmatprep.subr.mxu0 0.0
    %3129 = vmatpush1.msra.mxu0 %v2582
    %3130 = vmatprep.subr.mxu0 0.0
    %3131 = vmatpush2.msra.mxu0 0.0
    %3132 = vmatprep.subr.mxu0 0.0
    %3133 = vmatpush2.msra.mxu0 0.0
    %3134 = vmatprep.subr.mxu0 0.0
    %3135 = vmatpush2.msra.mxu0 0.0
    %3136 = vmatprep.subr.mxu0 0.0
    %3137 = vmatpush2.msra.mxu0 0.0
    %3138 = vmatprep.subr.mxu0 0.0
    %3139 = vmatpush2.msra.mxu0 0.0
    %3140 = vmatprep.subr.mxu0 0.0
    %3141 = vmatpush2.msra.mxu0 0.0
    %3142 = vmatprep.subr.mxu0 0.0
    %3143 = vmatpush2.msra.mxu0 0.0
    %3144 = vmatprep.subr.mxu0 0.0
    %3145 = vmatpush2.msra.mxu0 0.0
    %3146 = vmatprep.subr.mxu0 0.0
    %3147 = vmatpush2.msra.mxu0 0.0
    %3148 = vmatprep.subr.mxu0 0.0
    %3149 = vmatpush2.msra.mxu0 0.0
    %3150 = vmatprep.subr.mxu0 0.0
    %3151 = vmatpush2.msra.mxu0 0.0
    %3152 = vmatprep.subr.mxu0 0.0
    %3153 = vmatpush2.msra.mxu0 0.0
    %3154 = vmatprep.subr.mxu0 0.0
    %3155 = vmatpush2.msra.mxu0 0.0
    %3156 = vmatprep.subr.mxu0 0.0
    %3157 = vmatpush2.msra.mxu0 0.0
    %3158 = vmatprep.subr.mxu0 0.0
    %3159 = vmatpush2.msra.mxu0 0.0
    %3160 = vmatprep.subr.mxu0 0.0
    %3161 = vmatpush2.msra.mxu0 0.0
    %3162 = vmatprep.mubr.f32.mxu0 0.0
    %3163 = vmatmul.mubr.f32.gmra.mxu0 %v3096
    %v3164 = vpop.f32.mrf.mxu0
    %v3165 = vadd.f32 0.0, %v3164
    %v3166 = vpop.f32.mrf.mxu0
    %3167 = vdwg.mxu0
    %v3168 = vadd.f32 %v3095, %v3165
    %v3169 = vxor.u32 %v3168, 2147483648
    %v3170 = vmul.f32 %v3169, 1.442695
    %v3171 = vpow.pop %v3170
    %v3172 = vadd.f32 %v3171, 1.0
    %v3173 = vrcp.pop %v3172
    %v3174 = vmul.f32 1.0, %v3173
    %v3175 = vtanh.pop %v3168
    %v3176 = vmul.f32 %v3174, %v3083
    %3178 = vrot.lane.b32.xlu0 %v3175, 64
    %v3179 = vpop.permute.xlu0 %3178
    %v3181 = vmul.f32 %v3174, %v3179
    %3183 = vrot.lane.b32.xlu0 %v3181, 32
    %v3184 = vpop.permute.xlu0 %3183
    %v3186 = vadd.f32 %v3176, %v3184
    %v3187 = vtanh.pop %v3186
    %3189 = vrot.lane.b32.xlu0 %v3187, 64
    %v3190 = vpop.permute.xlu0 %3189
    %v3192 = vmul.f32 %v3174, %v3190
    %3194 = vrot.lane.b32.xlu0 %v3192, 32
    %v3195 = vpop.permute.xlu0 %3194
    %3197 = vst.msk [vmem:[#allocation2 + $0x8] sm:$0x3] %vm342, %v3195
    %v3198 = vld [vmem:[#allocation2] sm:$0xff]
    %v3199 = vld [vmem:[#allocation2 + $0x8] sm:$0x3]
    %v3200 = vld [vmem:[%s14] sm:$0xff]
    %v3201 = vld [vmem:[%s14 + $0x8] sm:$0xff]
    %v3202 = vld [vmem:[%s14 + $0x10] sm:$0xff]
    %v3203 = vld [vmem:[%s14 + $0x18] sm:$0xff]
    %v3204 = vld [vmem:[%s15] sm:$0x1]
    %v3206 = vlaneseq
    %v3207 = vshrl.u32 %v3206, 7
    %v3208 = vsub.s32 0, %v3207
    %v3209 = vrot.slane %v3204, %v3208
    %v3212 = vsel %vm239, %v3198, 0
    %v3215 = vsel %vm239, %v3199, 0
    %3217 = vmatprep.subr.mxu0 0.0
    %3218 = vmatpush1.msra.mxu0 0.0
    %3219 = vmatprep.subr.mxu0 0.0
    %3220 = vmatpush1.msra.mxu0 0.0
    %3221 = vmatprep.subr.mxu0 0.0
    %3222 = vmatpush1.msra.mxu0 0.0
    %3223 = vmatprep.subr.mxu0 0.0
    %3224 = vmatpush1.msra.mxu0 0.0
    %3225 = vmatprep.subr.mxu0 0.0
    %3226 = vmatpush1.msra.mxu0 0.0
    %3227 = vmatprep.subr.mxu0 0.0
    %3228 = vmatpush1.msra.mxu0 0.0
    %3229 = vmatprep.subr.mxu0 0.0
    %3230 = vmatpush1.msra.mxu0 0.0
    %3231 = vmatprep.subr.mxu0 0.0
    %3232 = vmatpush1.msra.mxu0 0.0
    %3233 = vmatprep.subr.mxu0 0.0
    %3234 = vmatpush1.msra.mxu0 0.0
    %3235 = vmatprep.subr.mxu0 0.0
    %3236 = vmatpush1.msra.mxu0 0.0
    %3237 = vmatprep.subr.mxu0 0.0
    %3238 = vmatpush1.msra.mxu0 0.0
    %3239 = vmatprep.subr.mxu0 0.0
    %3240 = vmatpush1.msra.mxu0 0.0
    %3241 = vmatprep.subr.mxu0 0.0
    %3242 = vmatpush1.msra.mxu0 %v3203
    %3243 = vmatprep.subr.mxu0 0.0
    %3244 = vmatpush1.msra.mxu0 %v3202
    %3245 = vmatprep.subr.mxu0 0.0
    %3246 = vmatpush1.msra.mxu0 %v3201
    %3247 = vmatprep.subr.mxu0 0.0
    %3248 = vmatpush1.msra.mxu0 %v3200
    %3249 = vmatprep.subr.mxu0 0.0
    %3250 = vmatpush2.msra.mxu0 0.0
    %3251 = vmatprep.subr.mxu0 0.0
    %3252 = vmatpush2.msra.mxu0 0.0
    %3253 = vmatprep.subr.mxu0 0.0
    %3254 = vmatpush2.msra.mxu0 0.0
    %3255 = vmatprep.subr.mxu0 0.0
    %3256 = vmatpush2.msra.mxu0 0.0
    %3257 = vmatprep.subr.mxu0 0.0
    %3258 = vmatpush2.msra.mxu0 0.0
    %3259 = vmatprep.subr.mxu0 0.0
    %3260 = vmatpush2.msra.mxu0 0.0
    %3261 = vmatprep.subr.mxu0 0.0
    %3262 = vmatpush2.msra.mxu0 0.0
    %3263 = vmatprep.subr.mxu0 0.0
    %3264 = vmatpush2.msra.mxu0 0.0
    %3265 = vmatprep.subr.mxu0 0.0
    %3266 = vmatpush2.msra.mxu0 0.0
    %3267 = vmatprep.subr.mxu0 0.0
    %3268 = vmatpush2.msra.mxu0 0.0
    %3269 = vmatprep.subr.mxu0 0.0
    %3270 = vmatpush2.msra.mxu0 0.0
    %3271 = vmatprep.subr.mxu0 0.0
    %3272 = vmatpush2.msra.mxu0 0.0
    %3273 = vmatprep.subr.mxu0 0.0
    %3274 = vmatpush2.msra.mxu0 0.0
    %3275 = vmatprep.subr.mxu0 0.0
    %3276 = vmatpush2.msra.mxu0 0.0
    %3277 = vmatprep.subr.mxu0 0.0
    %3278 = vmatpush2.msra.mxu0 0.0
    %3279 = vmatprep.subr.mxu0 0.0
    %3280 = vmatpush2.msra.mxu0 0.0
    %3281 = vmatprep.mubr.f32.mxu0 0.0
    %3282 = vmatmul.mubr.f32.gmra.mxu0 %v3212
    %v3283 = vpop.f32.mrf.mxu0
    %v3284 = vadd.f32 %v3209, %v3283
    %v3285 = vpop.f32.mrf.mxu0
    %3286 = vmatprep.mubr.f32.mxu0 0.0
    %3287 = vmatmul.mubr.f32.gmra.mxu0 %v3215
    %v3288 = vpop.f32.mrf.mxu0
    %v3289 = vadd.f32 %v3209, %v3288
    %v3290 = vpop.f32.mrf.mxu0
    %3291 = vdwg.mxu0
    %3292 = vst.msk [vmem:[%s16] sm:$0xff] %vm154, %v3284
    %vm3293 = vcmask 58368
    %3294 = vst.msk [vmem:[%s16 + $0x8] sm:$0x3] %vm3293, %v3289
    // Predicated region
    $region94: #{tpu_custom_call.1} parent=1 // pred_check
      _
    $region95: #{tpu_custom_call.1} parent=1 // pred_check_branch
      %3296 = sbr.rel (0) target = $region97
    $region96: #{tpu_custom_call.1} parent=1 // pred_region
      _
    $region97: #{tpu_custom_call.1} parent=1 // pred_fallthru
      _
    // Predicated region
    $region98: #{tpu_custom_call.1} parent=1 // pred_check
      _
    $region99: #{tpu_custom_call.1} parent=1 // pred_check_branch
      %3298 = sbr.rel (0) target = $region101
    $region100: #{tpu_custom_call.1} parent=1 // pred_region
      _
    $region101: #{tpu_custom_call.1} parent=1 // pred_fallthru
      _
    %3299 = vsyncpa [#allocation5], 1
    %3300 = vsyncpa [#allocation7], 1
    %3301 = vsyncpa [#allocation10], 1
    %3302 = vsyncpa [#allocation13], 1

</llo_original>
